<compile_context>
chip_gen: v7x
topology: tpu7x:2x2x1
jax: 0.10.0
libtpu: 0.0.40
codegen_flags: <defaults>
</compile_context>

<pallas_src>
import numpy as np

import jax
import jax.numpy as jnp
from jax.experimental import pallas as pl
from jax.experimental.pallas import tpu as pltpu


_LOGIT_LANES = 128   # lane-dense output width (real logits live in lanes 0..1)
_LAB_ROWS = 8        # label table rows (3 real entity labels, padded to 8)
_TILE_R = 256        # fixed relation-row tile (independent of per-doc r_max)


# ----------------------------------------------------------------------------
# Pallas kernel: ffnn_head + ffnn_tail + BiaffineAttention logits
# ----------------------------------------------------------------------------
def _rel_decoder_kernel(
    hh_ref, ohh_ref, th_ref, oht_ref,            # per-tile row streams
    wh1_ref, labh_ref, wh2_ref, bh2_ref,         # ffnn_head (bias folded in labh)
    wt1_ref, labt_ref, wt2_ref, bt2_ref,         # ffnn_tail (bias folded in labt)
    whead_ref, wtail_ref, blin_ref,              # fused biaffine weights
    out_ref,                                     # [TILE_R, 128] bf16 logits (lanes 0..1)
):
    f32 = jnp.float32
    dh_pad = wh2_ref.shape[1]

    # ffnn_head: Linear(2D -> D) + ReLU + Linear(D -> dh) + ReLU
    # TODO(synk): Dropout is omitted (eval-mode semantics => identity).
    h = (jnp.dot(hh_ref[...], wh1_ref[...], preferred_element_type=f32)
         + jnp.dot(ohh_ref[...], labh_ref[...], preferred_element_type=f32))
    h = jnp.maximum(h, 0.0)
    heads = jnp.dot(h.astype(wh2_ref.dtype), wh2_ref[...],
                    preferred_element_type=f32) + bh2_ref[...]
    heads = jnp.maximum(heads, 0.0)                      # [R, dh_pad] (pad lanes = 0)

    # ffnn_tail
    t = (jnp.dot(th_ref[...], wt1_ref[...], preferred_element_type=f32)
         + jnp.dot(oht_ref[...], labt_ref[...], preferred_element_type=f32))
    t = jnp.maximum(t, 0.0)
    tails = jnp.dot(t.astype(wt2_ref.dtype), wt2_ref[...],
                    preferred_element_type=f32) + bt2_ref[...]
    tails = jnp.maximum(tails, 0.0)                      # [R, dh_pad] (pad lanes = 0)

    heads_b = heads.astype(whead_ref.dtype)
    tails_b = tails.astype(whead_ref.dtype)

    # Fused heads-side matmul: [Wbil_c0 | Wbil_c1 | Wlin_h] -> [R, 2*dh_pad + 128].
    # All lane splits below are multiples of 128 (vreg-aligned slices are free).
    u = jnp.dot(heads_b, whead_ref[...], preferred_element_type=f32)

    lin = (u[:, 2 * dh_pad:]
           + jnp.dot(tails_b, wtail_ref[...], preferred_element_type=f32)
           + blin_ref[...])                              # [R, 128]

    bil0 = jnp.sum(u[:, :dh_pad] * tails, axis=-1, keepdims=True)           # [R, 1]
    bil1 = jnp.sum(u[:, dh_pad:2 * dh_pad] * tails, axis=-1, keepdims=True)  # [R, 1]

    lane = jax.lax.broadcasted_iota(jnp.int32, (1, out_ref.shape[1]), 1)
    bil = bil0 * (lane == 0).astype(f32) + bil1 * (lane == 1).astype(f32)

    out_ref[...] = (lin + bil).astype(out_ref.dtype)


def _vmem_cap_bytes():
    try:
        return int(pltpu.get_tpu_info().vmem_capacity_bytes) * 3 // 4
    except Exception:
        return 48 * 1024 * 1024   # conservative (safe on v7x's 64 MiB per TC)


def _biaffine_decoder_logits(hid_h, oh_h, hid_t, oh_t, kw, tile_r):
    """hid_*: [N, D] bf16, oh_*: [N, 8] bf16 one-hot labels (N multiple of tile_r).
    Returns [N, 128] bf16 logits (lanes 0..1 are the real 2-class logits)."""
    n, d = hid_h.shape
    dh_pad = kw["wh2"].shape[1]

    weights = (kw["wh1"], kw["labtab_h"], kw["wh2"], kw["bh2"],
               kw["wt1"], kw["labtab_t"], kw["wt2"], kw["bt2"],
               kw["whead"], kw["wtail"], kw["blin"])
    weight_bytes = sum(int(np.prod(w.shape)) * w.dtype.itemsize for w in weights)

    flops = n * (4 * d * d + 32 * d + 4 * d * dh_pad
                 + 4 * dh_pad * dh_pad + 512 * dh_pad + 8 * dh_pad)
    bytes_accessed = n * (4 * d + 2 * _LAB_ROWS * 2 + _LOGIT_LANES * 2) + weight_bytes
    vmem_cap = _vmem_cap_bytes()

    def run(buffered):
        if buffered:
            row_kw = {"pipeline_mode": pl.Buffered(3)}   # deeper prefetch (helps v5e)
            wgt_kw = {"pipeline_mode": pl.Buffered(1)}   # resident weights, single buf
            w_bufs, r_bufs = 1, 3
        else:
            row_kw, wgt_kw = {}, {}
            w_bufs, r_bufs = 2, 2

        def row_spec(width):
            return pl.BlockSpec((tile_r, width), lambda i: (i, 0), **row_kw)

        def full_spec(w):
            return pl.BlockSpec(w.shape, lambda i: (0, 0), **wgt_kw)   # resident

        in_specs = ([row_spec(d), row_spec(_LAB_ROWS),
                     row_spec(d), row_spec(_LAB_ROWS)]
                    + [full_spec(w) for w in weights])
        out_spec = pl.BlockSpec((tile_r, _LOGIT_LANES), lambda i: (i, 0))

        vmem_need = (w_bufs * weight_bytes
                     + r_bufs * 2 * tile_r * (d + _LAB_ROWS) * 2
                     + 2 * tile_r * _LOGIT_LANES * 2)
        vmem_limit = int(min(vmem_cap, max(32 << 20, vmem_need + (8 << 20))))

        return pl.pallas_call(
            _rel_decoder_kernel,
            out_shape=jax.ShapeDtypeStruct((n, _LOGIT_LANES), jnp.bfloat16),
            grid=(n // tile_r,),
            in_specs=in_specs,
            out_specs=out_spec,
            compiler_params=pltpu.CompilerParams(
                dimension_semantics=("parallel",),
                vmem_limit_bytes=vmem_limit),
            cost_estimate=pl.CostEstimate(
                flops=int(flops), transcendentals=0,
                bytes_accessed=int(bytes_accessed)),
        )(hid_h, oh_h, hid_t, oh_t, *weights)

    try:
        return run(buffered=True)
    except Exception:
        # Fallback: default double-buffered pipeline (no pipeline_mode hints).
        return run(buffered=False)


# ----------------------------------------------------------------------------
# Parameter initialization (deterministic, synthetic — no checkpoint load)
# ----------------------------------------------------------------------------
def init_params(key, hidden_size):
    d = hidden_size
    dh = hidden_size // 2
    ks = jax.random.split(key, 16)

    def w(k, shape, scale=0.02):
        return scale * jax.random.normal(k, shape, jnp.float32)

    return {
        "entity_emb": w(ks[0], (3, d)),
        # ffnn_head first layer split: hidden half [D,D] + label half [D,D]
        "wh1_hid": w(ks[1], (d, d)),
        "wh1_lab": w(ks[2], (d, d)),
        "bh1": w(ks[3], (1, d)),
        "wh2": w(ks[4], (d, dh)),
        "bh2": w(ks[5], (1, dh)),
        # ffnn_tail
        "wt1_hid": w(ks[6], (d, d)),
        "wt1_lab": w(ks[7], (d, d)),
        "bt1": w(ks[8], (1, d)),
        "wt2": w(ks[9], (d, dh)),
        "bt2": w(ks[10], (1, dh)),
        # BiaffineAttention: fused bilinear [dh, 2*dh] (2 output classes, no bias)
        "wbil": w(ks[11], (dh, 2 * dh)),
        # BiaffineAttention linear(2*dh -> 2), split into head/tail halves
        "wlin_h": w(ks[12], (dh, 2)),
        "wlin_t": w(ks[13], (dh, 2)),
        "blin": w(ks[14], (1, 2)),
    }


def prepare_kernel_weights(params, dh_pad):
    """Cast / pad / fuse weights once for the kernel (bf16 MXU operands)."""
    bf = jnp.bfloat16
    d = params["wh1_hid"].shape[0]
    dh = params["wh2"].shape[1]

    def pad2(w, rows, cols):
        return jnp.pad(w, ((0, rows - w.shape[0]), (0, cols - w.shape[1])))

    # Label-projection tables (first-layer label half), bias folded in. 3 real
    # rows (entity labels 0..2), padded to 8 sublanes.
    labtab_h = jnp.dot(params["entity_emb"], params["wh1_lab"]) + params["bh1"]
    labtab_t = jnp.dot(params["entity_emb"], params["wt1_lab"]) + params["bt1"]

    # Fused heads-side biaffine weight: [Wbil_c0 | Wbil_c1 | Wlin_h], dh padded
    # to dh_pad so in-kernel lane slices stay 128-aligned.
    wbil = params["wbil"]
    wbil0 = pad2(wbil[:, :dh], dh_pad, dh_pad)
    wbil1 = pad2(wbil[:, dh:], dh_pad, dh_pad)
    wlin_h = pad2(params["wlin_h"], dh_pad, _LOGIT_LANES)
    wlin_t = pad2(params["wlin_t"], dh_pad, _LOGIT_LANES)
    whead = jnp.concatenate([wbil0, wbil1, wlin_h], axis=1).astype(bf)

    return {
        "wh1": params["wh1_hid"].astype(bf),
        "labtab_h": pad2(labtab_h, _LAB_ROWS, d).astype(bf),
        "wh2": pad2(params["wh2"], d, dh_pad).astype(bf),
        "bh2": pad2(params["bh2"], 1, dh_pad),                 # f32
        "wt1": params["wt1_hid"].astype(bf),
        "labtab_t": pad2(labtab_t, _LAB_ROWS, d).astype(bf),
        "wt2": pad2(params["wt2"], d, dh_pad).astype(bf),
        "bt2": pad2(params["bt2"], 1, dh_pad),                 # f32
        "whead": whead,                                        # [dh_pad, 2*dh_pad+128]
        "wtail": wlin_t.astype(bf),                            # [dh_pad, 128]
        "blin": pad2(params["blin"], 1, _LOGIT_LANES),         # f32 [1, 128]
    }


# ----------------------------------------------------------------------------
# Python-side glue reproducing the PyTorch module semantics
# ----------------------------------------------------------------------------
def build_relation(relations, entities):
    batch_size = len(relations)
    new_relations = []
    for b in range(batch_size):
        if len(entities[b]["start"]) <= 2:
            entities[b] = {"end": [1, 1], "label": [0, 0], "start": [0, 0]}
        all_possible_relations = set(
            (i, j)
            for i in range(len(entities[b]["label"]))
            for j in range(len(entities[b]["label"]))
            if entities[b]["label"][i] == 1 and entities[b]["label"][j] == 2
        )
        if len(all_possible_relations) == 0:
            all_possible_relations = set([(0, 1)])
        positive_relations = set(list(zip(relations[b]["head"], relations[b]["tail"])))
        negative_relations = all_possible_relations - positive_relations
        positive_relations = set(i for i in positive_relations if i in all_possible_relations)
        reordered_relations = list(positive_relations) + list(negative_relations)
        relation_per_doc = {
            "head": [i[0] for i in reordered_relations],
            "tail": [i[1] for i in reordered_relations],
            "label": [1] * len(positive_relations)
                     + [0] * (len(reordered_relations) - len(positive_relations)),
        }
        assert len(relation_per_doc["head"]) != 0
        new_relations.append(relation_per_doc)
    return new_relations, entities


def get_predicted_relations(logits_np, relations, entities):
    pred_relations = []
    for i, pred_label in enumerate(logits_np.argmax(-1)):
        if pred_label != 1:
            continue
        rel = {}
        rel["head_id"] = relations["head"][i]
        rel["head"] = (entities["start"][rel["head_id"]], entities["end"][rel["head_id"]])
        rel["head_type"] = entities["label"][rel["head_id"]]
        rel["tail_id"] = relations["tail"][i]
        rel["tail"] = (entities["start"][rel["tail_id"]], entities["end"][rel["tail_id"]])
        rel["tail_type"] = entities["label"][rel["tail_id"]]
        rel["type"] = 1
        pred_relations.append(rel)
    return pred_relations


def region_extraction_decoder_forward(params, hidden_states, entities, relations):
    B, S, D = hidden_states.shape
    dh = params["wh2"].shape[1]
    dh_pad = ((dh + 127) // 128) * 128

    relations, entities = build_relation(relations, entities)
    kw = prepare_kernel_weights(params, dh_pad)

    r_list = [len(rel["head"]) for rel in relations]
    r_max = max(8, int(pl.next_power_of_2(max(r_list))))   # per-doc bucketed pad
    n = B * r_max
    # Fixed 256-row tile; pad total rows so grid is even and >= 2 (megacore).
    n_tiles = max(2, int(pl.cdiv(n, _TILE_R)))
    if n_tiles % 2:
        n_tiles += 1
    n_pad = n_tiles * _TILE_R

    # Flat (padded) index / label / target arrays built on the host (numpy).
    tok_head = np.zeros((n_pad,), np.int32)   # flat index into [B*S]
    tok_tail = np.zeros((n_pad,), np.int32)
    lab_head = np.zeros((n_pad,), np.int32)
    lab_tail = np.zeros((n_pad,), np.int32)
    labels = np.zeros((B, r_max), np.int32)
    mask = np.zeros((B, r_max), np.float32)
    for b in range(B):
        r = r_list[b]
        h_ent = np.asarray(relations[b]["head"], np.int32)
        t_ent = np.asarray(relations[b]["tail"], np.int32)
        e_start = np.asarray(entities[b]["start"], np.int32)
        e_label = np.asarray(entities[b]["label"], np.int32)
        o = b * r_max
        tok_head[o:o + r] = b * S + e_start[h_ent]
        tok_tail[o:o + r] = b * S + e_start[t_ent]
        lab_head[o:o + r] = e_label[h_ent]
        lab_tail[o:o + r] = e_label[t_ent]
        labels[b, :r] = np.asarray(relations[b]["label"], np.int32)
        mask[b, :r] = 1.0

    bf = jnp.bfloat16
    hs_flat = hidden_states.reshape(B * S, D).astype(bf)
    hid_h = jnp.take(hs_flat, jnp.asarray(tok_head), axis=0)       # [n_pad, D]
    hid_t = jnp.take(hs_flat, jnp.asarray(tok_tail), axis=0)       # [n_pad, D]
    oh_h = jax.nn.one_hot(jnp.asarray(lab_head), _LAB_ROWS, dtype=bf)  # [n_pad, 8]
    oh_t = jax.nn.one_hot(jnp.asarray(lab_tail), _LAB_ROWS, dtype=bf)  # [n_pad, 8]

    # Single fused Pallas call for the whole batch.
    logits_pad = _biaffine_decoder_logits(hid_h, oh_h, hid_t, oh_t, kw, _TILE_R)
    logits = logits_pad[:n, :2].astype(jnp.float32).reshape(B, r_max, 2)

    # CrossEntropyLoss: mean over valid relations per document, summed over
    # documents (matches the PyTorch per-batch loop).
    labels_j = jnp.asarray(labels)
    mask_j = jnp.asarray(mask)
    log_probs = jax.nn.log_softmax(logits, axis=-1)
    nll = -jnp.take_along_axis(log_probs, labels_j[..., None], axis=-1)[..., 0]
    per_doc = jnp.sum(nll * mask_j, axis=1) / jnp.maximum(jnp.sum(mask_j, axis=1), 1.0)
    loss = jnp.sum(per_doc)

    # One batched D2H fetch, then host-side prediction extraction.
    logits_np = np.asarray(jax.device_get(logits))
    all_pred_relations = [
        get_predicted_relations(logits_np[b, :r_list[b]], relations[b], entities[b])
        for b in range(B)
    ]
    return loss, all_pred_relations


# ----------------------------------------------------------------------------
# Demo
# ----------------------------------------------------------------------------
if __name__ == "__main__":
    HIDDEN = 32
    BATCH = 2
    SEQ = 8

    root = jax.random.PRNGKey(0)
    k_params, k_hidden = jax.random.split(root, 2)

    params = init_params(k_params, HIDDEN)
    hidden_states = jax.random.normal(k_hidden, (BATCH, SEQ, HIDDEN), jnp.float32)

    # Synthetic entities / relations (same structure the PyTorch module expects).
    entities = [
        {"start": [0, 2, 4, 6], "end": [1, 3, 5, 7], "label": [1, 2, 1, 2]},
        {"start": [1, 3, 5],    "end": [2, 4, 6],    "label": [1, 2, 2]},
    ]
    relations = [
        {"head": [0], "tail": [1]},
        {"head": [0], "tail": [2]},
    ]

    loss, all_pred_relations = region_extraction_decoder_forward(
        params, hidden_states, entities, relations)
    jax.block_until_ready(loss)

    assert np.isfinite(float(loss))
    assert len(all_pred_relations) == BATCH
    print("KERNEL_OK")
</pallas_src>

<mosaic_0001>
module attributes {stable_mosaic.version = 11 : i64} {
  func.func @_rel_decoder_kernel(%arg0: i32, %arg1: memref<256x32xbf16, #tpu.memory_space<vmem>>, %arg2: memref<256x8xbf16, #tpu.memory_space<vmem>>, %arg3: memref<256x32xbf16, #tpu.memory_space<vmem>>, %arg4: memref<256x8xbf16, #tpu.memory_space<vmem>>, %arg5: memref<32x32xbf16, #tpu.memory_space<vmem>>, %arg6: memref<8x32xbf16, #tpu.memory_space<vmem>>, %arg7: memref<32x128xbf16, #tpu.memory_space<vmem>>, %arg8: memref<1x128xf32, #tpu.memory_space<vmem>>, %arg9: memref<32x32xbf16, #tpu.memory_space<vmem>>, %arg10: memref<8x32xbf16, #tpu.memory_space<vmem>>, %arg11: memref<32x128xbf16, #tpu.memory_space<vmem>>, %arg12: memref<1x128xf32, #tpu.memory_space<vmem>>, %arg13: memref<128x384xbf16, #tpu.memory_space<vmem>>, %arg14: memref<128x128xbf16, #tpu.memory_space<vmem>>, %arg15: memref<1x128xf32, #tpu.memory_space<vmem>>, %arg16: memref<256x128xbf16, #tpu.memory_space<vmem>>) attributes {dimension_semantics = [#tpu.dimension_semantics<parallel>], iteration_bounds = array<i64: 2>, scalar_prefetch = 0 : i64, scratch_operands = 0 : i64, tpu.core_type = #tpu.core_type<tc>, window_params = [{transform_indices = @transform_0, window_bounds = array<i64: 256, 32>}, {transform_indices = @transform_1, window_bounds = array<i64: 256, 8>}, {transform_indices = @transform_2, window_bounds = array<i64: 256, 32>}, {transform_indices = @transform_3, window_bounds = array<i64: 256, 8>}, {pipeline_mode = #tpu.pipeline_mode<synchronous>, transform_indices = @transform_4, window_bounds = array<i64: 32, 32>}, {pipeline_mode = #tpu.pipeline_mode<synchronous>, transform_indices = @transform_5, window_bounds = array<i64: 8, 32>}, {pipeline_mode = #tpu.pipeline_mode<synchronous>, transform_indices = @transform_6, window_bounds = array<i64: 32, 128>}, {pipeline_mode = #tpu.pipeline_mode<synchronous>, transform_indices = @transform_7, window_bounds = array<i64: 1, 128>}, {pipeline_mode = #tpu.pipeline_mode<synchronous>, transform_indices = @transform_8, window_bounds = array<i64: 32, 32>}, {pipeline_mode = #tpu.pipeline_mode<synchronous>, transform_indices = @transform_9, window_bounds = array<i64: 8, 32>}, {pipeline_mode = #tpu.pipeline_mode<synchronous>, transform_indices = @transform_10, window_bounds = array<i64: 32, 128>}, {pipeline_mode = #tpu.pipeline_mode<synchronous>, transform_indices = @transform_11, window_bounds = array<i64: 1, 128>}, {pipeline_mode = #tpu.pipeline_mode<synchronous>, transform_indices = @transform_12, window_bounds = array<i64: 128, 384>}, {pipeline_mode = #tpu.pipeline_mode<synchronous>, transform_indices = @transform_13, window_bounds = array<i64: 128, 128>}, {pipeline_mode = #tpu.pipeline_mode<synchronous>, transform_indices = @transform_14, window_bounds = array<i64: 1, 128>}, {transform_indices = @transform_15, window_bounds = array<i64: 256, 128>}]} {
    %c0 = arith.constant 0 : index
    %c0_0 = arith.constant 0 : index
    %0 = vector.load %arg1[%c0, %c0_0] : memref<256x32xbf16, #tpu.memory_space<vmem>>, vector<256x32xbf16>
    %c0_1 = arith.constant 0 : index
    %c0_2 = arith.constant 0 : index
    %1 = vector.load %arg5[%c0_1, %c0_2] : memref<32x32xbf16, #tpu.memory_space<vmem>>, vector<32x32xbf16>
    %cst = arith.constant dense<0.000000e+00> : vector<256x32xf32>
    %2 = tpu.matmul %0, %1, %cst {dimension_numbers = #tpu.dot_dimension_numbers<[1], [0], [0], [1], [0, 0, 1, 1], [], []>} : vector<256x32xbf16>, vector<32x32xbf16>, vector<256x32xf32> -> vector<256x32xf32>
    %c0_3 = arith.constant 0 : index
    %c0_4 = arith.constant 0 : index
    %3 = vector.load %arg2[%c0_3, %c0_4] : memref<256x8xbf16, #tpu.memory_space<vmem>>, vector<256x8xbf16>
    %c0_5 = arith.constant 0 : index
    %c0_6 = arith.constant 0 : index
    %4 = vector.load %arg6[%c0_5, %c0_6] : memref<8x32xbf16, #tpu.memory_space<vmem>>, vector<8x32xbf16>
    %cst_7 = arith.constant dense<0.000000e+00> : vector<256x32xf32>
    %5 = tpu.matmul %3, %4, %cst_7 {dimension_numbers = #tpu.dot_dimension_numbers<[1], [0], [0], [1], [0, 0, 1, 1], [], []>} : vector<256x8xbf16>, vector<8x32xbf16>, vector<256x32xf32> -> vector<256x32xf32>
    %6 = arith.addf %2, %5 : vector<256x32xf32>
    %cst_8 = arith.constant 0.000000e+00 : f32
    %7 = vector.broadcast %cst_8 : f32 to vector<256x32xf32>
    %8 = arith.maximumf %6, %7 : vector<256x32xf32>
    %9 = arith.truncf %8 : vector<256x32xf32> to vector<256x32xbf16>
    %c0_9 = arith.constant 0 : index
    %c0_10 = arith.constant 0 : index
    %10 = vector.load %arg7[%c0_9, %c0_10] : memref<32x128xbf16, #tpu.memory_space<vmem>>, vector<32x128xbf16>
    %cst_11 = arith.constant dense<0.000000e+00> : vector<256x128xf32>
    %11 = tpu.matmul %9, %10, %cst_11 {dimension_numbers = #tpu.dot_dimension_numbers<[1], [0], [0], [1], [0, 0, 1, 1], [], []>} : vector<256x32xbf16>, vector<32x128xbf16>, vector<256x128xf32> -> vector<256x128xf32>
    %c0_12 = arith.constant 0 : index
    %c0_13 = arith.constant 0 : index
    %12 = vector.load %arg8[%c0_12, %c0_13] : memref<1x128xf32, #tpu.memory_space<vmem>>, vector<1x128xf32>
    %13 = vector.broadcast %12 : vector<1x128xf32> to vector<256x128xf32>
    %14 = arith.addf %11, %13 : vector<256x128xf32>
    %cst_14 = arith.constant 0.000000e+00 : f32
    %15 = vector.broadcast %cst_14 : f32 to vector<256x128xf32>
    %16 = arith.maximumf %14, %15 : vector<256x128xf32>
    %c0_15 = arith.constant 0 : index
    %c0_16 = arith.constant 0 : index
    %17 = vector.load %arg3[%c0_15, %c0_16] : memref<256x32xbf16, #tpu.memory_space<vmem>>, vector<256x32xbf16>
    %c0_17 = arith.constant 0 : index
    %c0_18 = arith.constant 0 : index
    %18 = vector.load %arg9[%c0_17, %c0_18] : memref<32x32xbf16, #tpu.memory_space<vmem>>, vector<32x32xbf16>
    %cst_19 = arith.constant dense<0.000000e+00> : vector<256x32xf32>
    %19 = tpu.matmul %17, %18, %cst_19 {dimension_numbers = #tpu.dot_dimension_numbers<[1], [0], [0], [1], [0, 0, 1, 1], [], []>} : vector<256x32xbf16>, vector<32x32xbf16>, vector<256x32xf32> -> vector<256x32xf32>
    %c0_20 = arith.constant 0 : index
    %c0_21 = arith.constant 0 : index
    %20 = vector.load %arg4[%c0_20, %c0_21] : memref<256x8xbf16, #tpu.memory_space<vmem>>, vector<256x8xbf16>
    %c0_22 = arith.constant 0 : index
    %c0_23 = arith.constant 0 : index
    %21 = vector.load %arg10[%c0_22, %c0_23] : memref<8x32xbf16, #tpu.memory_space<vmem>>, vector<8x32xbf16>
    %cst_24 = arith.constant dense<0.000000e+00> : vector<256x32xf32>
    %22 = tpu.matmul %20, %21, %cst_24 {dimension_numbers = #tpu.dot_dimension_numbers<[1], [0], [0], [1], [0, 0, 1, 1], [], []>} : vector<256x8xbf16>, vector<8x32xbf16>, vector<256x32xf32> -> vector<256x32xf32>
    %23 = arith.addf %19, %22 : vector<256x32xf32>
    %cst_25 = arith.constant 0.000000e+00 : f32
    %24 = vector.broadcast %cst_25 : f32 to vector<256x32xf32>
    %25 = arith.maximumf %23, %24 : vector<256x32xf32>
    %26 = arith.truncf %25 : vector<256x32xf32> to vector<256x32xbf16>
    %c0_26 = arith.constant 0 : index
    %c0_27 = arith.constant 0 : index
    %27 = vector.load %arg11[%c0_26, %c0_27] : memref<32x128xbf16, #tpu.memory_space<vmem>>, vector<32x128xbf16>
    %cst_28 = arith.constant dense<0.000000e+00> : vector<256x128xf32>
    %28 = tpu.matmul %26, %27, %cst_28 {dimension_numbers = #tpu.dot_dimension_numbers<[1], [0], [0], [1], [0, 0, 1, 1], [], []>} : vector<256x32xbf16>, vector<32x128xbf16>, vector<256x128xf32> -> vector<256x128xf32>
    %c0_29 = arith.constant 0 : index
    %c0_30 = arith.constant 0 : index
    %29 = vector.load %arg12[%c0_29, %c0_30] : memref<1x128xf32, #tpu.memory_space<vmem>>, vector<1x128xf32>
    %30 = vector.broadcast %29 : vector<1x128xf32> to vector<256x128xf32>
    %31 = arith.addf %28, %30 : vector<256x128xf32>
    %cst_31 = arith.constant 0.000000e+00 : f32
    %32 = vector.broadcast %cst_31 : f32 to vector<256x128xf32>
    %33 = arith.maximumf %31, %32 : vector<256x128xf32>
    %34 = arith.truncf %16 : vector<256x128xf32> to vector<256x128xbf16>
    %35 = arith.truncf %33 : vector<256x128xf32> to vector<256x128xbf16>
    %c0_32 = arith.constant 0 : index
    %c0_33 = arith.constant 0 : index
    %36 = vector.load %arg13[%c0_32, %c0_33] : memref<128x384xbf16, #tpu.memory_space<vmem>>, vector<128x384xbf16>
    %cst_34 = arith.constant dense<0.000000e+00> : vector<256x384xf32>
    %37 = tpu.matmul %34, %36, %cst_34 {dimension_numbers = #tpu.dot_dimension_numbers<[1], [0], [0], [1], [0, 0, 1, 1], [], []>} : vector<256x128xbf16>, vector<128x384xbf16>, vector<256x384xf32> -> vector<256x384xf32>
    %38 = vector.extract_strided_slice %37 {offsets = [0, 256], sizes = [256, 128], strides = [1, 1]} : vector<256x384xf32> to vector<256x128xf32>
    %c0_35 = arith.constant 0 : index
    %c0_36 = arith.constant 0 : index
    %39 = vector.load %arg14[%c0_35, %c0_36] : memref<128x128xbf16, #tpu.memory_space<vmem>>, vector<128x128xbf16>
    %cst_37 = arith.constant dense<0.000000e+00> : vector<256x128xf32>
    %40 = tpu.matmul %35, %39, %cst_37 {dimension_numbers = #tpu.dot_dimension_numbers<[1], [0], [0], [1], [0, 0, 1, 1], [], []>} : vector<256x128xbf16>, vector<128x128xbf16>, vector<256x128xf32> -> vector<256x128xf32>
    %41 = arith.addf %38, %40 : vector<256x128xf32>
    %c0_38 = arith.constant 0 : index
    %c0_39 = arith.constant 0 : index
    %42 = vector.load %arg15[%c0_38, %c0_39] : memref<1x128xf32, #tpu.memory_space<vmem>>, vector<1x128xf32>
    %43 = vector.broadcast %42 : vector<1x128xf32> to vector<256x128xf32>
    %44 = arith.addf %41, %43 : vector<256x128xf32>
    %45 = vector.extract_strided_slice %37 {offsets = [0, 0], sizes = [256, 128], strides = [1, 1]} : vector<256x384xf32> to vector<256x128xf32>
    %46 = arith.mulf %45, %33 : vector<256x128xf32>
    %cst_40 = arith.constant dense<0.000000e+00> : vector<256xf32>
    %47 = vector.multi_reduction <add>, %46, %cst_40 [1] : vector<256x128xf32> to vector<256xf32>
    %48 = vector.shape_cast %47 : vector<256xf32> to vector<256x1xf32>
    %49 = vector.extract_strided_slice %37 {offsets = [0, 128], sizes = [256, 128], strides = [1, 1]} : vector<256x384xf32> to vector<256x128xf32>
    %50 = arith.mulf %49, %33 : vector<256x128xf32>
    %cst_41 = arith.constant dense<0.000000e+00> : vector<256xf32>
    %51 = vector.multi_reduction <add>, %50, %cst_41 [1] : vector<256x128xf32> to vector<256xf32>
    %52 = vector.shape_cast %51 : vector<256xf32> to vector<256x1xf32>
    %53 = tpu.iota {dimensions = array<i32: 1>} : vector<1x128xi32>
    %c0_i32 = arith.constant 0 : i32
    %54 = vector.broadcast %c0_i32 : i32 to vector<1x128xi32>
    %55 = arith.cmpi eq, %53, %54 : vector<1x128xi32>
    %56 = arith.extui %55 : vector<1x128xi1> to vector<1x128xi32>
    %57 = arith.sitofp %56 : vector<1x128xi32> to vector<1x128xf32>
    %58 = vector.broadcast %48 : vector<256x1xf32> to vector<256x128xf32>
    %59 = vector.broadcast %57 : vector<1x128xf32> to vector<256x128xf32>
    %60 = arith.mulf %58, %59 : vector<256x128xf32>
    %c1_i32 = arith.constant 1 : i32
    %61 = vector.broadcast %c1_i32 : i32 to vector<1x128xi32>
    %62 = arith.cmpi eq, %53, %61 : vector<1x128xi32>
    %63 = arith.extui %62 : vector<1x128xi1> to vector<1x128xi32>
    %64 = arith.sitofp %63 : vector<1x128xi32> to vector<1x128xf32>
    %65 = vector.broadcast %52 : vector<256x1xf32> to vector<256x128xf32>
    %66 = vector.broadcast %64 : vector<1x128xf32> to vector<256x128xf32>
    %67 = arith.mulf %65, %66 : vector<256x128xf32>
    %68 = arith.addf %60, %67 : vector<256x128xf32>
    %69 = arith.addf %44, %68 : vector<256x128xf32>
    %70 = arith.truncf %69 : vector<256x128xf32> to vector<256x128xbf16>
    %c0_42 = arith.constant 0 : index
    %c0_43 = arith.constant 0 : index
    %71 = vector.load %arg16[%c0_42, %c0_43] : memref<256x128xbf16, #tpu.memory_space<vmem>>, vector<256x128xbf16>
    tpu.vector_store %arg16[%c0_42, %c0_43], %70 {strides = array<i32>} : memref<256x128xbf16, #tpu.memory_space<vmem>>, vector<256x128xbf16>,
    return
  }
  func.func @transform_0(%arg0: i32) -> (i32, i32) {
    %c0_i32 = arith.constant 0 : i32
    %c0_i32_0 = arith.constant 0 : i32
    return %arg0, %c0_i32 : i32, i32
  }
  func.func @transform_1(%arg0: i32) -> (i32, i32) {
    %c0_i32 = arith.constant 0 : i32
    %c0_i32_0 = arith.constant 0 : i32
    return %arg0, %c0_i32 : i32, i32
  }
  func.func @transform_2(%arg0: i32) -> (i32, i32) {
    %c0_i32 = arith.constant 0 : i32
    %c0_i32_0 = arith.constant 0 : i32
    return %arg0, %c0_i32 : i32, i32
  }
  func.func @transform_3(%arg0: i32) -> (i32, i32) {
    %c0_i32 = arith.constant 0 : i32
    %c0_i32_0 = arith.constant 0 : i32
    return %arg0, %c0_i32 : i32, i32
  }
  func.func @transform_4(%arg0: i32) -> (i32, i32) {
    %c0_i32 = arith.constant 0 : i32
    %c0_i32_0 = arith.constant 0 : i32
    %c0_i32_1 = arith.constant 0 : i32
    return %c0_i32, %c0_i32_0 : i32, i32
  }
  func.func @transform_5(%arg0: i32) -> (i32, i32) {
    %c0_i32 = arith.constant 0 : i32
    %c0_i32_0 = arith.constant 0 : i32
    %c0_i32_1 = arith.constant 0 : i32
    return %c0_i32, %c0_i32_0 : i32, i32
  }
  func.func @transform_6(%arg0: i32) -> (i32, i32) {
    %c0_i32 = arith.constant 0 : i32
    %c0_i32_0 = arith.constant 0 : i32
    %c0_i32_1 = arith.constant 0 : i32
    return %c0_i32, %c0_i32_0 : i32, i32
  }
  func.func @transform_7(%arg0: i32) -> (i32, i32) {
    %c0_i32 = arith.constant 0 : i32
    %c0_i32_0 = arith.constant 0 : i32
    %c0_i32_1 = arith.constant 0 : i32
    return %c0_i32, %c0_i32_0 : i32, i32
  }
  func.func @transform_8(%arg0: i32) -> (i32, i32) {
    %c0_i32 = arith.constant 0 : i32
    %c0_i32_0 = arith.constant 0 : i32
    %c0_i32_1 = arith.constant 0 : i32
    return %c0_i32, %c0_i32_0 : i32, i32
  }
  func.func @transform_9(%arg0: i32) -> (i32, i32) {
    %c0_i32 = arith.constant 0 : i32
    %c0_i32_0 = arith.constant 0 : i32
    %c0_i32_1 = arith.constant 0 : i32
    return %c0_i32, %c0_i32_0 : i32, i32
  }
  func.func @transform_10(%arg0: i32) -> (i32, i32) {
    %c0_i32 = arith.constant 0 : i32
    %c0_i32_0 = arith.constant 0 : i32
    %c0_i32_1 = arith.constant 0 : i32
    return %c0_i32, %c0_i32_0 : i32, i32
  }
  func.func @transform_11(%arg0: i32) -> (i32, i32) {
    %c0_i32 = arith.constant 0 : i32
    %c0_i32_0 = arith.constant 0 : i32
    %c0_i32_1 = arith.constant 0 : i32
    return %c0_i32, %c0_i32_0 : i32, i32
  }
  func.func @transform_12(%arg0: i32) -> (i32, i32) {
    %c0_i32 = arith.constant 0 : i32
    %c0_i32_0 = arith.constant 0 : i32
    %c0_i32_1 = arith.constant 0 : i32
    return %c0_i32, %c0_i32_0 : i32, i32
  }
  func.func @transform_13(%arg0: i32) -> (i32, i32) {
    %c0_i32 = arith.constant 0 : i32
    %c0_i32_0 = arith.constant 0 : i32
    %c0_i32_1 = arith.constant 0 : i32
    return %c0_i32, %c0_i32_0 : i32, i32
  }
  func.func @transform_14(%arg0: i32) -> (i32, i32) {
    %c0_i32 = arith.constant 0 : i32
    %c0_i32_0 = arith.constant 0 : i32
    %c0_i32_1 = arith.constant 0 : i32
    return %c0_i32, %c0_i32_0 : i32, i32
  }
  func.func @transform_15(%arg0: i32) -> (i32, i32) {
    %c0_i32 = arith.constant 0 : i32
    %c0_i32_0 = arith.constant 0 : i32
    return %arg0, %c0_i32 : i32, i32
  }
}

</mosaic_0001>

<llo_original>
// kernel: tpu_custom_call.1
$region0: #{tpu_custom_call.1}
  #allocation0 [shape = 'u32[]', space=smem, size = 0x4, offset = 0x4, fixed_abs, tag = 'smem constant byte address 0x4 - core index']
  #allocation1 [shape = 'u32[144,128]{1,0:T(1,128)}', space=vmem, size = 0x12000, scoped, tag = 'internal scratch']
  %s0 = inlined_call_operand.vmem [shape: bf16[512,32], index: 0, kind: input, shape index: {}]
  %s1 = inlined_call_operand.vmem [shape: bf16[512,8], index: 1, kind: input, shape index: {}]
  %s2 = inlined_call_operand.vmem [shape: bf16[512,32], index: 2, kind: input, shape index: {}]
  %s3 = inlined_call_operand.vmem [shape: bf16[512,8], index: 3, kind: input, shape index: {}]
  %s4 = inlined_call_operand.vmem [shape: bf16[32,32], index: 4, kind: input, shape index: {}]
  %s5 = inlined_call_operand.vmem [shape: bf16[8,32], index: 5, kind: input, shape index: {}]
  %s6 = inlined_call_operand.vmem [shape: bf16[32,128], index: 6, kind: input, shape index: {}]
  %s7 = inlined_call_operand.vmem [shape: f32[1,128], index: 7, kind: input, shape index: {}]
  %s8 = inlined_call_operand.vmem [shape: bf16[32,32], index: 8, kind: input, shape index: {}]
  %s9 = inlined_call_operand.vmem [shape: bf16[8,32], index: 9, kind: input, shape index: {}]
  %s10 = inlined_call_operand.vmem [shape: bf16[32,128], index: 10, kind: input, shape index: {}]
  %s11 = inlined_call_operand.vmem [shape: f32[1,128], index: 11, kind: input, shape index: {}]
  %s12 = inlined_call_operand.vmem [shape: bf16[128,384], index: 12, kind: input, shape index: {}]
  %s13 = inlined_call_operand.vmem [shape: bf16[128,128], index: 13, kind: input, shape index: {}]
  %s14 = inlined_call_operand.vmem [shape: f32[1,128], index: 14, kind: input, shape index: {}]
  %s15 = inlined_call_operand.hbm [shape: bf16[512,128], index: 15, kind: output, shape index: {}]
  %s16 = sld [smem:[#allocation0]]
  $region93: #{tpu_custom_call.1} parent=0
    _
  %s18 = ssub.s32 1, %s16
  %s19 = scalar_select 0, %s18, %s16
  $region1: #{tpu_custom_call.1} parent=0
    #allocation2 [shape = 'u8[131072]{0}', space=vmem, size = 0x20000, scoped, tag = 'output window, operand 0']
    #allocation3 [shape = 's32[2]{0}', space=sflag, size = 0x8, scoped, tag = 'scoped memory for tpu_custom_call.1']
    %20 = vsyncpa [#allocation3], 0
    %s21 = scalar_lea.sflag [#allocation3], 1
    %22 = vsyncpa %s21, 0
    loop: start=0, step=1, limit=4
    $region2: #{tpu_custom_call.1} parent=1 // loop_pre_header
      _
    $region3: #{tpu_custom_call.1} parent=1 // loop_header
      %s24 = sphi 0, %s28
      %p25 = scmp.ge.s32.totalorder %s24, 4
      %s34 = sphi 0, %s36
      %s37 = sphi 0, %s34
      %s38 = sphi 0, %s37
      %s54 = sphi 0, %s38
      %s60 = sphi 0, %s62
      %s63 = sphi 0, %s60
      %s64 = sphi 0, %s63
      %s80 = sphi 0, %s64
      %s86 = sphi 0, %s88
      %s89 = sphi 0, %s86
      %s90 = sphi 0, %s89
      %s106 = sphi 0, %s90
      %s112 = sphi 0, %s114
      %s115 = sphi 0, %s112
      %s116 = sphi 0, %s115
      %s132 = sphi 0, %s116
      %s136 = sphi 0, %s136
      %s138 = sphi 0, %s136
      %s139 = sphi 0, %s138
      %s153 = sphi 0, %s139
      %s157 = sphi 0, %s157
      %s159 = sphi 0, %s157
      %s160 = sphi 0, %s159
      %s174 = sphi 0, %s160
      %s178 = sphi 0, %s178
      %s180 = sphi 0, %s178
      %s181 = sphi 0, %s180
      %s195 = sphi 0, %s181
      %s199 = sphi 0, %s199
      %s201 = sphi 0, %s199
      %s202 = sphi 0, %s201
      %s216 = sphi 0, %s202
      %s220 = sphi 0, %s220
      %s222 = sphi 0, %s220
      %s223 = sphi 0, %s222
      %s237 = sphi 0, %s223
      %s241 = sphi 0, %s241
      %s243 = sphi 0, %s241
      %s244 = sphi 0, %s243
      %s258 = sphi 0, %s244
      %s262 = sphi 0, %s262
      %s264 = sphi 0, %s262
      %s265 = sphi 0, %s264
      %s279 = sphi 0, %s265
      %s283 = sphi 0, %s283
      %s285 = sphi 0, %s283
      %s286 = sphi 0, %s285
      %s300 = sphi 0, %s286
      %s304 = sphi 0, %s304
      %s306 = sphi 0, %s304
      %s307 = sphi 0, %s306
      %s321 = sphi 0, %s307
      %s325 = sphi 0, %s325
      %s327 = sphi 0, %s325
      %s328 = sphi 0, %s327
      %s342 = sphi 0, %s328
      %s346 = sphi 0, %s346
      %s348 = sphi 0, %s346
      %s349 = sphi 0, %s348
      %s363 = sphi 0, %s349
      %s369 = sphi 0, %s371
      %s372 = sphi 0, %s369
      %s373 = sphi 0, %s372
      %s389 = sphi 0, %s373
    $region4: #{tpu_custom_call.1} parent=1 // loop_header_branch
      %27 = sbr.rel (%p25) target = $region8
    $region5: #{tpu_custom_call.1} parent=1 // loop_body
      %s29 = ssub.s32 %s24, 1
      %s30 = ssub.s32 %s24, 2
      %s31 = sadd.s32 %s24, 1
      %s32 = ssub.s32 %s24, %s31
      %p33 = scmp.eq.s32.totalorder %s32, 0
      %s35 = sadd.s32 %s34, 1
      %s36 = scalar_select %p33, %s34, %s35
      %p39 = pneg %p33
      %p40 = scmp.eq.s32.totalorder %s24, 1
      %p41 = por %p39, %p40
      %p42 = scmp.ne.s32.totalorder %s34, %s37
      %p43 = scmp.eq.s32.totalorder %s24, 0
      %p44 = por %p42, %p43
      %p45 = scmp.ne.s32.totalorder %s34, %s37
      %p46 = scmp.eq.s32.totalorder %s29, 1
      %p47 = por %p45, %p46
      %p48 = scmp.ne.s32.totalorder %s37, %s38
      %p49 = scmp.eq.s32.totalorder %s29, 0
      %p50 = por %p48, %p49
      %p51 = scmp.ne.s32.totalorder %s37, %s38
      %p52 = scmp.eq.s32.totalorder %s30, 1
      %p53 = por %p51, %p52
      %p55 = scmp.ne.s32.totalorder %s38, %s54
      %p56 = scmp.eq.s32.totalorder %s30, 0
      %p57 = por %p55, %p56
      %s58 = ssub.s32 %s24, %s31
      %p59 = scmp.eq.s32.totalorder %s58, 0
      %s61 = sadd.s32 %s60, 1
      %s62 = scalar_select %p59, %s60, %s61
      %p65 = pneg %p59
      %p66 = scmp.eq.s32.totalorder %s24, 1
      %p67 = por %p65, %p66
      %p68 = scmp.ne.s32.totalorder %s60, %s63
      %p69 = scmp.eq.s32.totalorder %s24, 0
      %p70 = por %p68, %p69
      %p71 = scmp.ne.s32.totalorder %s60, %s63
      %p72 = scmp.eq.s32.totalorder %s29, 1
      %p73 = por %p71, %p72
      %p74 = scmp.ne.s32.totalorder %s63, %s64
      %p75 = scmp.eq.s32.totalorder %s29, 0
      %p76 = por %p74, %p75
      %p77 = scmp.ne.s32.totalorder %s63, %s64
      %p78 = scmp.eq.s32.totalorder %s30, 1
      %p79 = por %p77, %p78
      %p81 = scmp.ne.s32.totalorder %s64, %s80
      %p82 = scmp.eq.s32.totalorder %s30, 0
      %p83 = por %p81, %p82
      %s84 = ssub.s32 %s24, %s31
      %p85 = scmp.eq.s32.totalorder %s84, 0
      %s87 = sadd.s32 %s86, 1
      %s88 = scalar_select %p85, %s86, %s87
      %p91 = pneg %p85
      %p92 = scmp.eq.s32.totalorder %s24, 1
      %p93 = por %p91, %p92
      %p94 = scmp.ne.s32.totalorder %s86, %s89
      %p95 = scmp.eq.s32.totalorder %s24, 0
      %p96 = por %p94, %p95
      %p97 = scmp.ne.s32.totalorder %s86, %s89
      %p98 = scmp.eq.s32.totalorder %s29, 1
      %p99 = por %p97, %p98
      %p100 = scmp.ne.s32.totalorder %s89, %s90
      %p101 = scmp.eq.s32.totalorder %s29, 0
      %p102 = por %p100, %p101
      %p103 = scmp.ne.s32.totalorder %s89, %s90
      %p104 = scmp.eq.s32.totalorder %s30, 1
      %p105 = por %p103, %p104
      %p107 = scmp.ne.s32.totalorder %s90, %s106
      %p108 = scmp.eq.s32.totalorder %s30, 0
      %p109 = por %p107, %p108
      %s110 = ssub.s32 %s24, %s31
      %p111 = scmp.eq.s32.totalorder %s110, 0
      %s113 = sadd.s32 %s112, 1
      %s114 = scalar_select %p111, %s112, %s113
      %p117 = pneg %p111
      %p118 = scmp.eq.s32.totalorder %s24, 1
      %p119 = por %p117, %p118
      %p120 = scmp.ne.s32.totalorder %s112, %s115
      %p121 = scmp.eq.s32.totalorder %s24, 0
      %p122 = por %p120, %p121
      %p123 = scmp.ne.s32.totalorder %s112, %s115
      %p124 = scmp.eq.s32.totalorder %s29, 1
      %p125 = por %p123, %p124
      %p126 = scmp.ne.s32.totalorder %s115, %s116
      %p127 = scmp.eq.s32.totalorder %s29, 0
      %p128 = por %p126, %p127
      %p129 = scmp.ne.s32.totalorder %s115, %s116
      %p130 = scmp.eq.s32.totalorder %s30, 1
      %p131 = por %p129, %p130
      %p133 = scmp.ne.s32.totalorder %s116, %s132
      %p134 = scmp.eq.s32.totalorder %s30, 0
      %p135 = por %p133, %p134
      %s137 = sadd.s32 %s136, 1
      %p140 = scmp.eq.s32.totalorder %s24, 1
      %p141 = scmp.ne.s32.totalorder %s136, %s138
      %p142 = scmp.eq.s32.totalorder %s24, 0
      %p143 = por %p141, %p142
      %p144 = scmp.ne.s32.totalorder %s136, %s138
      %p145 = scmp.eq.s32.totalorder %s29, 1
      %p146 = por %p144, %p145
      %p147 = scmp.ne.s32.totalorder %s138, %s139
      %p148 = scmp.eq.s32.totalorder %s29, 0
      %p149 = por %p147, %p148
      %p150 = scmp.ne.s32.totalorder %s138, %s139
      %p151 = scmp.eq.s32.totalorder %s30, 1
      %p152 = por %p150, %p151
      %p154 = scmp.ne.s32.totalorder %s139, %s153
      %p155 = scmp.eq.s32.totalorder %s30, 0
      %p156 = por %p154, %p155
      %s158 = sadd.s32 %s157, 1
      %p161 = scmp.eq.s32.totalorder %s24, 1
      %p162 = scmp.ne.s32.totalorder %s157, %s159
      %p163 = scmp.eq.s32.totalorder %s24, 0
      %p164 = por %p162, %p163
      %p165 = scmp.ne.s32.totalorder %s157, %s159
      %p166 = scmp.eq.s32.totalorder %s29, 1
      %p167 = por %p165, %p166
      %p168 = scmp.ne.s32.totalorder %s159, %s160
      %p169 = scmp.eq.s32.totalorder %s29, 0
      %p170 = por %p168, %p169
      %p171 = scmp.ne.s32.totalorder %s159, %s160
      %p172 = scmp.eq.s32.totalorder %s30, 1
      %p173 = por %p171, %p172
      %p175 = scmp.ne.s32.totalorder %s160, %s174
      %p176 = scmp.eq.s32.totalorder %s30, 0
      %p177 = por %p175, %p176
      %s179 = sadd.s32 %s178, 1
      %p182 = scmp.eq.s32.totalorder %s24, 1
      %p183 = scmp.ne.s32.totalorder %s178, %s180
      %p184 = scmp.eq.s32.totalorder %s24, 0
      %p185 = por %p183, %p184
      %p186 = scmp.ne.s32.totalorder %s178, %s180
      %p187 = scmp.eq.s32.totalorder %s29, 1
      %p188 = por %p186, %p187
      %p189 = scmp.ne.s32.totalorder %s180, %s181
      %p190 = scmp.eq.s32.totalorder %s29, 0
      %p191 = por %p189, %p190
      %p192 = scmp.ne.s32.totalorder %s180, %s181
      %p193 = scmp.eq.s32.totalorder %s30, 1
      %p194 = por %p192, %p193
      %p196 = scmp.ne.s32.totalorder %s181, %s195
      %p197 = scmp.eq.s32.totalorder %s30, 0
      %p198 = por %p196, %p197
      %s200 = sadd.s32 %s199, 1
      %p203 = scmp.eq.s32.totalorder %s24, 1
      %p204 = scmp.ne.s32.totalorder %s199, %s201
      %p205 = scmp.eq.s32.totalorder %s24, 0
      %p206 = por %p204, %p205
      %p207 = scmp.ne.s32.totalorder %s199, %s201
      %p208 = scmp.eq.s32.totalorder %s29, 1
      %p209 = por %p207, %p208
      %p210 = scmp.ne.s32.totalorder %s201, %s202
      %p211 = scmp.eq.s32.totalorder %s29, 0
      %p212 = por %p210, %p211
      %p213 = scmp.ne.s32.totalorder %s201, %s202
      %p214 = scmp.eq.s32.totalorder %s30, 1
      %p215 = por %p213, %p214
      %p217 = scmp.ne.s32.totalorder %s202, %s216
      %p218 = scmp.eq.s32.totalorder %s30, 0
      %p219 = por %p217, %p218
      %s221 = sadd.s32 %s220, 1
      %p224 = scmp.eq.s32.totalorder %s24, 1
      %p225 = scmp.ne.s32.totalorder %s220, %s222
      %p226 = scmp.eq.s32.totalorder %s24, 0
      %p227 = por %p225, %p226
      %p228 = scmp.ne.s32.totalorder %s220, %s222
      %p229 = scmp.eq.s32.totalorder %s29, 1
      %p230 = por %p228, %p229
      %p231 = scmp.ne.s32.totalorder %s222, %s223
      %p232 = scmp.eq.s32.totalorder %s29, 0
      %p233 = por %p231, %p232
      %p234 = scmp.ne.s32.totalorder %s222, %s223
      %p235 = scmp.eq.s32.totalorder %s30, 1
      %p236 = por %p234, %p235
      %p238 = scmp.ne.s32.totalorder %s223, %s237
      %p239 = scmp.eq.s32.totalorder %s30, 0
      %p240 = por %p238, %p239
      %s242 = sadd.s32 %s241, 1
      %p245 = scmp.eq.s32.totalorder %s24, 1
      %p246 = scmp.ne.s32.totalorder %s241, %s243
      %p247 = scmp.eq.s32.totalorder %s24, 0
      %p248 = por %p246, %p247
      %p249 = scmp.ne.s32.totalorder %s241, %s243
      %p250 = scmp.eq.s32.totalorder %s29, 1
      %p251 = por %p249, %p250
      %p252 = scmp.ne.s32.totalorder %s243, %s244
      %p253 = scmp.eq.s32.totalorder %s29, 0
      %p254 = por %p252, %p253
      %p255 = scmp.ne.s32.totalorder %s243, %s244
      %p256 = scmp.eq.s32.totalorder %s30, 1
      %p257 = por %p255, %p256
      %p259 = scmp.ne.s32.totalorder %s244, %s258
      %p260 = scmp.eq.s32.totalorder %s30, 0
      %p261 = por %p259, %p260
      %s263 = sadd.s32 %s262, 1
      %p266 = scmp.eq.s32.totalorder %s24, 1
      %p267 = scmp.ne.s32.totalorder %s262, %s264
      %p268 = scmp.eq.s32.totalorder %s24, 0
      %p269 = por %p267, %p268
      %p270 = scmp.ne.s32.totalorder %s262, %s264
      %p271 = scmp.eq.s32.totalorder %s29, 1
      %p272 = por %p270, %p271
      %p273 = scmp.ne.s32.totalorder %s264, %s265
      %p274 = scmp.eq.s32.totalorder %s29, 0
      %p275 = por %p273, %p274
      %p276 = scmp.ne.s32.totalorder %s264, %s265
      %p277 = scmp.eq.s32.totalorder %s30, 1
      %p278 = por %p276, %p277
      %p280 = scmp.ne.s32.totalorder %s265, %s279
      %p281 = scmp.eq.s32.totalorder %s30, 0
      %p282 = por %p280, %p281
      %s284 = sadd.s32 %s283, 1
      %p287 = scmp.eq.s32.totalorder %s24, 1
      %p288 = scmp.ne.s32.totalorder %s283, %s285
      %p289 = scmp.eq.s32.totalorder %s24, 0
      %p290 = por %p288, %p289
      %p291 = scmp.ne.s32.totalorder %s283, %s285
      %p292 = scmp.eq.s32.totalorder %s29, 1
      %p293 = por %p291, %p292
      %p294 = scmp.ne.s32.totalorder %s285, %s286
      %p295 = scmp.eq.s32.totalorder %s29, 0
      %p296 = por %p294, %p295
      %p297 = scmp.ne.s32.totalorder %s285, %s286
      %p298 = scmp.eq.s32.totalorder %s30, 1
      %p299 = por %p297, %p298
      %p301 = scmp.ne.s32.totalorder %s286, %s300
      %p302 = scmp.eq.s32.totalorder %s30, 0
      %p303 = por %p301, %p302
      %s305 = sadd.s32 %s304, 1
      %p308 = scmp.eq.s32.totalorder %s24, 1
      %p309 = scmp.ne.s32.totalorder %s304, %s306
      %p310 = scmp.eq.s32.totalorder %s24, 0
      %p311 = por %p309, %p310
      %p312 = scmp.ne.s32.totalorder %s304, %s306
      %p313 = scmp.eq.s32.totalorder %s29, 1
      %p314 = por %p312, %p313
      %p315 = scmp.ne.s32.totalorder %s306, %s307
      %p316 = scmp.eq.s32.totalorder %s29, 0
      %p317 = por %p315, %p316
      %p318 = scmp.ne.s32.totalorder %s306, %s307
      %p319 = scmp.eq.s32.totalorder %s30, 1
      %p320 = por %p318, %p319
      %p322 = scmp.ne.s32.totalorder %s307, %s321
      %p323 = scmp.eq.s32.totalorder %s30, 0
      %p324 = por %p322, %p323
      %s326 = sadd.s32 %s325, 1
      %p329 = scmp.eq.s32.totalorder %s24, 1
      %p330 = scmp.ne.s32.totalorder %s325, %s327
      %p331 = scmp.eq.s32.totalorder %s24, 0
      %p332 = por %p330, %p331
      %p333 = scmp.ne.s32.totalorder %s325, %s327
      %p334 = scmp.eq.s32.totalorder %s29, 1
      %p335 = por %p333, %p334
      %p336 = scmp.ne.s32.totalorder %s327, %s328
      %p337 = scmp.eq.s32.totalorder %s29, 0
      %p338 = por %p336, %p337
      %p339 = scmp.ne.s32.totalorder %s327, %s328
      %p340 = scmp.eq.s32.totalorder %s30, 1
      %p341 = por %p339, %p340
      %p343 = scmp.ne.s32.totalorder %s328, %s342
      %p344 = scmp.eq.s32.totalorder %s30, 0
      %p345 = por %p343, %p344
      %s347 = sadd.s32 %s346, 1
      %p350 = scmp.eq.s32.totalorder %s24, 1
      %p351 = scmp.ne.s32.totalorder %s346, %s348
      %p352 = scmp.eq.s32.totalorder %s24, 0
      %p353 = por %p351, %p352
      %p354 = scmp.ne.s32.totalorder %s346, %s348
      %p355 = scmp.eq.s32.totalorder %s29, 1
      %p356 = por %p354, %p355
      %p357 = scmp.ne.s32.totalorder %s348, %s349
      %p358 = scmp.eq.s32.totalorder %s29, 0
      %p359 = por %p357, %p358
      %p360 = scmp.ne.s32.totalorder %s348, %s349
      %p361 = scmp.eq.s32.totalorder %s30, 1
      %p362 = por %p360, %p361
      %p364 = scmp.ne.s32.totalorder %s349, %s363
      %p365 = scmp.eq.s32.totalorder %s30, 0
      %p366 = por %p364, %p365
      %s367 = ssub.s32 %s24, %s31
      %p368 = scmp.eq.s32.totalorder %s367, 0
      %s370 = sadd.s32 %s369, 1
      %s371 = scalar_select %p368, %s369, %s370
      %p374 = pneg %p368
      %p375 = scmp.eq.s32.totalorder %s24, 1
      %p376 = por %p374, %p375
      %p377 = scmp.ne.s32.totalorder %s369, %s372
      %p378 = scmp.eq.s32.totalorder %s24, 0
      %p379 = por %p377, %p378
      %p380 = scmp.ne.s32.totalorder %s369, %s372
      %p381 = scmp.eq.s32.totalorder %s29, 1
      %p382 = por %p380, %p381
      %p383 = scmp.ne.s32.totalorder %s372, %s373
      %p384 = scmp.eq.s32.totalorder %s29, 0
      %p385 = por %p383, %p384
      %p386 = scmp.ne.s32.totalorder %s372, %s373
      %p387 = scmp.eq.s32.totalorder %s30, 1
      %p388 = por %p386, %p387
      %p390 = scmp.ne.s32.totalorder %s373, %s389
      %p391 = scmp.eq.s32.totalorder %s30, 0
      %p392 = por %p390, %p391
      %p393 = scmp.le.s32.totalorder 1, %s24
      %p394 = scmp.lt.s32.totalorder %s24, 3
      %p395 = pnand %p393, %p394
      %p396 = pneg %p395
      // Predicated region
      $region9: #{tpu_custom_call.1} parent=5 // pred_check
        _
      $region10: #{tpu_custom_call.1} parent=5 // pred_check_branch
        %398 = sbr.rel (%p395) target = $region12
      $region11: #{tpu_custom_call.1} parent=5 // pred_region
        %s399 = ssub.s32 %s24, 1
        // Predicated region
        $region13: #{tpu_custom_call.1} parent=11 // pred_check
          %p400 = pneg %p149
        $region14: #{tpu_custom_call.1} parent=11 // pred_check_branch
          %402 = sbr.rel (%p400) target = $region16
        $region15: #{tpu_custom_call.1} parent=11 // pred_region
          _
        $region16: #{tpu_custom_call.1} parent=11 // pred_fallthru
          _
        // Predicated region
        $region17: #{tpu_custom_call.1} parent=11 // pred_check
          %p403 = pneg %p170
        $region18: #{tpu_custom_call.1} parent=11 // pred_check_branch
          %405 = sbr.rel (%p403) target = $region20
        $region19: #{tpu_custom_call.1} parent=11 // pred_region
          _
        $region20: #{tpu_custom_call.1} parent=11 // pred_fallthru
          _
        // Predicated region
        $region21: #{tpu_custom_call.1} parent=11 // pred_check
          %p406 = pneg %p191
        $region22: #{tpu_custom_call.1} parent=11 // pred_check_branch
          %408 = sbr.rel (%p406) target = $region24
        $region23: #{tpu_custom_call.1} parent=11 // pred_region
          _
        $region24: #{tpu_custom_call.1} parent=11 // pred_fallthru
          _
        // Predicated region
        $region25: #{tpu_custom_call.1} parent=11 // pred_check
          %p409 = pneg %p212
        $region26: #{tpu_custom_call.1} parent=11 // pred_check_branch
          %411 = sbr.rel (%p409) target = $region28
        $region27: #{tpu_custom_call.1} parent=11 // pred_region
          _
        $region28: #{tpu_custom_call.1} parent=11 // pred_fallthru
          _
        // Predicated region
        $region29: #{tpu_custom_call.1} parent=11 // pred_check
          %p412 = pneg %p233
        $region30: #{tpu_custom_call.1} parent=11 // pred_check_branch
          %414 = sbr.rel (%p412) target = $region32
        $region31: #{tpu_custom_call.1} parent=11 // pred_region
          _
        $region32: #{tpu_custom_call.1} parent=11 // pred_fallthru
          _
        // Predicated region
        $region33: #{tpu_custom_call.1} parent=11 // pred_check
          %p415 = pneg %p254
        $region34: #{tpu_custom_call.1} parent=11 // pred_check_branch
          %417 = sbr.rel (%p415) target = $region36
        $region35: #{tpu_custom_call.1} parent=11 // pred_region
          _
        $region36: #{tpu_custom_call.1} parent=11 // pred_fallthru
          _
        // Predicated region
        $region37: #{tpu_custom_call.1} parent=11 // pred_check
          %p418 = pneg %p275
        $region38: #{tpu_custom_call.1} parent=11 // pred_check_branch
          %420 = sbr.rel (%p418) target = $region40
        $region39: #{tpu_custom_call.1} parent=11 // pred_region
          _
        $region40: #{tpu_custom_call.1} parent=11 // pred_fallthru
          _
        // Predicated region
        $region41: #{tpu_custom_call.1} parent=11 // pred_check
          %p421 = pneg %p296
        $region42: #{tpu_custom_call.1} parent=11 // pred_check_branch
          %423 = sbr.rel (%p421) target = $region44
        $region43: #{tpu_custom_call.1} parent=11 // pred_region
          _
        $region44: #{tpu_custom_call.1} parent=11 // pred_fallthru
          _
        // Predicated region
        $region45: #{tpu_custom_call.1} parent=11 // pred_check
          %p424 = pneg %p317
        $region46: #{tpu_custom_call.1} parent=11 // pred_check_branch
          %426 = sbr.rel (%p424) target = $region48
        $region47: #{tpu_custom_call.1} parent=11 // pred_region
          _
        $region48: #{tpu_custom_call.1} parent=11 // pred_fallthru
          _
        // Predicated region
        $region49: #{tpu_custom_call.1} parent=11 // pred_check
          %p427 = pneg %p338
        $region50: #{tpu_custom_call.1} parent=11 // pred_check_branch
          %429 = sbr.rel (%p427) target = $region52
        $region51: #{tpu_custom_call.1} parent=11 // pred_region
          _
        $region52: #{tpu_custom_call.1} parent=11 // pred_fallthru
          _
        // Predicated region
        $region53: #{tpu_custom_call.1} parent=11 // pred_check
          %p430 = pneg %p359
        $region54: #{tpu_custom_call.1} parent=11 // pred_check_branch
          %432 = sbr.rel (%p430) target = $region56
        $region55: #{tpu_custom_call.1} parent=11 // pred_region
          _
        $region56: #{tpu_custom_call.1} parent=11 // pred_fallthru
          _
      $region12: #{tpu_custom_call.1} parent=5 // pred_fallthru
        _
      %p433 = scmp.lt.s32.totalorder %s24, 2
      // Predicated region
      $region57: #{tpu_custom_call.1} parent=5 // pred_check
        %p434 = pneg %p433
      $region58: #{tpu_custom_call.1} parent=5 // pred_check_branch
        %436 = sbr.rel (%p434) target = $region60
      $region59: #{tpu_custom_call.1} parent=5 // pred_region
        // Predicated region
        $region61: #{tpu_custom_call.1} parent=59 // pred_check
          %p437 = pneg %p44
        $region62: #{tpu_custom_call.1} parent=59 // pred_check_branch
          %439 = sbr.rel (%p437) target = $region64
        $region63: #{tpu_custom_call.1} parent=59 // pred_region
          %s440 = smul.u32 32, %s24
          %p441 = scmp.lt.s32.totalorder %s440, 63
          %s442 = scalar_select %p441, %s440, 63
          %s443 = smul.addr %s442, 4
          %s444 = scalar_lea.vmem %s0, %s443
          %s445 = smul.u32 32, %s24
        $region64: #{tpu_custom_call.1} parent=59 // pred_fallthru
          _
        // Predicated region
        $region65: #{tpu_custom_call.1} parent=59 // pred_check
          %p446 = pneg %p70
        $region66: #{tpu_custom_call.1} parent=59 // pred_check_branch
          %448 = sbr.rel (%p446) target = $region68
        $region67: #{tpu_custom_call.1} parent=59 // pred_region
          %s449 = smul.u32 32, %s24
          %p450 = scmp.lt.s32.totalorder %s449, 63
          %s451 = scalar_select %p450, %s449, 63
          %s452 = smul.addr %s451, 4
          %s453 = scalar_lea.vmem %s1, %s452
          %s454 = smul.u32 32, %s24
        $region68: #{tpu_custom_call.1} parent=59 // pred_fallthru
          _
        // Predicated region
        $region69: #{tpu_custom_call.1} parent=59 // pred_check
          %p455 = pneg %p96
        $region70: #{tpu_custom_call.1} parent=59 // pred_check_branch
          %457 = sbr.rel (%p455) target = $region72
        $region71: #{tpu_custom_call.1} parent=59 // pred_region
          %s458 = smul.u32 32, %s24
          %p459 = scmp.lt.s32.totalorder %s458, 63
          %s460 = scalar_select %p459, %s458, 63
          %s461 = smul.addr %s460, 4
          %s462 = scalar_lea.vmem %s2, %s461
          %s463 = smul.u32 32, %s24
        $region72: #{tpu_custom_call.1} parent=59 // pred_fallthru
          _
        // Predicated region
        $region73: #{tpu_custom_call.1} parent=59 // pred_check
          %p464 = pneg %p122
        $region74: #{tpu_custom_call.1} parent=59 // pred_check_branch
          %466 = sbr.rel (%p464) target = $region76
        $region75: #{tpu_custom_call.1} parent=59 // pred_region
          %s467 = smul.u32 32, %s24
          %p468 = scmp.lt.s32.totalorder %s467, 63
          %s469 = scalar_select %p468, %s467, 63
          %s470 = smul.addr %s469, 4
          %s471 = scalar_lea.vmem %s3, %s470
          %s472 = smul.u32 32, %s24
        $region76: #{tpu_custom_call.1} parent=59 // pred_fallthru
          _
      $region60: #{tpu_custom_call.1} parent=5 // pred_fallthru
        _
      %p473 = scmp.le.s32.totalorder 1, %s24
      %p474 = scmp.lt.s32.totalorder %s24, 3
      %p475 = pnand %p473, %p474
      %p476 = pneg %p475
      // Predicated region
      $region77: #{tpu_custom_call.1} parent=5 // pred_check
        _
      $region78: #{tpu_custom_call.1} parent=5 // pred_check_branch
        %478 = sbr.rel (%p475) target = $region80
      $region79: #{tpu_custom_call.1} parent=5 // pred_region
        %s479 = ssub.s32 %s24, 1
        %s480 = smul.u32 32, %s29
        %p481 = scmp.lt.s32.totalorder %s480, 63
        %s482 = scalar_select %p481, %s480, 63
        %s483 = smul.addr %s482, 4
        %s484 = scalar_lea.vmem %s0, %s483
        %p485 = pneg %p50
        %p486 = pneg %p47
        %s487 = smul.u32 32, %s29
        %p488 = scmp.lt.s32.totalorder %s487, 63
        %s489 = scalar_select %p488, %s487, 63
        %s490 = smul.addr %s489, 4
        %s491 = scalar_lea.vmem %s1, %s490
        %p492 = pneg %p76
        %p493 = pneg %p73
        %s494 = smul.u32 32, %s29
        %p495 = scmp.lt.s32.totalorder %s494, 63
        %s496 = scalar_select %p495, %s494, 63
        %s497 = smul.addr %s496, 4
        %s498 = scalar_lea.vmem %s2, %s497
        %p499 = pneg %p102
        %p500 = pneg %p99
        %s501 = smul.u32 32, %s29
        %p502 = scmp.lt.s32.totalorder %s501, 63
        %s503 = scalar_select %p502, %s501, 63
        %s504 = smul.addr %s503, 4
        %s505 = scalar_lea.vmem %s3, %s504
        %p506 = pneg %p128
        %p507 = pneg %p125
        %p508 = pneg %p149
        %p509 = pneg %p146
        %p510 = pneg %p170
        %p511 = pneg %p167
        %p512 = pneg %p191
        %p513 = pneg %p188
        %p514 = pneg %p212
        %p515 = pneg %p209
        %p516 = pneg %p233
        %p517 = pneg %p230
        %p518 = pneg %p254
        %p519 = pneg %p251
        %p520 = pneg %p275
        %p521 = pneg %p272
        %p522 = pneg %p296
        %p523 = pneg %p293
        %p524 = pneg %p317
        %p525 = pneg %p314
        %p526 = pneg %p338
        %p527 = pneg %p335
        %p528 = pneg %p359
        %p529 = pneg %p356
        %p530 = pneg %p385
        %p531 = pneg %p382
        %s532 = sand.u32 %s372, 1
        %s533 = scalar_lea.sflag [#allocation3], %s532
        %s534 = sand.u32 %s372, 1
        %s535 = smul.addr %s534, 128
        %s536 = scalar_lea.vmem [#allocation2], %s535
        %s537 = smul.u32 32, %s29
        %p538 = scmp.lt.s32.totalorder %s537, 63
        %s539 = scalar_select %p538, %s537, 63
        %s540 = smul.addr %s539, 4
        %s541 = scalar_lea.vmem %s0, %s540
        %s542 = smul.u32 32, %s29
        %s543 = smul.u32 32, %s29
        %p544 = scmp.lt.s32.totalorder %s543, 63
        %s545 = scalar_select %p544, %s543, 63
        %s546 = smul.addr %s545, 4
        %s547 = scalar_lea.vmem %s1, %s546
        %s548 = smul.u32 32, %s29
        %s549 = smul.u32 32, %s29
        %p550 = scmp.lt.s32.totalorder %s549, 63
        %s551 = scalar_select %p550, %s549, 63
        %s552 = smul.addr %s551, 4
        %s553 = scalar_lea.vmem %s2, %s552
        %s554 = smul.u32 32, %s29
        %s555 = smul.u32 32, %s29
        %p556 = scmp.lt.s32.totalorder %s555, 63
        %s557 = scalar_select %p556, %s555, 63
        %s558 = smul.addr %s557, 4
        %s559 = scalar_lea.vmem %s3, %s558
        %s560 = smul.u32 32, %s29
        %s561 = smul.u32 32, %s29
        %v563 = vld [vmem:[%s541] sm:$0xf]
        %v564 = vld [vmem:[%s541 + $0x4] sm:$0xf]
        %v565 = vld [vmem:[%s541 + $0x8] sm:$0xf]
        %v566 = vld [vmem:[%s541 + $0xc] sm:$0xf]
        %v567 = vld [vmem:[%s541 + $0x10] sm:$0xf]
        %v568 = vld [vmem:[%s541 + $0x14] sm:$0xf]
        %v569 = vld [vmem:[%s541 + $0x18] sm:$0xf]
        %v570 = vld [vmem:[%s541 + $0x1c] sm:$0xf]
        %v571 = vld [vmem:[%s541 + $0x20] sm:$0xf]
        %v572 = vld [vmem:[%s541 + $0x24] sm:$0xf]
        %v573 = vld [vmem:[%s541 + $0x28] sm:$0xf]
        %v574 = vld [vmem:[%s541 + $0x2c] sm:$0xf]
        %v575 = vld [vmem:[%s541 + $0x30] sm:$0xf]
        %v576 = vld [vmem:[%s541 + $0x34] sm:$0xf]
        %v577 = vld [vmem:[%s541 + $0x38] sm:$0xf]
        %v578 = vld [vmem:[%s541 + $0x3c] sm:$0xf]
        %v579 = vld [vmem:[%s541 + $0x40] sm:$0xf]
        %v580 = vld [vmem:[%s541 + $0x44] sm:$0xf]
        %v581 = vld [vmem:[%s541 + $0x48] sm:$0xf]
        %v582 = vld [vmem:[%s541 + $0x4c] sm:$0xf]
        %v583 = vld [vmem:[%s541 + $0x50] sm:$0xf]
        %v584 = vld [vmem:[%s541 + $0x54] sm:$0xf]
        %v585 = vld [vmem:[%s541 + $0x58] sm:$0xf]
        %v586 = vld [vmem:[%s541 + $0x5c] sm:$0xf]
        %v587 = vld [vmem:[%s541 + $0x60] sm:$0xf]
        %v588 = vld [vmem:[%s541 + $0x64] sm:$0xf]
        %v589 = vld [vmem:[%s541 + $0x68] sm:$0xf]
        %v590 = vld [vmem:[%s541 + $0x6c] sm:$0xf]
        %v591 = vld [vmem:[%s541 + $0x70] sm:$0xf]
        %v592 = vld [vmem:[%s541 + $0x74] sm:$0xf]
        %v593 = vld [vmem:[%s541 + $0x78] sm:$0xf]
        %v594 = vld [vmem:[%s541 + $0x7c] sm:$0xf]
        %v595 = vld [vmem:[%s4] sm:$0xf]
        %v596 = vld [vmem:[%s4 + $0x4] sm:$0xf]
        %v597 = vld [vmem:[%s4 + $0x8] sm:$0xf]
        %v598 = vld [vmem:[%s4 + $0xc] sm:$0xf]
        %v599 = vld [vmem:[%s547] sm:$0xf]
        %v600 = vld [vmem:[%s547 + $0x4] sm:$0xf]
        %v601 = vld [vmem:[%s547 + $0x8] sm:$0xf]
        %v602 = vld [vmem:[%s547 + $0xc] sm:$0xf]
        %v603 = vld [vmem:[%s547 + $0x10] sm:$0xf]
        %v604 = vld [vmem:[%s547 + $0x14] sm:$0xf]
        %v605 = vld [vmem:[%s547 + $0x18] sm:$0xf]
        %v606 = vld [vmem:[%s547 + $0x1c] sm:$0xf]
        %v607 = vld [vmem:[%s547 + $0x20] sm:$0xf]
        %v608 = vld [vmem:[%s547 + $0x24] sm:$0xf]
        %v609 = vld [vmem:[%s547 + $0x28] sm:$0xf]
        %v610 = vld [vmem:[%s547 + $0x2c] sm:$0xf]
        %v611 = vld [vmem:[%s547 + $0x30] sm:$0xf]
        %v612 = vld [vmem:[%s547 + $0x34] sm:$0xf]
        %v613 = vld [vmem:[%s547 + $0x38] sm:$0xf]
        %v614 = vld [vmem:[%s547 + $0x3c] sm:$0xf]
        %v615 = vld [vmem:[%s547 + $0x40] sm:$0xf]
        %v616 = vld [vmem:[%s547 + $0x44] sm:$0xf]
        %v617 = vld [vmem:[%s547 + $0x48] sm:$0xf]
        %v618 = vld [vmem:[%s547 + $0x4c] sm:$0xf]
        %v619 = vld [vmem:[%s547 + $0x50] sm:$0xf]
        %v620 = vld [vmem:[%s547 + $0x54] sm:$0xf]
        %v621 = vld [vmem:[%s547 + $0x58] sm:$0xf]
        %v622 = vld [vmem:[%s547 + $0x5c] sm:$0xf]
        %v623 = vld [vmem:[%s547 + $0x60] sm:$0xf]
        %v624 = vld [vmem:[%s547 + $0x64] sm:$0xf]
        %v625 = vld [vmem:[%s547 + $0x68] sm:$0xf]
        %v626 = vld [vmem:[%s547 + $0x6c] sm:$0xf]
        %v627 = vld [vmem:[%s547 + $0x70] sm:$0xf]
        %v628 = vld [vmem:[%s547 + $0x74] sm:$0xf]
        %v629 = vld [vmem:[%s547 + $0x78] sm:$0xf]
        %v630 = vld [vmem:[%s547 + $0x7c] sm:$0xf]
        %v631 = vld [vmem:[%s5] sm:$0xf]
        %v664 = vunpack.c.l.b16 %v599
        %v665 = vunpack.c.l.b16 %v600
        %v666 = vunpack.c.l.b16 %v601
        %v667 = vunpack.c.l.b16 %v602
        %v668 = vunpack.c.l.b16 %v603
        %v669 = vunpack.c.l.b16 %v604
        %v670 = vunpack.c.l.b16 %v605
        %v671 = vunpack.c.l.b16 %v606
        %v672 = vunpack.c.l.b16 %v607
        %v673 = vunpack.c.l.b16 %v608
        %v674 = vunpack.c.l.b16 %v609
        %v675 = vunpack.c.l.b16 %v610
        %v676 = vunpack.c.l.b16 %v611
        %v677 = vunpack.c.l.b16 %v612
        %v678 = vunpack.c.l.b16 %v613
        %v679 = vunpack.c.l.b16 %v614
        %v680 = vunpack.c.l.b16 %v615
        %v681 = vunpack.c.l.b16 %v616
        %v682 = vunpack.c.l.b16 %v617
        %v683 = vunpack.c.l.b16 %v618
        %v684 = vunpack.c.l.b16 %v619
        %v685 = vunpack.c.l.b16 %v620
        %v686 = vunpack.c.l.b16 %v621
        %v687 = vunpack.c.l.b16 %v622
        %v688 = vunpack.c.l.b16 %v623
        %v689 = vunpack.c.l.b16 %v624
        %v690 = vunpack.c.l.b16 %v625
        %v691 = vunpack.c.l.b16 %v626
        %v692 = vunpack.c.l.b16 %v627
        %v693 = vunpack.c.l.b16 %v628
        %v694 = vunpack.c.l.b16 %v629
        %v695 = vunpack.c.l.b16 %v630
        %v696 = vpack.c.b16 %v665, %v664
        %v697 = vpack.c.b16 %v667, %v666
        %v698 = vpack.c.b16 %v669, %v668
        %v699 = vpack.c.b16 %v671, %v670
        %v700 = vpack.c.b16 %v673, %v672
        %v701 = vpack.c.b16 %v675, %v674
        %v702 = vpack.c.b16 %v677, %v676
        %v703 = vpack.c.b16 %v679, %v678
        %v704 = vpack.c.b16 %v681, %v680
        %v705 = vpack.c.b16 %v683, %v682
        %v706 = vpack.c.b16 %v685, %v684
        %v707 = vpack.c.b16 %v687, %v686
        %v708 = vpack.c.b16 %v689, %v688
        %v709 = vpack.c.b16 %v691, %v690
        %v710 = vpack.c.b16 %v693, %v692
        %v711 = vpack.c.b16 %v695, %v694
        %vm712 = vcmask 64512
        %v714 = vsel %vm712, %v696, 0
        %v717 = vsel %vm712, %v697, 0
        %v720 = vsel %vm712, %v698, 0
        %v723 = vsel %vm712, %v699, 0
        %v726 = vsel %vm712, %v700, 0
        %v729 = vsel %vm712, %v701, 0
        %v732 = vsel %vm712, %v702, 0
        %v735 = vsel %vm712, %v703, 0
        %v738 = vsel %vm712, %v704, 0
        %v741 = vsel %vm712, %v705, 0
        %v744 = vsel %vm712, %v706, 0
        %v747 = vsel %vm712, %v707, 0
        %v750 = vsel %vm712, %v708, 0
        %v753 = vsel %vm712, %v709, 0
        %v756 = vsel %vm712, %v710, 0
        %v759 = vsel %vm712, %v711, 0
        %vm761 = vcmask 1043456
        %v763 = vsel %vm761, %v631, 0
        %765 = vmatprep.subr.bf16.mxu0 0
        %766 = vmatpush1.bf16.msra.mxu0 %v763
        %767 = vmatprep.subr.bf16.mxu0 0
        %768 = vmatpush1.bf16.msra.mxu0 0
        %769 = vmatprep.subr.bf16.mxu0 0
        %770 = vmatpush1.bf16.msra.mxu0 0
        %771 = vmatprep.subr.bf16.mxu0 0
        %772 = vmatpush1.bf16.msra.mxu0 0
        %773 = vmatprep.subr.bf16.mxu0 0
        %774 = vmatpush1.bf16.msra.mxu0 0
        %775 = vmatprep.subr.bf16.mxu0 0
        %776 = vmatpush1.bf16.msra.mxu0 0
        %777 = vmatprep.subr.bf16.mxu0 0
        %778 = vmatpush1.bf16.msra.mxu0 0
        %779 = vmatprep.subr.bf16.mxu0 0
        %780 = vmatpush1.bf16.msra.mxu0 0
        %781 = vmatprep.subr.bf16.mxu0 0
        %782 = vmatpush1.bf16.msra.mxu0 0
        %783 = vmatprep.subr.bf16.mxu0 0
        %784 = vmatpush1.bf16.msra.mxu0 0
        %785 = vmatprep.subr.bf16.mxu0 0
        %786 = vmatpush1.bf16.msra.mxu0 0
        %787 = vmatprep.subr.bf16.mxu0 0
        %788 = vmatpush1.bf16.msra.mxu0 0
        %789 = vmatprep.subr.bf16.mxu0 0
        %790 = vmatpush1.bf16.msra.mxu0 0
        %791 = vmatprep.subr.bf16.mxu0 0
        %792 = vmatpush1.bf16.msra.mxu0 0
        %793 = vmatprep.subr.bf16.mxu0 0
        %794 = vmatpush1.bf16.msra.mxu0 0
        %795 = vmatprep.subr.bf16.mxu0 0
        %796 = vmatpush1.bf16.msra.mxu0 0
        %797 = vmatprep.mubr.bf16.mxu0 0
        %798 = vmatmul.mubr.bf16.gmra.mrb[0].mxu0 %v714
        %v799 = vpop.f32.mrb[0].mxu0
        %v800 = vadd.f32 0.0, %v799
        %v801 = vpop.f32.mrb[0].mxu0
        %v802 = vpop.f32.mrb[0].mxu0
        %v803 = vadd.f32 0.0, %v802
        %v804 = vpop.f32.mrb[0].mxu0
        %805 = vmatprep.mubr.bf16.mxu0 0
        %806 = vmatmul.mubr.bf16.gmra.mrb[0].mxu0 %v717
        %v807 = vpop.f32.mrb[0].mxu0
        %v808 = vadd.f32 0.0, %v807
        %v809 = vpop.f32.mrb[0].mxu0
        %v810 = vpop.f32.mrb[0].mxu0
        %v811 = vadd.f32 0.0, %v810
        %v812 = vpop.f32.mrb[0].mxu0
        %813 = vmatprep.mubr.bf16.mxu0 0
        %814 = vmatmul.mubr.bf16.gmra.mrb[0].mxu0 %v720
        %v815 = vpop.f32.mrb[0].mxu0
        %v816 = vadd.f32 0.0, %v815
        %v817 = vpop.f32.mrb[0].mxu0
        %v818 = vpop.f32.mrb[0].mxu0
        %v819 = vadd.f32 0.0, %v818
        %v820 = vpop.f32.mrb[0].mxu0
        %821 = vmatprep.mubr.bf16.mxu0 0
        %822 = vmatmul.mubr.bf16.gmra.mrb[0].mxu0 %v723
        %v823 = vpop.f32.mrb[0].mxu0
        %v824 = vadd.f32 0.0, %v823
        %v825 = vpop.f32.mrb[0].mxu0
        %v826 = vpop.f32.mrb[0].mxu0
        %v827 = vadd.f32 0.0, %v826
        %v828 = vpop.f32.mrb[0].mxu0
        %829 = vmatprep.mubr.bf16.mxu0 0
        %830 = vmatmul.mubr.bf16.gmra.mrb[0].mxu0 %v726
        %v831 = vpop.f32.mrb[0].mxu0
        %v832 = vadd.f32 0.0, %v831
        %v833 = vpop.f32.mrb[0].mxu0
        %v834 = vpop.f32.mrb[0].mxu0
        %v835 = vadd.f32 0.0, %v834
        %v836 = vpop.f32.mrb[0].mxu0
        %837 = vmatprep.mubr.bf16.mxu0 0
        %838 = vmatmul.mubr.bf16.gmra.mrb[0].mxu0 %v729
        %v839 = vpop.f32.mrb[0].mxu0
        %v840 = vadd.f32 0.0, %v839
        %v841 = vpop.f32.mrb[0].mxu0
        %v842 = vpop.f32.mrb[0].mxu0
        %v843 = vadd.f32 0.0, %v842
        %v844 = vpop.f32.mrb[0].mxu0
        %845 = vmatprep.mubr.bf16.mxu0 0
        %846 = vmatmul.mubr.bf16.gmra.mrb[0].mxu0 %v732
        %v847 = vpop.f32.mrb[0].mxu0
        %v848 = vadd.f32 0.0, %v847
        %v849 = vpop.f32.mrb[0].mxu0
        %v850 = vpop.f32.mrb[0].mxu0
        %v851 = vadd.f32 0.0, %v850
        %v852 = vpop.f32.mrb[0].mxu0
        %853 = vmatprep.mubr.bf16.mxu0 0
        %854 = vmatmul.mubr.bf16.gmra.mrb[0].mxu0 %v735
        %v855 = vpop.f32.mrb[0].mxu0
        %v856 = vadd.f32 0.0, %v855
        %v857 = vpop.f32.mrb[0].mxu0
        %v858 = vpop.f32.mrb[0].mxu0
        %v859 = vadd.f32 0.0, %v858
        %v860 = vpop.f32.mrb[0].mxu0
        %861 = vmatprep.mubr.bf16.mxu0 0
        %862 = vmatmul.mubr.bf16.gmra.mrb[0].mxu0 %v738
        %v863 = vpop.f32.mrb[0].mxu0
        %v864 = vadd.f32 0.0, %v863
        %v865 = vpop.f32.mrb[0].mxu0
        %v866 = vpop.f32.mrb[0].mxu0
        %v867 = vadd.f32 0.0, %v866
        %v868 = vpop.f32.mrb[0].mxu0
        %869 = vmatprep.mubr.bf16.mxu0 0
        %870 = vmatmul.mubr.bf16.gmra.mrb[0].mxu0 %v741
        %v871 = vpop.f32.mrb[0].mxu0
        %v872 = vadd.f32 0.0, %v871
        %v873 = vpop.f32.mrb[0].mxu0
        %v874 = vpop.f32.mrb[0].mxu0
        %v875 = vadd.f32 0.0, %v874
        %v876 = vpop.f32.mrb[0].mxu0
        %877 = vmatprep.mubr.bf16.mxu0 0
        %878 = vmatmul.mubr.bf16.gmra.mrb[0].mxu0 %v744
        %v879 = vpop.f32.mrb[0].mxu0
        %v880 = vadd.f32 0.0, %v879
        %v881 = vpop.f32.mrb[0].mxu0
        %v882 = vpop.f32.mrb[0].mxu0
        %v883 = vadd.f32 0.0, %v882
        %v884 = vpop.f32.mrb[0].mxu0
        %885 = vmatprep.mubr.bf16.mxu0 0
        %886 = vmatmul.mubr.bf16.gmra.mrb[0].mxu0 %v747
        %v887 = vpop.f32.mrb[0].mxu0
        %v888 = vadd.f32 0.0, %v887
        %v889 = vpop.f32.mrb[0].mxu0
        %v890 = vpop.f32.mrb[0].mxu0
        %v891 = vadd.f32 0.0, %v890
        %v892 = vpop.f32.mrb[0].mxu0
        %893 = vmatprep.mubr.bf16.mxu0 0
        %894 = vmatmul.mubr.bf16.gmra.mrb[0].mxu0 %v750
        %v895 = vpop.f32.mrb[0].mxu0
        %v896 = vadd.f32 0.0, %v895
        %v897 = vpop.f32.mrb[0].mxu0
        %v898 = vpop.f32.mrb[0].mxu0
        %v899 = vadd.f32 0.0, %v898
        %v900 = vpop.f32.mrb[0].mxu0
        %901 = vmatprep.mubr.bf16.mxu0 0
        %902 = vmatmul.mubr.bf16.gmra.mrb[0].mxu0 %v753
        %v903 = vpop.f32.mrb[0].mxu0
        %v904 = vadd.f32 0.0, %v903
        %v905 = vpop.f32.mrb[0].mxu0
        %v906 = vpop.f32.mrb[0].mxu0
        %v907 = vadd.f32 0.0, %v906
        %v908 = vpop.f32.mrb[0].mxu0
        %909 = vmatprep.mubr.bf16.mxu0 0
        %910 = vmatmul.mubr.bf16.gmra.mrb[0].mxu0 %v756
        %v911 = vpop.f32.mrb[0].mxu0
        %v912 = vadd.f32 0.0, %v911
        %v913 = vpop.f32.mrb[0].mxu0
        %v914 = vpop.f32.mrb[0].mxu0
        %v915 = vadd.f32 0.0, %v914
        %v916 = vpop.f32.mrb[0].mxu0
        %917 = vmatprep.mubr.bf16.mxu0 0
        %918 = vmatmul.mubr.bf16.gmra.mrb[0].mxu0 %v759
        %v919 = vpop.f32.mrb[0].mxu0
        %v920 = vadd.f32 0.0, %v919
        %v921 = vpop.f32.mrb[0].mxu0
        %v922 = vpop.f32.mrb[0].mxu0
        %v923 = vadd.f32 0.0, %v922
        %v924 = vpop.f32.mrb[0].mxu0
        %925 = vdwg.mxu0
        %v958 = vunpack.c.l.b16 %v563
        %v959 = vunpack.c.l.b16 %v564
        %v960 = vunpack.c.l.b16 %v565
        %v961 = vunpack.c.l.b16 %v566
        %v962 = vunpack.c.l.b16 %v567
        %v963 = vunpack.c.l.b16 %v568
        %v964 = vunpack.c.l.b16 %v569
        %v965 = vunpack.c.l.b16 %v570
        %v966 = vunpack.c.l.b16 %v571
        %v967 = vunpack.c.l.b16 %v572
        %v968 = vunpack.c.l.b16 %v573
        %v969 = vunpack.c.l.b16 %v574
        %v970 = vunpack.c.l.b16 %v575
        %v971 = vunpack.c.l.b16 %v576
        %v972 = vunpack.c.l.b16 %v577
        %v973 = vunpack.c.l.b16 %v578
        %v974 = vunpack.c.l.b16 %v579
        %v975 = vunpack.c.l.b16 %v580
        %v976 = vunpack.c.l.b16 %v581
        %v977 = vunpack.c.l.b16 %v582
        %v978 = vunpack.c.l.b16 %v583
        %v979 = vunpack.c.l.b16 %v584
        %v980 = vunpack.c.l.b16 %v585
        %v981 = vunpack.c.l.b16 %v586
        %v982 = vunpack.c.l.b16 %v587
        %v983 = vunpack.c.l.b16 %v588
        %v984 = vunpack.c.l.b16 %v589
        %v985 = vunpack.c.l.b16 %v590
        %v986 = vunpack.c.l.b16 %v591
        %v987 = vunpack.c.l.b16 %v592
        %v988 = vunpack.c.l.b16 %v593
        %v989 = vunpack.c.l.b16 %v594
        %v990 = vpack.c.b16 %v959, %v958
        %v991 = vpack.c.b16 %v961, %v960
        %v992 = vpack.c.b16 %v963, %v962
        %v993 = vpack.c.b16 %v965, %v964
        %v994 = vpack.c.b16 %v967, %v966
        %v995 = vpack.c.b16 %v969, %v968
        %v996 = vpack.c.b16 %v971, %v970
        %v997 = vpack.c.b16 %v973, %v972
        %v998 = vpack.c.b16 %v975, %v974
        %v999 = vpack.c.b16 %v977, %v976
        %v1000 = vpack.c.b16 %v979, %v978
        %v1001 = vpack.c.b16 %v981, %v980
        %v1002 = vpack.c.b16 %v983, %v982
        %v1003 = vpack.c.b16 %v985, %v984
        %v1004 = vpack.c.b16 %v987, %v986
        %v1005 = vpack.c.b16 %v989, %v988
        %v1010 = vunpack.c.l.b16 %v595
        %v1011 = vunpack.c.l.b16 %v596
        %v1012 = vunpack.c.l.b16 %v597
        %v1013 = vunpack.c.l.b16 %v598
        %v1014 = vpack.c.b16 %v1011, %v1010
        %v1015 = vpack.c.b16 %v1013, %v1012
        %vm1018 = vcmask 261120
        %v1020 = vsel %vm1018, %v990, 0
        %v1023 = vsel %vm1018, %v991, 0
        %v1026 = vsel %vm1018, %v992, 0
        %v1029 = vsel %vm1018, %v993, 0
        %v1032 = vsel %vm1018, %v994, 0
        %v1035 = vsel %vm1018, %v995, 0
        %v1038 = vsel %vm1018, %v996, 0
        %v1041 = vsel %vm1018, %v997, 0
        %v1044 = vsel %vm1018, %v998, 0
        %v1047 = vsel %vm1018, %v999, 0
        %v1050 = vsel %vm1018, %v1000, 0
        %v1053 = vsel %vm1018, %v1001, 0
        %v1056 = vsel %vm1018, %v1002, 0
        %v1059 = vsel %vm1018, %v1003, 0
        %v1062 = vsel %vm1018, %v1004, 0
        %v1065 = vsel %vm1018, %v1005, 0
        %1067 = vmatprep.subr.bf16.mxu0 0
        %1068 = vmatpush1.bf16.msra.mxu0 %v1014
        %1069 = vmatprep.subr.bf16.mxu0 0
        %1070 = vmatpush1.bf16.msra.mxu0 %v1015
        %1071 = vmatprep.subr.bf16.mxu0 0
        %1072 = vmatpush1.bf16.msra.mxu0 0
        %1073 = vmatprep.subr.bf16.mxu0 0
        %1074 = vmatpush1.bf16.msra.mxu0 0
        %1075 = vmatprep.subr.bf16.mxu0 0
        %1076 = vmatpush1.bf16.msra.mxu0 0
        %1077 = vmatprep.subr.bf16.mxu0 0
        %1078 = vmatpush1.bf16.msra.mxu0 0
        %1079 = vmatprep.subr.bf16.mxu0 0
        %1080 = vmatpush1.bf16.msra.mxu0 0
        %1081 = vmatprep.subr.bf16.mxu0 0
        %1082 = vmatpush1.bf16.msra.mxu0 0
        %1083 = vmatprep.subr.bf16.mxu0 0
        %1084 = vmatpush1.bf16.msra.mxu0 0
        %1085 = vmatprep.subr.bf16.mxu0 0
        %1086 = vmatpush1.bf16.msra.mxu0 0
        %1087 = vmatprep.subr.bf16.mxu0 0
        %1088 = vmatpush1.bf16.msra.mxu0 0
        %1089 = vmatprep.subr.bf16.mxu0 0
        %1090 = vmatpush1.bf16.msra.mxu0 0
        %1091 = vmatprep.subr.bf16.mxu0 0
        %1092 = vmatpush1.bf16.msra.mxu0 0
        %1093 = vmatprep.subr.bf16.mxu0 0
        %1094 = vmatpush1.bf16.msra.mxu0 0
        %1095 = vmatprep.subr.bf16.mxu0 0
        %1096 = vmatpush1.bf16.msra.mxu0 0
        %1097 = vmatprep.subr.bf16.mxu0 0
        %1098 = vmatpush1.bf16.msra.mxu0 0
        %1099 = vmatprep.mubr.bf16.mxu0 0
        %1100 = vmatmul.mubr.bf16.gmra.mrb[0].mxu0 %v1020
        %v1101 = vpop.f32.mrb[0].mxu0
        %v1102 = vadd.f32 %v800, %v1101
        %v1103 = vpop.f32.mrb[0].mxu0
        %v1104 = vpop.f32.mrb[0].mxu0
        %v1105 = vadd.f32 %v803, %v1104
        %v1106 = vpop.f32.mrb[0].mxu0
        %1107 = vmatprep.mubr.bf16.mxu0 0
        %1108 = vmatmul.mubr.bf16.gmra.mrb[0].mxu0 %v1023
        %v1109 = vpop.f32.mrb[0].mxu0
        %v1110 = vadd.f32 %v808, %v1109
        %v1111 = vpop.f32.mrb[0].mxu0
        %v1112 = vpop.f32.mrb[0].mxu0
        %v1113 = vadd.f32 %v811, %v1112
        %v1114 = vpop.f32.mrb[0].mxu0
        %1115 = vmatprep.mubr.bf16.mxu0 0
        %1116 = vmatmul.mubr.bf16.gmra.mrb[0].mxu0 %v1026
        %v1117 = vpop.f32.mrb[0].mxu0
        %v1118 = vadd.f32 %v816, %v1117
        %v1119 = vpop.f32.mrb[0].mxu0
        %v1120 = vpop.f32.mrb[0].mxu0
        %v1121 = vadd.f32 %v819, %v1120
        %v1122 = vpop.f32.mrb[0].mxu0
        %1123 = vmatprep.mubr.bf16.mxu0 0
        %1124 = vmatmul.mubr.bf16.gmra.mrb[0].mxu0 %v1029
        %v1125 = vpop.f32.mrb[0].mxu0
        %v1126 = vadd.f32 %v824, %v1125
        %v1127 = vpop.f32.mrb[0].mxu0
        %v1128 = vpop.f32.mrb[0].mxu0
        %v1129 = vadd.f32 %v827, %v1128
        %v1130 = vpop.f32.mrb[0].mxu0
        %1131 = vmatprep.mubr.bf16.mxu0 0
        %1132 = vmatmul.mubr.bf16.gmra.mrb[0].mxu0 %v1032
        %v1133 = vpop.f32.mrb[0].mxu0
        %v1134 = vadd.f32 %v832, %v1133
        %v1135 = vpop.f32.mrb[0].mxu0
        %v1136 = vpop.f32.mrb[0].mxu0
        %v1137 = vadd.f32 %v835, %v1136
        %v1138 = vpop.f32.mrb[0].mxu0
        %1139 = vmatprep.mubr.bf16.mxu0 0
        %1140 = vmatmul.mubr.bf16.gmra.mrb[0].mxu0 %v1035
        %v1141 = vpop.f32.mrb[0].mxu0
        %v1142 = vadd.f32 %v840, %v1141
        %v1143 = vpop.f32.mrb[0].mxu0
        %v1144 = vpop.f32.mrb[0].mxu0
        %v1145 = vadd.f32 %v843, %v1144
        %v1146 = vpop.f32.mrb[0].mxu0
        %1147 = vmatprep.mubr.bf16.mxu0 0
        %1148 = vmatmul.mubr.bf16.gmra.mrb[0].mxu0 %v1038
        %v1149 = vpop.f32.mrb[0].mxu0
        %v1150 = vadd.f32 %v848, %v1149
        %v1151 = vpop.f32.mrb[0].mxu0
        %v1152 = vpop.f32.mrb[0].mxu0
        %v1153 = vadd.f32 %v851, %v1152
        %v1154 = vpop.f32.mrb[0].mxu0
        %1155 = vmatprep.mubr.bf16.mxu0 0
        %1156 = vmatmul.mubr.bf16.gmra.mrb[0].mxu0 %v1041
        %v1157 = vpop.f32.mrb[0].mxu0
        %v1158 = vadd.f32 %v856, %v1157
        %v1159 = vpop.f32.mrb[0].mxu0
        %v1160 = vpop.f32.mrb[0].mxu0
        %v1161 = vadd.f32 %v859, %v1160
        %v1162 = vpop.f32.mrb[0].mxu0
        %1163 = vmatprep.mubr.bf16.mxu0 0
        %1164 = vmatmul.mubr.bf16.gmra.mrb[0].mxu0 %v1044
        %v1165 = vpop.f32.mrb[0].mxu0
        %v1166 = vadd.f32 %v864, %v1165
        %v1167 = vpop.f32.mrb[0].mxu0
        %v1168 = vpop.f32.mrb[0].mxu0
        %v1169 = vadd.f32 %v867, %v1168
        %v1170 = vpop.f32.mrb[0].mxu0
        %1171 = vmatprep.mubr.bf16.mxu0 0
        %1172 = vmatmul.mubr.bf16.gmra.mrb[0].mxu0 %v1047
        %v1173 = vpop.f32.mrb[0].mxu0
        %v1174 = vadd.f32 %v872, %v1173
        %v1175 = vpop.f32.mrb[0].mxu0
        %v1176 = vpop.f32.mrb[0].mxu0
        %v1177 = vadd.f32 %v875, %v1176
        %v1178 = vpop.f32.mrb[0].mxu0
        %1179 = vmatprep.mubr.bf16.mxu0 0
        %1180 = vmatmul.mubr.bf16.gmra.mrb[0].mxu0 %v1050
        %v1181 = vpop.f32.mrb[0].mxu0
        %v1182 = vadd.f32 %v880, %v1181
        %v1183 = vpop.f32.mrb[0].mxu0
        %v1184 = vpop.f32.mrb[0].mxu0
        %v1185 = vadd.f32 %v883, %v1184
        %v1186 = vpop.f32.mrb[0].mxu0
        %1187 = vmatprep.mubr.bf16.mxu0 0
        %1188 = vmatmul.mubr.bf16.gmra.mrb[0].mxu0 %v1053
        %v1189 = vpop.f32.mrb[0].mxu0
        %v1190 = vadd.f32 %v888, %v1189
        %v1191 = vpop.f32.mrb[0].mxu0
        %v1192 = vpop.f32.mrb[0].mxu0
        %v1193 = vadd.f32 %v891, %v1192
        %v1194 = vpop.f32.mrb[0].mxu0
        %1195 = vmatprep.mubr.bf16.mxu0 0
        %1196 = vmatmul.mubr.bf16.gmra.mrb[0].mxu0 %v1056
        %v1197 = vpop.f32.mrb[0].mxu0
        %v1198 = vadd.f32 %v896, %v1197
        %v1199 = vpop.f32.mrb[0].mxu0
        %v1200 = vpop.f32.mrb[0].mxu0
        %v1201 = vadd.f32 %v899, %v1200
        %v1202 = vpop.f32.mrb[0].mxu0
        %1203 = vmatprep.mubr.bf16.mxu0 0
        %1204 = vmatmul.mubr.bf16.gmra.mrb[0].mxu0 %v1059
        %v1205 = vpop.f32.mrb[0].mxu0
        %v1206 = vadd.f32 %v904, %v1205
        %v1207 = vpop.f32.mrb[0].mxu0
        %v1208 = vpop.f32.mrb[0].mxu0
        %v1209 = vadd.f32 %v907, %v1208
        %v1210 = vpop.f32.mrb[0].mxu0
        %1211 = vmatprep.mubr.bf16.mxu0 0
        %1212 = vmatmul.mubr.bf16.gmra.mrb[0].mxu0 %v1062
        %v1213 = vpop.f32.mrb[0].mxu0
        %v1214 = vadd.f32 %v912, %v1213
        %v1215 = vpop.f32.mrb[0].mxu0
        %v1216 = vpop.f32.mrb[0].mxu0
        %v1217 = vadd.f32 %v915, %v1216
        %v1218 = vpop.f32.mrb[0].mxu0
        %1219 = vmatprep.mubr.bf16.mxu0 0
        %1220 = vmatmul.mubr.bf16.gmra.mrb[0].mxu0 %v1065
        %v1221 = vpop.f32.mrb[0].mxu0
        %v1222 = vadd.f32 %v920, %v1221
        %v1223 = vpop.f32.mrb[0].mxu0
        %v1224 = vpop.f32.mrb[0].mxu0
        %v1225 = vadd.f32 %v923, %v1224
        %v1226 = vpop.f32.mrb[0].mxu0
        %1227 = vdwg.mxu0
        %v1228 = vmax.f32 %v1102, 0.0
        %v1229 = vmax.f32 %v1105, 0.0
        %v1230 = vmax.f32 %v1110, 0.0
        %v1231 = vmax.f32 %v1113, 0.0
        %v1232 = vmax.f32 %v1118, 0.0
        %v1233 = vmax.f32 %v1121, 0.0
        %v1234 = vmax.f32 %v1126, 0.0
        %v1235 = vmax.f32 %v1129, 0.0
        %v1236 = vmax.f32 %v1134, 0.0
        %v1237 = vmax.f32 %v1137, 0.0
        %v1238 = vmax.f32 %v1142, 0.0
        %v1239 = vmax.f32 %v1145, 0.0
        %v1240 = vmax.f32 %v1150, 0.0
        %v1241 = vmax.f32 %v1153, 0.0
        %v1242 = vmax.f32 %v1158, 0.0
        %v1243 = vmax.f32 %v1161, 0.0
        %v1244 = vmax.f32 %v1166, 0.0
        %v1245 = vmax.f32 %v1169, 0.0
        %v1246 = vmax.f32 %v1174, 0.0
        %v1247 = vmax.f32 %v1177, 0.0
        %v1248 = vmax.f32 %v1182, 0.0
        %v1249 = vmax.f32 %v1185, 0.0
        %v1250 = vmax.f32 %v1190, 0.0
        %v1251 = vmax.f32 %v1193, 0.0
        %v1252 = vmax.f32 %v1198, 0.0
        %v1253 = vmax.f32 %v1201, 0.0
        %v1254 = vmax.f32 %v1206, 0.0
        %v1255 = vmax.f32 %v1209, 0.0
        %v1256 = vmax.f32 %v1214, 0.0
        %v1257 = vmax.f32 %v1217, 0.0
        %v1258 = vmax.f32 %v1222, 0.0
        %v1259 = vmax.f32 %v1225, 0.0
        %v1260 = vpack.c.bf16 %v1229, %v1228
        %v1261 = vpack.c.bf16 %v1231, %v1230
        %v1262 = vpack.c.bf16 %v1233, %v1232
        %v1263 = vpack.c.bf16 %v1235, %v1234
        %v1264 = vpack.c.bf16 %v1237, %v1236
        %v1265 = vpack.c.bf16 %v1239, %v1238
        %v1266 = vpack.c.bf16 %v1241, %v1240
        %v1267 = vpack.c.bf16 %v1243, %v1242
        %v1268 = vpack.c.bf16 %v1245, %v1244
        %v1269 = vpack.c.bf16 %v1247, %v1246
        %v1270 = vpack.c.bf16 %v1249, %v1248
        %v1271 = vpack.c.bf16 %v1251, %v1250
        %v1272 = vpack.c.bf16 %v1253, %v1252
        %v1273 = vpack.c.bf16 %v1255, %v1254
        %v1274 = vpack.c.bf16 %v1257, %v1256
        %v1275 = vpack.c.bf16 %v1259, %v1258
        %v1276 = vld [vmem:[%s6] sm:$0xf]
        %v1277 = vld [vmem:[%s6 + $0x4] sm:$0xf]
        %v1278 = vld [vmem:[%s6 + $0x8] sm:$0xf]
        %v1279 = vld [vmem:[%s6 + $0xc] sm:$0xf]
        %v1280 = vld [vmem:[%s7] sm:$0x1]
        %v1282 = vlaneseq
        %v1283 = vshrl.u32 %v1282, 7
        %v1284 = vsub.s32 0, %v1283
        %v1285 = vrot.slane %v1280, %v1284
        %v1291 = vunpack.c.l.b16 %v1276
        %v1292 = vunpack.c.l.b16 %v1277
        %v1293 = vunpack.c.l.b16 %v1278
        %v1294 = vunpack.c.l.b16 %v1279
        %v1295 = vpack.c.b16 %v1292, %v1291
        %v1296 = vpack.c.b16 %v1294, %v1293
        %v1300 = vsel %vm1018, %v1260, 0
        %v1303 = vsel %vm1018, %v1261, 0
        %v1306 = vsel %vm1018, %v1262, 0
        %v1309 = vsel %vm1018, %v1263, 0
        %v1312 = vsel %vm1018, %v1264, 0
        %v1315 = vsel %vm1018, %v1265, 0
        %v1318 = vsel %vm1018, %v1266, 0
        %v1321 = vsel %vm1018, %v1267, 0
        %v1324 = vsel %vm1018, %v1268, 0
        %v1327 = vsel %vm1018, %v1269, 0
        %v1330 = vsel %vm1018, %v1270, 0
        %v1333 = vsel %vm1018, %v1271, 0
        %v1336 = vsel %vm1018, %v1272, 0
        %v1339 = vsel %vm1018, %v1273, 0
        %v1342 = vsel %vm1018, %v1274, 0
        %v1345 = vsel %vm1018, %v1275, 0
        %1347 = vmatprep.subr.bf16.mxu0 0
        %1348 = vmatpush1.bf16.msra.mxu0 %v1295
        %1349 = vmatprep.subr.bf16.mxu0 0
        %1350 = vmatpush1.bf16.msra.mxu0 %v1296
        %1351 = vmatprep.subr.bf16.mxu0 0
        %1352 = vmatpush1.bf16.msra.mxu0 0
        %1353 = vmatprep.subr.bf16.mxu0 0
        %1354 = vmatpush1.bf16.msra.mxu0 0
        %1355 = vmatprep.subr.bf16.mxu0 0
        %1356 = vmatpush1.bf16.msra.mxu0 0
        %1357 = vmatprep.subr.bf16.mxu0 0
        %1358 = vmatpush1.bf16.msra.mxu0 0
        %1359 = vmatprep.subr.bf16.mxu0 0
        %1360 = vmatpush1.bf16.msra.mxu0 0
        %1361 = vmatprep.subr.bf16.mxu0 0
        %1362 = vmatpush1.bf16.msra.mxu0 0
        %1363 = vmatprep.subr.bf16.mxu0 0
        %1364 = vmatpush1.bf16.msra.mxu0 0
        %1365 = vmatprep.subr.bf16.mxu0 0
        %1366 = vmatpush1.bf16.msra.mxu0 0
        %1367 = vmatprep.subr.bf16.mxu0 0
        %1368 = vmatpush1.bf16.msra.mxu0 0
        %1369 = vmatprep.subr.bf16.mxu0 0
        %1370 = vmatpush1.bf16.msra.mxu0 0
        %1371 = vmatprep.subr.bf16.mxu0 0
        %1372 = vmatpush1.bf16.msra.mxu0 0
        %1373 = vmatprep.subr.bf16.mxu0 0
        %1374 = vmatpush1.bf16.msra.mxu0 0
        %1375 = vmatprep.subr.bf16.mxu0 0
        %1376 = vmatpush1.bf16.msra.mxu0 0
        %1377 = vmatprep.subr.bf16.mxu0 0
        %1378 = vmatpush1.bf16.msra.mxu0 0
        %1379 = vmatprep.mubr.bf16.mxu0 0
        %1380 = vmatmul.mubr.bf16.gmra.mrb[0].mxu0 %v1300
        %v1381 = vpop.f32.mrb[0].mxu0
        %v1382 = vadd.f32 %v1285, %v1381
        %v1383 = vpop.f32.mrb[0].mxu0
        %v1384 = vpop.f32.mrb[0].mxu0
        %v1385 = vadd.f32 %v1285, %v1384
        %v1386 = vpop.f32.mrb[0].mxu0
        %1387 = vmatprep.mubr.bf16.mxu0 0
        %1388 = vmatmul.mubr.bf16.gmra.mrb[0].mxu0 %v1303
        %v1389 = vpop.f32.mrb[0].mxu0
        %v1390 = vadd.f32 %v1285, %v1389
        %v1391 = vpop.f32.mrb[0].mxu0
        %v1392 = vpop.f32.mrb[0].mxu0
        %v1393 = vadd.f32 %v1285, %v1392
        %v1394 = vpop.f32.mrb[0].mxu0
        %1395 = vmatprep.mubr.bf16.mxu0 0
        %1396 = vmatmul.mubr.bf16.gmra.mrb[0].mxu0 %v1306
        %v1397 = vpop.f32.mrb[0].mxu0
        %v1398 = vadd.f32 %v1285, %v1397
        %v1399 = vpop.f32.mrb[0].mxu0
        %v1400 = vpop.f32.mrb[0].mxu0
        %v1401 = vadd.f32 %v1285, %v1400
        %v1402 = vpop.f32.mrb[0].mxu0
        %1403 = vmatprep.mubr.bf16.mxu0 0
        %1404 = vmatmul.mubr.bf16.gmra.mrb[0].mxu0 %v1309
        %v1405 = vpop.f32.mrb[0].mxu0
        %v1406 = vadd.f32 %v1285, %v1405
        %v1407 = vpop.f32.mrb[0].mxu0
        %v1408 = vpop.f32.mrb[0].mxu0
        %v1409 = vadd.f32 %v1285, %v1408
        %v1410 = vpop.f32.mrb[0].mxu0
        %1411 = vmatprep.mubr.bf16.mxu0 0
        %1412 = vmatmul.mubr.bf16.gmra.mrb[0].mxu0 %v1312
        %v1413 = vpop.f32.mrb[0].mxu0
        %v1414 = vadd.f32 %v1285, %v1413
        %v1415 = vpop.f32.mrb[0].mxu0
        %v1416 = vpop.f32.mrb[0].mxu0
        %v1417 = vadd.f32 %v1285, %v1416
        %v1418 = vpop.f32.mrb[0].mxu0
        %1419 = vmatprep.mubr.bf16.mxu0 0
        %1420 = vmatmul.mubr.bf16.gmra.mrb[0].mxu0 %v1315
        %v1421 = vpop.f32.mrb[0].mxu0
        %v1422 = vadd.f32 %v1285, %v1421
        %v1423 = vpop.f32.mrb[0].mxu0
        %v1424 = vpop.f32.mrb[0].mxu0
        %v1425 = vadd.f32 %v1285, %v1424
        %v1426 = vpop.f32.mrb[0].mxu0
        %1427 = vmatprep.mubr.bf16.mxu0 0
        %1428 = vmatmul.mubr.bf16.gmra.mrb[0].mxu0 %v1318
        %v1429 = vpop.f32.mrb[0].mxu0
        %v1430 = vadd.f32 %v1285, %v1429
        %v1431 = vpop.f32.mrb[0].mxu0
        %v1432 = vpop.f32.mrb[0].mxu0
        %v1433 = vadd.f32 %v1285, %v1432
        %v1434 = vpop.f32.mrb[0].mxu0
        %1435 = vmatprep.mubr.bf16.mxu0 0
        %1436 = vmatmul.mubr.bf16.gmra.mrb[0].mxu0 %v1321
        %v1437 = vpop.f32.mrb[0].mxu0
        %v1438 = vadd.f32 %v1285, %v1437
        %v1439 = vpop.f32.mrb[0].mxu0
        %v1440 = vpop.f32.mrb[0].mxu0
        %v1441 = vadd.f32 %v1285, %v1440
        %v1442 = vpop.f32.mrb[0].mxu0
        %1443 = vmatprep.mubr.bf16.mxu0 0
        %1444 = vmatmul.mubr.bf16.gmra.mrb[0].mxu0 %v1324
        %v1445 = vpop.f32.mrb[0].mxu0
        %v1446 = vadd.f32 %v1285, %v1445
        %v1447 = vpop.f32.mrb[0].mxu0
        %v1448 = vpop.f32.mrb[0].mxu0
        %v1449 = vadd.f32 %v1285, %v1448
        %v1450 = vpop.f32.mrb[0].mxu0
        %1451 = vmatprep.mubr.bf16.mxu0 0
        %1452 = vmatmul.mubr.bf16.gmra.mrb[0].mxu0 %v1327
        %v1453 = vpop.f32.mrb[0].mxu0
        %v1454 = vadd.f32 %v1285, %v1453
        %v1455 = vpop.f32.mrb[0].mxu0
        %v1456 = vpop.f32.mrb[0].mxu0
        %v1457 = vadd.f32 %v1285, %v1456
        %v1458 = vpop.f32.mrb[0].mxu0
        %1459 = vmatprep.mubr.bf16.mxu0 0
        %1460 = vmatmul.mubr.bf16.gmra.mrb[0].mxu0 %v1330
        %v1461 = vpop.f32.mrb[0].mxu0
        %v1462 = vadd.f32 %v1285, %v1461
        %v1463 = vpop.f32.mrb[0].mxu0
        %v1464 = vpop.f32.mrb[0].mxu0
        %v1465 = vadd.f32 %v1285, %v1464
        %v1466 = vpop.f32.mrb[0].mxu0
        %1467 = vmatprep.mubr.bf16.mxu0 0
        %1468 = vmatmul.mubr.bf16.gmra.mrb[0].mxu0 %v1333
        %v1469 = vpop.f32.mrb[0].mxu0
        %v1470 = vadd.f32 %v1285, %v1469
        %v1471 = vpop.f32.mrb[0].mxu0
        %v1472 = vpop.f32.mrb[0].mxu0
        %v1473 = vadd.f32 %v1285, %v1472
        %v1474 = vpop.f32.mrb[0].mxu0
        %1475 = vmatprep.mubr.bf16.mxu0 0
        %1476 = vmatmul.mubr.bf16.gmra.mrb[0].mxu0 %v1336
        %v1477 = vpop.f32.mrb[0].mxu0
        %v1478 = vadd.f32 %v1285, %v1477
        %v1479 = vpop.f32.mrb[0].mxu0
        %v1480 = vpop.f32.mrb[0].mxu0
        %v1481 = vadd.f32 %v1285, %v1480
        %v1482 = vpop.f32.mrb[0].mxu0
        %1483 = vmatprep.mubr.bf16.mxu0 0
        %1484 = vmatmul.mubr.bf16.gmra.mrb[0].mxu0 %v1339
        %v1485 = vpop.f32.mrb[0].mxu0
        %v1486 = vadd.f32 %v1285, %v1485
        %v1487 = vpop.f32.mrb[0].mxu0
        %v1488 = vpop.f32.mrb[0].mxu0
        %v1489 = vadd.f32 %v1285, %v1488
        %v1490 = vpop.f32.mrb[0].mxu0
        %1491 = vmatprep.mubr.bf16.mxu0 0
        %1492 = vmatmul.mubr.bf16.gmra.mrb[0].mxu0 %v1342
        %v1493 = vpop.f32.mrb[0].mxu0
        %v1494 = vadd.f32 %v1285, %v1493
        %v1495 = vpop.f32.mrb[0].mxu0
        %v1496 = vpop.f32.mrb[0].mxu0
        %v1497 = vadd.f32 %v1285, %v1496
        %v1498 = vpop.f32.mrb[0].mxu0
        %1499 = vmatprep.mubr.bf16.mxu0 0
        %1500 = vmatmul.mubr.bf16.gmra.mrb[0].mxu0 %v1345
        %v1501 = vpop.f32.mrb[0].mxu0
        %v1502 = vadd.f32 %v1285, %v1501
        %v1503 = vpop.f32.mrb[0].mxu0
        %v1504 = vpop.f32.mrb[0].mxu0
        %v1505 = vadd.f32 %v1285, %v1504
        %v1506 = vpop.f32.mrb[0].mxu0
        %1507 = vdwg.mxu0
        %v1508 = vmax.f32 %v1382, 0.0
        %v1509 = vmax.f32 %v1385, 0.0
        %v1510 = vmax.f32 %v1390, 0.0
        %v1511 = vmax.f32 %v1393, 0.0
        %v1512 = vmax.f32 %v1398, 0.0
        %v1513 = vmax.f32 %v1401, 0.0
        %v1514 = vmax.f32 %v1406, 0.0
        %v1515 = vmax.f32 %v1409, 0.0
        %v1516 = vmax.f32 %v1414, 0.0
        %v1517 = vmax.f32 %v1417, 0.0
        %v1518 = vmax.f32 %v1422, 0.0
        %v1519 = vmax.f32 %v1425, 0.0
        %v1520 = vmax.f32 %v1430, 0.0
        %v1521 = vmax.f32 %v1433, 0.0
        %v1522 = vmax.f32 %v1438, 0.0
        %v1523 = vmax.f32 %v1441, 0.0
        %v1524 = vmax.f32 %v1446, 0.0
        %v1525 = vmax.f32 %v1449, 0.0
        %v1526 = vmax.f32 %v1454, 0.0
        %v1527 = vmax.f32 %v1457, 0.0
        %v1528 = vmax.f32 %v1462, 0.0
        %v1529 = vmax.f32 %v1465, 0.0
        %v1530 = vmax.f32 %v1470, 0.0
        %v1531 = vmax.f32 %v1473, 0.0
        %v1532 = vmax.f32 %v1478, 0.0
        %v1533 = vmax.f32 %v1481, 0.0
        %v1534 = vmax.f32 %v1486, 0.0
        %v1535 = vmax.f32 %v1489, 0.0
        %v1536 = vmax.f32 %v1494, 0.0
        %v1537 = vmax.f32 %v1497, 0.0
        %v1538 = vmax.f32 %v1502, 0.0
        %v1539 = vmax.f32 %v1505, 0.0
        %v1540 = vld [vmem:[%s553] sm:$0xf]
        %v1541 = vld [vmem:[%s553 + $0x4] sm:$0xf]
        %v1542 = vld [vmem:[%s553 + $0x8] sm:$0xf]
        %v1543 = vld [vmem:[%s553 + $0xc] sm:$0xf]
        %v1544 = vld [vmem:[%s553 + $0x10] sm:$0xf]
        %v1545 = vld [vmem:[%s553 + $0x14] sm:$0xf]
        %v1546 = vld [vmem:[%s553 + $0x18] sm:$0xf]
        %v1547 = vld [vmem:[%s553 + $0x1c] sm:$0xf]
        %v1548 = vld [vmem:[%s553 + $0x20] sm:$0xf]
        %v1549 = vld [vmem:[%s553 + $0x24] sm:$0xf]
        %v1550 = vld [vmem:[%s553 + $0x28] sm:$0xf]
        %v1551 = vld [vmem:[%s553 + $0x2c] sm:$0xf]
        %v1552 = vld [vmem:[%s553 + $0x30] sm:$0xf]
        %v1553 = vld [vmem:[%s553 + $0x34] sm:$0xf]
        %v1554 = vld [vmem:[%s553 + $0x38] sm:$0xf]
        %v1555 = vld [vmem:[%s553 + $0x3c] sm:$0xf]
        %v1556 = vld [vmem:[%s553 + $0x40] sm:$0xf]
        %v1557 = vld [vmem:[%s553 + $0x44] sm:$0xf]
        %v1558 = vld [vmem:[%s553 + $0x48] sm:$0xf]
        %v1559 = vld [vmem:[%s553 + $0x4c] sm:$0xf]
        %v1560 = vld [vmem:[%s553 + $0x50] sm:$0xf]
        %v1561 = vld [vmem:[%s553 + $0x54] sm:$0xf]
        %v1562 = vld [vmem:[%s553 + $0x58] sm:$0xf]
        %v1563 = vld [vmem:[%s553 + $0x5c] sm:$0xf]
        %v1564 = vld [vmem:[%s553 + $0x60] sm:$0xf]
        %v1565 = vld [vmem:[%s553 + $0x64] sm:$0xf]
        %v1566 = vld [vmem:[%s553 + $0x68] sm:$0xf]
        %v1567 = vld [vmem:[%s553 + $0x6c] sm:$0xf]
        %v1568 = vld [vmem:[%s553 + $0x70] sm:$0xf]
        %v1569 = vld [vmem:[%s553 + $0x74] sm:$0xf]
        %v1570 = vld [vmem:[%s553 + $0x78] sm:$0xf]
        %v1571 = vld [vmem:[%s553 + $0x7c] sm:$0xf]
        %v1572 = vld [vmem:[%s8] sm:$0xf]
        %v1573 = vld [vmem:[%s8 + $0x4] sm:$0xf]
        %v1574 = vld [vmem:[%s8 + $0x8] sm:$0xf]
        %v1575 = vld [vmem:[%s8 + $0xc] sm:$0xf]
        %v1576 = vld [vmem:[%s559] sm:$0xf]
        %v1577 = vld [vmem:[%s559 + $0x4] sm:$0xf]
        %v1578 = vld [vmem:[%s559 + $0x8] sm:$0xf]
        %v1579 = vld [vmem:[%s559 + $0xc] sm:$0xf]
        %v1580 = vld [vmem:[%s559 + $0x10] sm:$0xf]
        %v1581 = vld [vmem:[%s559 + $0x14] sm:$0xf]
        %v1582 = vld [vmem:[%s559 + $0x18] sm:$0xf]
        %v1583 = vld [vmem:[%s559 + $0x1c] sm:$0xf]
        %v1584 = vld [vmem:[%s559 + $0x20] sm:$0xf]
        %v1585 = vld [vmem:[%s559 + $0x24] sm:$0xf]
        %v1586 = vld [vmem:[%s559 + $0x28] sm:$0xf]
        %v1587 = vld [vmem:[%s559 + $0x2c] sm:$0xf]
        %v1588 = vld [vmem:[%s559 + $0x30] sm:$0xf]
        %v1589 = vld [vmem:[%s559 + $0x34] sm:$0xf]
        %v1590 = vld [vmem:[%s559 + $0x38] sm:$0xf]
        %v1591 = vld [vmem:[%s559 + $0x3c] sm:$0xf]
        %v1592 = vld [vmem:[%s559 + $0x40] sm:$0xf]
        %v1593 = vld [vmem:[%s559 + $0x44] sm:$0xf]
        %v1594 = vld [vmem:[%s559 + $0x48] sm:$0xf]
        %v1595 = vld [vmem:[%s559 + $0x4c] sm:$0xf]
        %v1596 = vld [vmem:[%s559 + $0x50] sm:$0xf]
        %v1597 = vld [vmem:[%s559 + $0x54] sm:$0xf]
        %v1598 = vld [vmem:[%s559 + $0x58] sm:$0xf]
        %v1599 = vld [vmem:[%s559 + $0x5c] sm:$0xf]
        %v1600 = vld [vmem:[%s559 + $0x60] sm:$0xf]
        %v1601 = vld [vmem:[%s559 + $0x64] sm:$0xf]
        %v1602 = vld [vmem:[%s559 + $0x68] sm:$0xf]
        %v1603 = vld [vmem:[%s559 + $0x6c] sm:$0xf]
        %v1604 = vld [vmem:[%s559 + $0x70] sm:$0xf]
        %v1605 = vld [vmem:[%s559 + $0x74] sm:$0xf]
        %v1606 = vld [vmem:[%s559 + $0x78] sm:$0xf]
        %v1607 = vld [vmem:[%s559 + $0x7c] sm:$0xf]
        %v1608 = vld [vmem:[%s9] sm:$0xf]
        %v1641 = vunpack.c.l.b16 %v1576
        %v1642 = vunpack.c.l.b16 %v1577
        %v1643 = vunpack.c.l.b16 %v1578
        %v1644 = vunpack.c.l.b16 %v1579
        %v1645 = vunpack.c.l.b16 %v1580
        %v1646 = vunpack.c.l.b16 %v1581
        %v1647 = vunpack.c.l.b16 %v1582
        %v1648 = vunpack.c.l.b16 %v1583
        %v1649 = vunpack.c.l.b16 %v1584
        %v1650 = vunpack.c.l.b16 %v1585
        %v1651 = vunpack.c.l.b16 %v1586
        %v1652 = vunpack.c.l.b16 %v1587
        %v1653 = vunpack.c.l.b16 %v1588
        %v1654 = vunpack.c.l.b16 %v1589
        %v1655 = vunpack.c.l.b16 %v1590
        %v1656 = vunpack.c.l.b16 %v1591
        %v1657 = vunpack.c.l.b16 %v1592
        %v1658 = vunpack.c.l.b16 %v1593
        %v1659 = vunpack.c.l.b16 %v1594
        %v1660 = vunpack.c.l.b16 %v1595
        %v1661 = vunpack.c.l.b16 %v1596
        %v1662 = vunpack.c.l.b16 %v1597
        %v1663 = vunpack.c.l.b16 %v1598
        %v1664 = vunpack.c.l.b16 %v1599
        %v1665 = vunpack.c.l.b16 %v1600
        %v1666 = vunpack.c.l.b16 %v1601
        %v1667 = vunpack.c.l.b16 %v1602
        %v1668 = vunpack.c.l.b16 %v1603
        %v1669 = vunpack.c.l.b16 %v1604
        %v1670 = vunpack.c.l.b16 %v1605
        %v1671 = vunpack.c.l.b16 %v1606
        %v1672 = vunpack.c.l.b16 %v1607
        %v1673 = vpack.c.b16 %v1642, %v1641
        %v1674 = vpack.c.b16 %v1644, %v1643
        %v1675 = vpack.c.b16 %v1646, %v1645
        %v1676 = vpack.c.b16 %v1648, %v1647
        %v1677 = vpack.c.b16 %v1650, %v1649
        %v1678 = vpack.c.b16 %v1652, %v1651
        %v1679 = vpack.c.b16 %v1654, %v1653
        %v1680 = vpack.c.b16 %v1656, %v1655
        %v1681 = vpack.c.b16 %v1658, %v1657
        %v1682 = vpack.c.b16 %v1660, %v1659
        %v1683 = vpack.c.b16 %v1662, %v1661
        %v1684 = vpack.c.b16 %v1664, %v1663
        %v1685 = vpack.c.b16 %v1666, %v1665
        %v1686 = vpack.c.b16 %v1668, %v1667
        %v1687 = vpack.c.b16 %v1670, %v1669
        %v1688 = vpack.c.b16 %v1672, %v1671
        %v1690 = vsel %vm712, %v1673, 0
        %v1693 = vsel %vm712, %v1674, 0
        %v1696 = vsel %vm712, %v1675, 0
        %v1699 = vsel %vm712, %v1676, 0
        %v1702 = vsel %vm712, %v1677, 0
        %v1705 = vsel %vm712, %v1678, 0
        %v1708 = vsel %vm712, %v1679, 0
        %v1711 = vsel %vm712, %v1680, 0
        %v1714 = vsel %vm712, %v1681, 0
        %v1717 = vsel %vm712, %v1682, 0
        %v1720 = vsel %vm712, %v1683, 0
        %v1723 = vsel %vm712, %v1684, 0
        %v1726 = vsel %vm712, %v1685, 0
        %v1729 = vsel %vm712, %v1686, 0
        %v1732 = vsel %vm712, %v1687, 0
        %v1735 = vsel %vm712, %v1688, 0
        %v1738 = vsel %vm761, %v1608, 0
        %1740 = vmatprep.subr.bf16.mxu0 0
        %1741 = vmatpush1.bf16.msra.mxu0 %v1738
        %1742 = vmatprep.subr.bf16.mxu0 0
        %1743 = vmatpush1.bf16.msra.mxu0 0
        %1744 = vmatprep.subr.bf16.mxu0 0
        %1745 = vmatpush1.bf16.msra.mxu0 0
        %1746 = vmatprep.subr.bf16.mxu0 0
        %1747 = vmatpush1.bf16.msra.mxu0 0
        %1748 = vmatprep.subr.bf16.mxu0 0
        %1749 = vmatpush1.bf16.msra.mxu0 0
        %1750 = vmatprep.subr.bf16.mxu0 0
        %1751 = vmatpush1.bf16.msra.mxu0 0
        %1752 = vmatprep.subr.bf16.mxu0 0
        %1753 = vmatpush1.bf16.msra.mxu0 0
        %1754 = vmatprep.subr.bf16.mxu0 0
        %1755 = vmatpush1.bf16.msra.mxu0 0
        %1756 = vmatprep.subr.bf16.mxu0 0
        %1757 = vmatpush1.bf16.msra.mxu0 0
        %1758 = vmatprep.subr.bf16.mxu0 0
        %1759 = vmatpush1.bf16.msra.mxu0 0
        %1760 = vmatprep.subr.bf16.mxu0 0
        %1761 = vmatpush1.bf16.msra.mxu0 0
        %1762 = vmatprep.subr.bf16.mxu0 0
        %1763 = vmatpush1.bf16.msra.mxu0 0
        %1764 = vmatprep.subr.bf16.mxu0 0
        %1765 = vmatpush1.bf16.msra.mxu0 0
        %1766 = vmatprep.subr.bf16.mxu0 0
        %1767 = vmatpush1.bf16.msra.mxu0 0
        %1768 = vmatprep.subr.bf16.mxu0 0
        %1769 = vmatpush1.bf16.msra.mxu0 0
        %1770 = vmatprep.subr.bf16.mxu0 0
        %1771 = vmatpush1.bf16.msra.mxu0 0
        %1772 = vmatprep.mubr.bf16.mxu0 0
        %1773 = vmatmul.mubr.bf16.gmra.mrb[0].mxu0 %v1690
        %v1774 = vpop.f32.mrb[0].mxu0
        %v1775 = vadd.f32 0.0, %v1774
        %v1776 = vpop.f32.mrb[0].mxu0
        %v1777 = vpop.f32.mrb[0].mxu0
        %v1778 = vadd.f32 0.0, %v1777
        %v1779 = vpop.f32.mrb[0].mxu0
        %1780 = vmatprep.mubr.bf16.mxu0 0
        %1781 = vmatmul.mubr.bf16.gmra.mrb[0].mxu0 %v1693
        %v1782 = vpop.f32.mrb[0].mxu0
        %v1783 = vadd.f32 0.0, %v1782
        %v1784 = vpop.f32.mrb[0].mxu0
        %v1785 = vpop.f32.mrb[0].mxu0
        %v1786 = vadd.f32 0.0, %v1785
        %v1787 = vpop.f32.mrb[0].mxu0
        %1788 = vmatprep.mubr.bf16.mxu0 0
        %1789 = vmatmul.mubr.bf16.gmra.mrb[0].mxu0 %v1696
        %v1790 = vpop.f32.mrb[0].mxu0
        %v1791 = vadd.f32 0.0, %v1790
        %v1792 = vpop.f32.mrb[0].mxu0
        %v1793 = vpop.f32.mrb[0].mxu0
        %v1794 = vadd.f32 0.0, %v1793
        %v1795 = vpop.f32.mrb[0].mxu0
        %1796 = vmatprep.mubr.bf16.mxu0 0
        %1797 = vmatmul.mubr.bf16.gmra.mrb[0].mxu0 %v1699
        %v1798 = vpop.f32.mrb[0].mxu0
        %v1799 = vadd.f32 0.0, %v1798
        %v1800 = vpop.f32.mrb[0].mxu0
        %v1801 = vpop.f32.mrb[0].mxu0
        %v1802 = vadd.f32 0.0, %v1801
        %v1803 = vpop.f32.mrb[0].mxu0
        %1804 = vmatprep.mubr.bf16.mxu0 0
        %1805 = vmatmul.mubr.bf16.gmra.mrb[0].mxu0 %v1702
        %v1806 = vpop.f32.mrb[0].mxu0
        %v1807 = vadd.f32 0.0, %v1806
        %v1808 = vpop.f32.mrb[0].mxu0
        %v1809 = vpop.f32.mrb[0].mxu0
        %v1810 = vadd.f32 0.0, %v1809
        %v1811 = vpop.f32.mrb[0].mxu0
        %1812 = vmatprep.mubr.bf16.mxu0 0
        %1813 = vmatmul.mubr.bf16.gmra.mrb[0].mxu0 %v1705
        %v1814 = vpop.f32.mrb[0].mxu0
        %v1815 = vadd.f32 0.0, %v1814
        %v1816 = vpop.f32.mrb[0].mxu0
        %v1817 = vpop.f32.mrb[0].mxu0
        %v1818 = vadd.f32 0.0, %v1817
        %v1819 = vpop.f32.mrb[0].mxu0
        %1820 = vmatprep.mubr.bf16.mxu0 0
        %1821 = vmatmul.mubr.bf16.gmra.mrb[0].mxu0 %v1708
        %v1822 = vpop.f32.mrb[0].mxu0
        %v1823 = vadd.f32 0.0, %v1822
        %v1824 = vpop.f32.mrb[0].mxu0
        %v1825 = vpop.f32.mrb[0].mxu0
        %v1826 = vadd.f32 0.0, %v1825
        %v1827 = vpop.f32.mrb[0].mxu0
        %1828 = vmatprep.mubr.bf16.mxu0 0
        %1829 = vmatmul.mubr.bf16.gmra.mrb[0].mxu0 %v1711
        %v1830 = vpop.f32.mrb[0].mxu0
        %v1831 = vadd.f32 0.0, %v1830
        %v1832 = vpop.f32.mrb[0].mxu0
        %v1833 = vpop.f32.mrb[0].mxu0
        %v1834 = vadd.f32 0.0, %v1833
        %v1835 = vpop.f32.mrb[0].mxu0
        %1836 = vmatprep.mubr.bf16.mxu0 0
        %1837 = vmatmul.mubr.bf16.gmra.mrb[0].mxu0 %v1714
        %v1838 = vpop.f32.mrb[0].mxu0
        %v1839 = vadd.f32 0.0, %v1838
        %v1840 = vpop.f32.mrb[0].mxu0
        %v1841 = vpop.f32.mrb[0].mxu0
        %v1842 = vadd.f32 0.0, %v1841
        %v1843 = vpop.f32.mrb[0].mxu0
        %1844 = vmatprep.mubr.bf16.mxu0 0
        %1845 = vmatmul.mubr.bf16.gmra.mrb[0].mxu0 %v1717
        %v1846 = vpop.f32.mrb[0].mxu0
        %v1847 = vadd.f32 0.0, %v1846
        %v1848 = vpop.f32.mrb[0].mxu0
        %v1849 = vpop.f32.mrb[0].mxu0
        %v1850 = vadd.f32 0.0, %v1849
        %v1851 = vpop.f32.mrb[0].mxu0
        %1852 = vmatprep.mubr.bf16.mxu0 0
        %1853 = vmatmul.mubr.bf16.gmra.mrb[0].mxu0 %v1720
        %v1854 = vpop.f32.mrb[0].mxu0
        %v1855 = vadd.f32 0.0, %v1854
        %v1856 = vpop.f32.mrb[0].mxu0
        %v1857 = vpop.f32.mrb[0].mxu0
        %v1858 = vadd.f32 0.0, %v1857
        %v1859 = vpop.f32.mrb[0].mxu0
        %1860 = vmatprep.mubr.bf16.mxu0 0
        %1861 = vmatmul.mubr.bf16.gmra.mrb[0].mxu0 %v1723
        %v1862 = vpop.f32.mrb[0].mxu0
        %v1863 = vadd.f32 0.0, %v1862
        %v1864 = vpop.f32.mrb[0].mxu0
        %v1865 = vpop.f32.mrb[0].mxu0
        %v1866 = vadd.f32 0.0, %v1865
        %v1867 = vpop.f32.mrb[0].mxu0
        %1868 = vmatprep.mubr.bf16.mxu0 0
        %1869 = vmatmul.mubr.bf16.gmra.mrb[0].mxu0 %v1726
        %v1870 = vpop.f32.mrb[0].mxu0
        %v1871 = vadd.f32 0.0, %v1870
        %v1872 = vpop.f32.mrb[0].mxu0
        %v1873 = vpop.f32.mrb[0].mxu0
        %v1874 = vadd.f32 0.0, %v1873
        %v1875 = vpop.f32.mrb[0].mxu0
        %1876 = vmatprep.mubr.bf16.mxu0 0
        %1877 = vmatmul.mubr.bf16.gmra.mrb[0].mxu0 %v1729
        %v1878 = vpop.f32.mrb[0].mxu0
        %v1879 = vadd.f32 0.0, %v1878
        %v1880 = vpop.f32.mrb[0].mxu0
        %v1881 = vpop.f32.mrb[0].mxu0
        %v1882 = vadd.f32 0.0, %v1881
        %v1883 = vpop.f32.mrb[0].mxu0
        %1884 = vmatprep.mubr.bf16.mxu0 0
        %1885 = vmatmul.mubr.bf16.gmra.mrb[0].mxu0 %v1732
        %v1886 = vpop.f32.mrb[0].mxu0
        %v1887 = vadd.f32 0.0, %v1886
        %v1888 = vpop.f32.mrb[0].mxu0
        %v1889 = vpop.f32.mrb[0].mxu0
        %v1890 = vadd.f32 0.0, %v1889
        %v1891 = vpop.f32.mrb[0].mxu0
        %1892 = vmatprep.mubr.bf16.mxu0 0
        %1893 = vmatmul.mubr.bf16.gmra.mrb[0].mxu0 %v1735
        %v1894 = vpop.f32.mrb[0].mxu0
        %v1895 = vadd.f32 0.0, %v1894
        %v1896 = vpop.f32.mrb[0].mxu0
        %v1897 = vpop.f32.mrb[0].mxu0
        %v1898 = vadd.f32 0.0, %v1897
        %v1899 = vpop.f32.mrb[0].mxu0
        %1900 = vdwg.mxu0
        %v1933 = vunpack.c.l.b16 %v1540
        %v1934 = vunpack.c.l.b16 %v1541
        %v1935 = vunpack.c.l.b16 %v1542
        %v1936 = vunpack.c.l.b16 %v1543
        %v1937 = vunpack.c.l.b16 %v1544
        %v1938 = vunpack.c.l.b16 %v1545
        %v1939 = vunpack.c.l.b16 %v1546
        %v1940 = vunpack.c.l.b16 %v1547
        %v1941 = vunpack.c.l.b16 %v1548
        %v1942 = vunpack.c.l.b16 %v1549
        %v1943 = vunpack.c.l.b16 %v1550
        %v1944 = vunpack.c.l.b16 %v1551
        %v1945 = vunpack.c.l.b16 %v1552
        %v1946 = vunpack.c.l.b16 %v1553
        %v1947 = vunpack.c.l.b16 %v1554
        %v1948 = vunpack.c.l.b16 %v1555
        %v1949 = vunpack.c.l.b16 %v1556
        %v1950 = vunpack.c.l.b16 %v1557
        %v1951 = vunpack.c.l.b16 %v1558
        %v1952 = vunpack.c.l.b16 %v1559
        %v1953 = vunpack.c.l.b16 %v1560
        %v1954 = vunpack.c.l.b16 %v1561
        %v1955 = vunpack.c.l.b16 %v1562
        %v1956 = vunpack.c.l.b16 %v1563
        %v1957 = vunpack.c.l.b16 %v1564
        %v1958 = vunpack.c.l.b16 %v1565
        %v1959 = vunpack.c.l.b16 %v1566
        %v1960 = vunpack.c.l.b16 %v1567
        %v1961 = vunpack.c.l.b16 %v1568
        %v1962 = vunpack.c.l.b16 %v1569
        %v1963 = vunpack.c.l.b16 %v1570
        %v1964 = vunpack.c.l.b16 %v1571
        %v1965 = vpack.c.b16 %v1934, %v1933
        %v1966 = vpack.c.b16 %v1936, %v1935
        %v1967 = vpack.c.b16 %v1938, %v1937
        %v1968 = vpack.c.b16 %v1940, %v1939
        %v1969 = vpack.c.b16 %v1942, %v1941
        %v1970 = vpack.c.b16 %v1944, %v1943
        %v1971 = vpack.c.b16 %v1946, %v1945
        %v1972 = vpack.c.b16 %v1948, %v1947
        %v1973 = vpack.c.b16 %v1950, %v1949
        %v1974 = vpack.c.b16 %v1952, %v1951
        %v1975 = vpack.c.b16 %v1954, %v1953
        %v1976 = vpack.c.b16 %v1956, %v1955
        %v1977 = vpack.c.b16 %v1958, %v1957
        %v1978 = vpack.c.b16 %v1960, %v1959
        %v1979 = vpack.c.b16 %v1962, %v1961
        %v1980 = vpack.c.b16 %v1964, %v1963
        %v1985 = vunpack.c.l.b16 %v1572
        %v1986 = vunpack.c.l.b16 %v1573
        %v1987 = vunpack.c.l.b16 %v1574
        %v1988 = vunpack.c.l.b16 %v1575
        %v1989 = vpack.c.b16 %v1986, %v1985
        %v1990 = vpack.c.b16 %v1988, %v1987
        %v1994 = vsel %vm1018, %v1965, 0
        %v1997 = vsel %vm1018, %v1966, 0
        %v2000 = vsel %vm1018, %v1967, 0
        %v2003 = vsel %vm1018, %v1968, 0
        %v2006 = vsel %vm1018, %v1969, 0
        %v2009 = vsel %vm1018, %v1970, 0
        %v2012 = vsel %vm1018, %v1971, 0
        %v2015 = vsel %vm1018, %v1972, 0
        %v2018 = vsel %vm1018, %v1973, 0
        %v2021 = vsel %vm1018, %v1974, 0
        %v2024 = vsel %vm1018, %v1975, 0
        %v2027 = vsel %vm1018, %v1976, 0
        %v2030 = vsel %vm1018, %v1977, 0
        %v2033 = vsel %vm1018, %v1978, 0
        %v2036 = vsel %vm1018, %v1979, 0
        %v2039 = vsel %vm1018, %v1980, 0
        %2041 = vmatprep.subr.bf16.mxu0 0
        %2042 = vmatpush1.bf16.msra.mxu0 %v1989
        %2043 = vmatprep.subr.bf16.mxu0 0
        %2044 = vmatpush1.bf16.msra.mxu0 %v1990
        %2045 = vmatprep.subr.bf16.mxu0 0
        %2046 = vmatpush1.bf16.msra.mxu0 0
        %2047 = vmatprep.subr.bf16.mxu0 0
        %2048 = vmatpush1.bf16.msra.mxu0 0
        %2049 = vmatprep.subr.bf16.mxu0 0
        %2050 = vmatpush1.bf16.msra.mxu0 0
        %2051 = vmatprep.subr.bf16.mxu0 0
        %2052 = vmatpush1.bf16.msra.mxu0 0
        %2053 = vmatprep.subr.bf16.mxu0 0
        %2054 = vmatpush1.bf16.msra.mxu0 0
        %2055 = vmatprep.subr.bf16.mxu0 0
        %2056 = vmatpush1.bf16.msra.mxu0 0
        %2057 = vmatprep.subr.bf16.mxu0 0
        %2058 = vmatpush1.bf16.msra.mxu0 0
        %2059 = vmatprep.subr.bf16.mxu0 0
        %2060 = vmatpush1.bf16.msra.mxu0 0
        %2061 = vmatprep.subr.bf16.mxu0 0
        %2062 = vmatpush1.bf16.msra.mxu0 0
        %2063 = vmatprep.subr.bf16.mxu0 0
        %2064 = vmatpush1.bf16.msra.mxu0 0
        %2065 = vmatprep.subr.bf16.mxu0 0
        %2066 = vmatpush1.bf16.msra.mxu0 0
        %2067 = vmatprep.subr.bf16.mxu0 0
        %2068 = vmatpush1.bf16.msra.mxu0 0
        %2069 = vmatprep.subr.bf16.mxu0 0
        %2070 = vmatpush1.bf16.msra.mxu0 0
        %2071 = vmatprep.subr.bf16.mxu0 0
        %2072 = vmatpush1.bf16.msra.mxu0 0
        %2073 = vmatprep.mubr.bf16.mxu0 0
        %2074 = vmatmul.mubr.bf16.gmra.mrb[0].mxu0 %v1994
        %v2075 = vpop.f32.mrb[0].mxu0
        %v2076 = vadd.f32 %v1775, %v2075
        %v2077 = vpop.f32.mrb[0].mxu0
        %v2078 = vpop.f32.mrb[0].mxu0
        %v2079 = vadd.f32 %v1778, %v2078
        %v2080 = vpop.f32.mrb[0].mxu0
        %2081 = vmatprep.mubr.bf16.mxu0 0
        %2082 = vmatmul.mubr.bf16.gmra.mrb[0].mxu0 %v1997
        %v2083 = vpop.f32.mrb[0].mxu0
        %v2084 = vadd.f32 %v1783, %v2083
        %v2085 = vpop.f32.mrb[0].mxu0
        %v2086 = vpop.f32.mrb[0].mxu0
        %v2087 = vadd.f32 %v1786, %v2086
        %v2088 = vpop.f32.mrb[0].mxu0
        %2089 = vmatprep.mubr.bf16.mxu0 0
        %2090 = vmatmul.mubr.bf16.gmra.mrb[0].mxu0 %v2000
        %v2091 = vpop.f32.mrb[0].mxu0
        %v2092 = vadd.f32 %v1791, %v2091
        %v2093 = vpop.f32.mrb[0].mxu0
        %v2094 = vpop.f32.mrb[0].mxu0
        %v2095 = vadd.f32 %v1794, %v2094
        %v2096 = vpop.f32.mrb[0].mxu0
        %2097 = vmatprep.mubr.bf16.mxu0 0
        %2098 = vmatmul.mubr.bf16.gmra.mrb[0].mxu0 %v2003
        %v2099 = vpop.f32.mrb[0].mxu0
        %v2100 = vadd.f32 %v1799, %v2099
        %v2101 = vpop.f32.mrb[0].mxu0
        %v2102 = vpop.f32.mrb[0].mxu0
        %v2103 = vadd.f32 %v1802, %v2102
        %v2104 = vpop.f32.mrb[0].mxu0
        %2105 = vmatprep.mubr.bf16.mxu0 0
        %2106 = vmatmul.mubr.bf16.gmra.mrb[0].mxu0 %v2006
        %v2107 = vpop.f32.mrb[0].mxu0
        %v2108 = vadd.f32 %v1807, %v2107
        %v2109 = vpop.f32.mrb[0].mxu0
        %v2110 = vpop.f32.mrb[0].mxu0
        %v2111 = vadd.f32 %v1810, %v2110
        %v2112 = vpop.f32.mrb[0].mxu0
        %2113 = vmatprep.mubr.bf16.mxu0 0
        %2114 = vmatmul.mubr.bf16.gmra.mrb[0].mxu0 %v2009
        %v2115 = vpop.f32.mrb[0].mxu0
        %v2116 = vadd.f32 %v1815, %v2115
        %v2117 = vpop.f32.mrb[0].mxu0
        %v2118 = vpop.f32.mrb[0].mxu0
        %v2119 = vadd.f32 %v1818, %v2118
        %v2120 = vpop.f32.mrb[0].mxu0
        %2121 = vmatprep.mubr.bf16.mxu0 0
        %2122 = vmatmul.mubr.bf16.gmra.mrb[0].mxu0 %v2012
        %v2123 = vpop.f32.mrb[0].mxu0
        %v2124 = vadd.f32 %v1823, %v2123
        %v2125 = vpop.f32.mrb[0].mxu0
        %v2126 = vpop.f32.mrb[0].mxu0
        %v2127 = vadd.f32 %v1826, %v2126
        %v2128 = vpop.f32.mrb[0].mxu0
        %2129 = vmatprep.mubr.bf16.mxu0 0
        %2130 = vmatmul.mubr.bf16.gmra.mrb[0].mxu0 %v2015
        %v2131 = vpop.f32.mrb[0].mxu0
        %v2132 = vadd.f32 %v1831, %v2131
        %v2133 = vpop.f32.mrb[0].mxu0
        %v2134 = vpop.f32.mrb[0].mxu0
        %v2135 = vadd.f32 %v1834, %v2134
        %v2136 = vpop.f32.mrb[0].mxu0
        %2137 = vmatprep.mubr.bf16.mxu0 0
        %2138 = vmatmul.mubr.bf16.gmra.mrb[0].mxu0 %v2018
        %v2139 = vpop.f32.mrb[0].mxu0
        %v2140 = vadd.f32 %v1839, %v2139
        %v2141 = vpop.f32.mrb[0].mxu0
        %v2142 = vpop.f32.mrb[0].mxu0
        %v2143 = vadd.f32 %v1842, %v2142
        %v2144 = vpop.f32.mrb[0].mxu0
        %2145 = vmatprep.mubr.bf16.mxu0 0
        %2146 = vmatmul.mubr.bf16.gmra.mrb[0].mxu0 %v2021
        %v2147 = vpop.f32.mrb[0].mxu0
        %v2148 = vadd.f32 %v1847, %v2147
        %v2149 = vpop.f32.mrb[0].mxu0
        %v2150 = vpop.f32.mrb[0].mxu0
        %v2151 = vadd.f32 %v1850, %v2150
        %v2152 = vpop.f32.mrb[0].mxu0
        %2153 = vmatprep.mubr.bf16.mxu0 0
        %2154 = vmatmul.mubr.bf16.gmra.mrb[0].mxu0 %v2024
        %v2155 = vpop.f32.mrb[0].mxu0
        %v2156 = vadd.f32 %v1855, %v2155
        %v2157 = vpop.f32.mrb[0].mxu0
        %v2158 = vpop.f32.mrb[0].mxu0
        %v2159 = vadd.f32 %v1858, %v2158
        %v2160 = vpop.f32.mrb[0].mxu0
        %2161 = vmatprep.mubr.bf16.mxu0 0
        %2162 = vmatmul.mubr.bf16.gmra.mrb[0].mxu0 %v2027
        %v2163 = vpop.f32.mrb[0].mxu0
        %v2164 = vadd.f32 %v1863, %v2163
        %v2165 = vpop.f32.mrb[0].mxu0
        %v2166 = vpop.f32.mrb[0].mxu0
        %v2167 = vadd.f32 %v1866, %v2166
        %v2168 = vpop.f32.mrb[0].mxu0
        %2169 = vmatprep.mubr.bf16.mxu0 0
        %2170 = vmatmul.mubr.bf16.gmra.mrb[0].mxu0 %v2030
        %v2171 = vpop.f32.mrb[0].mxu0
        %v2172 = vadd.f32 %v1871, %v2171
        %v2173 = vpop.f32.mrb[0].mxu0
        %v2174 = vpop.f32.mrb[0].mxu0
        %v2175 = vadd.f32 %v1874, %v2174
        %v2176 = vpop.f32.mrb[0].mxu0
        %2177 = vmatprep.mubr.bf16.mxu0 0
        %2178 = vmatmul.mubr.bf16.gmra.mrb[0].mxu0 %v2033
        %v2179 = vpop.f32.mrb[0].mxu0
        %v2180 = vadd.f32 %v1879, %v2179
        %v2181 = vpop.f32.mrb[0].mxu0
        %v2182 = vpop.f32.mrb[0].mxu0
        %v2183 = vadd.f32 %v1882, %v2182
        %v2184 = vpop.f32.mrb[0].mxu0
        %2185 = vmatprep.mubr.bf16.mxu0 0
        %2186 = vmatmul.mubr.bf16.gmra.mrb[0].mxu0 %v2036
        %v2187 = vpop.f32.mrb[0].mxu0
        %v2188 = vadd.f32 %v1887, %v2187
        %v2189 = vpop.f32.mrb[0].mxu0
        %v2190 = vpop.f32.mrb[0].mxu0
        %v2191 = vadd.f32 %v1890, %v2190
        %v2192 = vpop.f32.mrb[0].mxu0
        %2193 = vmatprep.mubr.bf16.mxu0 0
        %2194 = vmatmul.mubr.bf16.gmra.mrb[0].mxu0 %v2039
        %v2195 = vpop.f32.mrb[0].mxu0
        %v2196 = vadd.f32 %v1895, %v2195
        %v2197 = vpop.f32.mrb[0].mxu0
        %v2198 = vpop.f32.mrb[0].mxu0
        %v2199 = vadd.f32 %v1898, %v2198
        %v2200 = vpop.f32.mrb[0].mxu0
        %2201 = vdwg.mxu0
        %v2202 = vmax.f32 %v2076, 0.0
        %v2203 = vmax.f32 %v2079, 0.0
        %v2204 = vmax.f32 %v2084, 0.0
        %v2205 = vmax.f32 %v2087, 0.0
        %v2206 = vmax.f32 %v2092, 0.0
        %v2207 = vmax.f32 %v2095, 0.0
        %v2208 = vmax.f32 %v2100, 0.0
        %v2209 = vmax.f32 %v2103, 0.0
        %v2210 = vmax.f32 %v2108, 0.0
        %v2211 = vmax.f32 %v2111, 0.0
        %v2212 = vmax.f32 %v2116, 0.0
        %v2213 = vmax.f32 %v2119, 0.0
        %v2214 = vmax.f32 %v2124, 0.0
        %v2215 = vmax.f32 %v2127, 0.0
        %v2216 = vmax.f32 %v2132, 0.0
        %v2217 = vmax.f32 %v2135, 0.0
        %v2218 = vmax.f32 %v2140, 0.0
        %v2219 = vmax.f32 %v2143, 0.0
        %v2220 = vmax.f32 %v2148, 0.0
        %v2221 = vmax.f32 %v2151, 0.0
        %v2222 = vmax.f32 %v2156, 0.0
        %v2223 = vmax.f32 %v2159, 0.0
        %v2224 = vmax.f32 %v2164, 0.0
        %v2225 = vmax.f32 %v2167, 0.0
        %v2226 = vmax.f32 %v2172, 0.0
        %v2227 = vmax.f32 %v2175, 0.0
        %v2228 = vmax.f32 %v2180, 0.0
        %v2229 = vmax.f32 %v2183, 0.0
        %v2230 = vmax.f32 %v2188, 0.0
        %v2231 = vmax.f32 %v2191, 0.0
        %v2232 = vmax.f32 %v2196, 0.0
        %v2233 = vmax.f32 %v2199, 0.0
        %v2234 = vpack.c.bf16 %v2203, %v2202
        %v2235 = vpack.c.bf16 %v2205, %v2204
        %v2236 = vpack.c.bf16 %v2207, %v2206
        %v2237 = vpack.c.bf16 %v2209, %v2208
        %v2238 = vpack.c.bf16 %v2211, %v2210
        %v2239 = vpack.c.bf16 %v2213, %v2212
        %v2240 = vpack.c.bf16 %v2215, %v2214
        %v2241 = vpack.c.bf16 %v2217, %v2216
        %v2242 = vpack.c.bf16 %v2219, %v2218
        %v2243 = vpack.c.bf16 %v2221, %v2220
        %v2244 = vpack.c.bf16 %v2223, %v2222
        %v2245 = vpack.c.bf16 %v2225, %v2224
        %v2246 = vpack.c.bf16 %v2227, %v2226
        %v2247 = vpack.c.bf16 %v2229, %v2228
        %v2248 = vpack.c.bf16 %v2231, %v2230
        %v2249 = vpack.c.bf16 %v2233, %v2232
        %v2250 = vld [vmem:[%s10] sm:$0xf]
        %v2251 = vld [vmem:[%s10 + $0x4] sm:$0xf]
        %v2252 = vld [vmem:[%s10 + $0x8] sm:$0xf]
        %v2253 = vld [vmem:[%s10 + $0xc] sm:$0xf]
        %v2254 = vld [vmem:[%s11] sm:$0x1]
        %v2256 = vlaneseq
        %v2257 = vshrl.u32 %v2256, 7
        %v2258 = vsub.s32 0, %v2257
        %v2259 = vrot.slane %v2254, %v2258
        %v2265 = vunpack.c.l.b16 %v2250
        %v2266 = vunpack.c.l.b16 %v2251
        %v2267 = vunpack.c.l.b16 %v2252
        %v2268 = vunpack.c.l.b16 %v2253
        %v2269 = vpack.c.b16 %v2266, %v2265
        %v2270 = vpack.c.b16 %v2268, %v2267
        %v2274 = vsel %vm1018, %v2234, 0
        %v2277 = vsel %vm1018, %v2235, 0
        %v2280 = vsel %vm1018, %v2236, 0
        %v2283 = vsel %vm1018, %v2237, 0
        %v2286 = vsel %vm1018, %v2238, 0
        %v2289 = vsel %vm1018, %v2239, 0
        %v2292 = vsel %vm1018, %v2240, 0
        %v2295 = vsel %vm1018, %v2241, 0
        %v2298 = vsel %vm1018, %v2242, 0
        %v2301 = vsel %vm1018, %v2243, 0
        %v2304 = vsel %vm1018, %v2244, 0
        %v2307 = vsel %vm1018, %v2245, 0
        %v2310 = vsel %vm1018, %v2246, 0
        %v2313 = vsel %vm1018, %v2247, 0
        %v2316 = vsel %vm1018, %v2248, 0
        %v2319 = vsel %vm1018, %v2249, 0
        %2321 = vmatprep.subr.bf16.mxu0 0
        %2322 = vmatpush1.bf16.msra.mxu0 %v2269
        %2323 = vmatprep.subr.bf16.mxu0 0
        %2324 = vmatpush1.bf16.msra.mxu0 %v2270
        %2325 = vmatprep.subr.bf16.mxu0 0
        %2326 = vmatpush1.bf16.msra.mxu0 0
        %2327 = vmatprep.subr.bf16.mxu0 0
        %2328 = vmatpush1.bf16.msra.mxu0 0
        %2329 = vmatprep.subr.bf16.mxu0 0
        %2330 = vmatpush1.bf16.msra.mxu0 0
        %2331 = vmatprep.subr.bf16.mxu0 0
        %2332 = vmatpush1.bf16.msra.mxu0 0
        %2333 = vmatprep.subr.bf16.mxu0 0
        %2334 = vmatpush1.bf16.msra.mxu0 0
        %2335 = vmatprep.subr.bf16.mxu0 0
        %2336 = vmatpush1.bf16.msra.mxu0 0
        %2337 = vmatprep.subr.bf16.mxu0 0
        %2338 = vmatpush1.bf16.msra.mxu0 0
        %2339 = vmatprep.subr.bf16.mxu0 0
        %2340 = vmatpush1.bf16.msra.mxu0 0
        %2341 = vmatprep.subr.bf16.mxu0 0
        %2342 = vmatpush1.bf16.msra.mxu0 0
        %2343 = vmatprep.subr.bf16.mxu0 0
        %2344 = vmatpush1.bf16.msra.mxu0 0
        %2345 = vmatprep.subr.bf16.mxu0 0
        %2346 = vmatpush1.bf16.msra.mxu0 0
        %2347 = vmatprep.subr.bf16.mxu0 0
        %2348 = vmatpush1.bf16.msra.mxu0 0
        %2349 = vmatprep.subr.bf16.mxu0 0
        %2350 = vmatpush1.bf16.msra.mxu0 0
        %2351 = vmatprep.subr.bf16.mxu0 0
        %2352 = vmatpush1.bf16.msra.mxu0 0
        %2353 = vmatprep.mubr.bf16.mxu0 0
        %2354 = vmatmul.mubr.bf16.gmra.mrb[0].mxu0 %v2274
        %v2355 = vpop.f32.mrb[0].mxu0
        %v2356 = vadd.f32 %v2259, %v2355
        %v2357 = vpop.f32.mrb[0].mxu0
        %v2358 = vpop.f32.mrb[0].mxu0
        %v2359 = vadd.f32 %v2259, %v2358
        %v2360 = vpop.f32.mrb[0].mxu0
        %2361 = vmatprep.mubr.bf16.mxu0 0
        %2362 = vmatmul.mubr.bf16.gmra.mrb[0].mxu0 %v2277
        %v2363 = vpop.f32.mrb[0].mxu0
        %v2364 = vadd.f32 %v2259, %v2363
        %v2365 = vpop.f32.mrb[0].mxu0
        %v2366 = vpop.f32.mrb[0].mxu0
        %v2367 = vadd.f32 %v2259, %v2366
        %v2368 = vpop.f32.mrb[0].mxu0
        %2369 = vmatprep.mubr.bf16.mxu0 0
        %2370 = vmatmul.mubr.bf16.gmra.mrb[0].mxu0 %v2280
        %v2371 = vpop.f32.mrb[0].mxu0
        %v2372 = vadd.f32 %v2259, %v2371
        %v2373 = vpop.f32.mrb[0].mxu0
        %v2374 = vpop.f32.mrb[0].mxu0
        %v2375 = vadd.f32 %v2259, %v2374
        %v2376 = vpop.f32.mrb[0].mxu0
        %2377 = vmatprep.mubr.bf16.mxu0 0
        %2378 = vmatmul.mubr.bf16.gmra.mrb[0].mxu0 %v2283
        %v2379 = vpop.f32.mrb[0].mxu0
        %v2380 = vadd.f32 %v2259, %v2379
        %v2381 = vpop.f32.mrb[0].mxu0
        %v2382 = vpop.f32.mrb[0].mxu0
        %v2383 = vadd.f32 %v2259, %v2382
        %v2384 = vpop.f32.mrb[0].mxu0
        %2385 = vmatprep.mubr.bf16.mxu0 0
        %2386 = vmatmul.mubr.bf16.gmra.mrb[0].mxu0 %v2286
        %v2387 = vpop.f32.mrb[0].mxu0
        %v2388 = vadd.f32 %v2259, %v2387
        %v2389 = vpop.f32.mrb[0].mxu0
        %v2390 = vpop.f32.mrb[0].mxu0
        %v2391 = vadd.f32 %v2259, %v2390
        %v2392 = vpop.f32.mrb[0].mxu0
        %2393 = vmatprep.mubr.bf16.mxu0 0
        %2394 = vmatmul.mubr.bf16.gmra.mrb[0].mxu0 %v2289
        %v2395 = vpop.f32.mrb[0].mxu0
        %v2396 = vadd.f32 %v2259, %v2395
        %v2397 = vpop.f32.mrb[0].mxu0
        %v2398 = vpop.f32.mrb[0].mxu0
        %v2399 = vadd.f32 %v2259, %v2398
        %v2400 = vpop.f32.mrb[0].mxu0
        %2401 = vmatprep.mubr.bf16.mxu0 0
        %2402 = vmatmul.mubr.bf16.gmra.mrb[0].mxu0 %v2292
        %v2403 = vpop.f32.mrb[0].mxu0
        %v2404 = vadd.f32 %v2259, %v2403
        %v2405 = vpop.f32.mrb[0].mxu0
        %v2406 = vpop.f32.mrb[0].mxu0
        %v2407 = vadd.f32 %v2259, %v2406
        %v2408 = vpop.f32.mrb[0].mxu0
        %2409 = vmatprep.mubr.bf16.mxu0 0
        %2410 = vmatmul.mubr.bf16.gmra.mrb[0].mxu0 %v2295
        %v2411 = vpop.f32.mrb[0].mxu0
        %v2412 = vadd.f32 %v2259, %v2411
        %v2413 = vpop.f32.mrb[0].mxu0
        %v2414 = vpop.f32.mrb[0].mxu0
        %v2415 = vadd.f32 %v2259, %v2414
        %v2416 = vpop.f32.mrb[0].mxu0
        %2417 = vmatprep.mubr.bf16.mxu0 0
        %2418 = vmatmul.mubr.bf16.gmra.mrb[0].mxu0 %v2298
        %v2419 = vpop.f32.mrb[0].mxu0
        %v2420 = vadd.f32 %v2259, %v2419
        %v2421 = vpop.f32.mrb[0].mxu0
        %v2422 = vpop.f32.mrb[0].mxu0
        %v2423 = vadd.f32 %v2259, %v2422
        %v2424 = vpop.f32.mrb[0].mxu0
        %2425 = vmatprep.mubr.bf16.mxu0 0
        %2426 = vmatmul.mubr.bf16.gmra.mrb[0].mxu0 %v2301
        %v2427 = vpop.f32.mrb[0].mxu0
        %v2428 = vadd.f32 %v2259, %v2427
        %v2429 = vpop.f32.mrb[0].mxu0
        %v2430 = vpop.f32.mrb[0].mxu0
        %v2431 = vadd.f32 %v2259, %v2430
        %v2432 = vpop.f32.mrb[0].mxu0
        %2433 = vmatprep.mubr.bf16.mxu0 0
        %2434 = vmatmul.mubr.bf16.gmra.mrb[0].mxu0 %v2304
        %v2435 = vpop.f32.mrb[0].mxu0
        %v2436 = vadd.f32 %v2259, %v2435
        %v2437 = vpop.f32.mrb[0].mxu0
        %v2438 = vpop.f32.mrb[0].mxu0
        %v2439 = vadd.f32 %v2259, %v2438
        %v2440 = vpop.f32.mrb[0].mxu0
        %2441 = vmatprep.mubr.bf16.mxu0 0
        %2442 = vmatmul.mubr.bf16.gmra.mrb[0].mxu0 %v2307
        %v2443 = vpop.f32.mrb[0].mxu0
        %v2444 = vadd.f32 %v2259, %v2443
        %v2445 = vpop.f32.mrb[0].mxu0
        %v2446 = vpop.f32.mrb[0].mxu0
        %v2447 = vadd.f32 %v2259, %v2446
        %v2448 = vpop.f32.mrb[0].mxu0
        %2449 = vmatprep.mubr.bf16.mxu0 0
        %2450 = vmatmul.mubr.bf16.gmra.mrb[0].mxu0 %v2310
        %v2451 = vpop.f32.mrb[0].mxu0
        %v2452 = vadd.f32 %v2259, %v2451
        %v2453 = vpop.f32.mrb[0].mxu0
        %v2454 = vpop.f32.mrb[0].mxu0
        %v2455 = vadd.f32 %v2259, %v2454
        %v2456 = vpop.f32.mrb[0].mxu0
        %2457 = vmatprep.mubr.bf16.mxu0 0
        %2458 = vmatmul.mubr.bf16.gmra.mrb[0].mxu0 %v2313
        %v2459 = vpop.f32.mrb[0].mxu0
        %v2460 = vadd.f32 %v2259, %v2459
        %v2461 = vpop.f32.mrb[0].mxu0
        %v2462 = vpop.f32.mrb[0].mxu0
        %v2463 = vadd.f32 %v2259, %v2462
        %v2464 = vpop.f32.mrb[0].mxu0
        %2465 = vmatprep.mubr.bf16.mxu0 0
        %2466 = vmatmul.mubr.bf16.gmra.mrb[0].mxu0 %v2316
        %v2467 = vpop.f32.mrb[0].mxu0
        %v2468 = vadd.f32 %v2259, %v2467
        %v2469 = vpop.f32.mrb[0].mxu0
        %v2470 = vpop.f32.mrb[0].mxu0
        %v2471 = vadd.f32 %v2259, %v2470
        %v2472 = vpop.f32.mrb[0].mxu0
        %2473 = vmatprep.mubr.bf16.mxu0 0
        %2474 = vmatmul.mubr.bf16.gmra.mrb[0].mxu0 %v2319
        %v2475 = vpop.f32.mrb[0].mxu0
        %v2476 = vadd.f32 %v2259, %v2475
        %v2477 = vpop.f32.mrb[0].mxu0
        %v2478 = vpop.f32.mrb[0].mxu0
        %v2479 = vadd.f32 %v2259, %v2478
        %v2480 = vpop.f32.mrb[0].mxu0
        %2481 = vdwg.mxu0
        %v2482 = vmax.f32 %v2356, 0.0
        %v2483 = vmax.f32 %v2359, 0.0
        %v2484 = vmax.f32 %v2364, 0.0
        %v2485 = vmax.f32 %v2367, 0.0
        %v2486 = vmax.f32 %v2372, 0.0
        %v2487 = vmax.f32 %v2375, 0.0
        %v2488 = vmax.f32 %v2380, 0.0
        %v2489 = vmax.f32 %v2383, 0.0
        %v2490 = vmax.f32 %v2388, 0.0
        %v2491 = vmax.f32 %v2391, 0.0
        %v2492 = vmax.f32 %v2396, 0.0
        %v2493 = vmax.f32 %v2399, 0.0
        %v2494 = vmax.f32 %v2404, 0.0
        %v2495 = vmax.f32 %v2407, 0.0
        %v2496 = vmax.f32 %v2412, 0.0
        %v2497 = vmax.f32 %v2415, 0.0
        %v2498 = vmax.f32 %v2420, 0.0
        %v2499 = vmax.f32 %v2423, 0.0
        %v2500 = vmax.f32 %v2428, 0.0
        %v2501 = vmax.f32 %v2431, 0.0
        %v2502 = vmax.f32 %v2436, 0.0
        %v2503 = vmax.f32 %v2439, 0.0
        %v2504 = vmax.f32 %v2444, 0.0
        %v2505 = vmax.f32 %v2447, 0.0
        %v2506 = vmax.f32 %v2452, 0.0
        %v2507 = vmax.f32 %v2455, 0.0
        %v2508 = vmax.f32 %v2460, 0.0
        %v2509 = vmax.f32 %v2463, 0.0
        %v2510 = vmax.f32 %v2468, 0.0
        %v2511 = vmax.f32 %v2471, 0.0
        %v2512 = vmax.f32 %v2476, 0.0
        %v2513 = vmax.f32 %v2479, 0.0
        %v2514 = vpack.c.bf16 %v1509, %v1508
        %v2515 = vpack.c.bf16 %v1511, %v1510
        %v2516 = vpack.c.bf16 %v1513, %v1512
        %v2517 = vpack.c.bf16 %v1515, %v1514
        %v2518 = vpack.c.bf16 %v1517, %v1516
        %v2519 = vpack.c.bf16 %v1519, %v1518
        %v2520 = vpack.c.bf16 %v1521, %v1520
        %v2521 = vpack.c.bf16 %v1523, %v1522
        %v2522 = vpack.c.bf16 %v1525, %v1524
        %v2523 = vpack.c.bf16 %v1527, %v1526
        %v2524 = vpack.c.bf16 %v1529, %v1528
        %v2525 = vpack.c.bf16 %v1531, %v1530
        %v2526 = vpack.c.bf16 %v1533, %v1532
        %v2527 = vpack.c.bf16 %v1535, %v1534
        %v2528 = vpack.c.bf16 %v1537, %v1536
        %v2529 = vpack.c.bf16 %v1539, %v1538
        %v2530 = vpack.c.bf16 %v2483, %v2482
        %v2531 = vpack.c.bf16 %v2485, %v2484
        %v2532 = vpack.c.bf16 %v2487, %v2486
        %v2533 = vpack.c.bf16 %v2489, %v2488
        %v2534 = vpack.c.bf16 %v2491, %v2490
        %v2535 = vpack.c.bf16 %v2493, %v2492
        %v2536 = vpack.c.bf16 %v2495, %v2494
        %v2537 = vpack.c.bf16 %v2497, %v2496
        %v2538 = vpack.c.bf16 %v2499, %v2498
        %v2539 = vpack.c.bf16 %v2501, %v2500
        %v2540 = vpack.c.bf16 %v2503, %v2502
        %v2541 = vpack.c.bf16 %v2505, %v2504
        %v2542 = vpack.c.bf16 %v2507, %v2506
        %v2543 = vpack.c.bf16 %v2509, %v2508
        %v2544 = vpack.c.bf16 %v2511, %v2510
        %v2545 = vpack.c.bf16 %v2513, %v2512
        %v2546 = vld [vmem:[%s12] sm:$0xff]
        %v2547 = vld [vmem:[%s12 + $0x8] sm:$0xf]
        %v2548 = vld [vmem:[%s12 + $0xc] sm:$0xff]
        %v2549 = vld [vmem:[%s12 + $0x14] sm:$0xf]
        %v2550 = vld [vmem:[%s12 + $0x18] sm:$0xff]
        %v2551 = vld [vmem:[%s12 + $0x20] sm:$0xf]
        %v2552 = vld [vmem:[%s12 + $0x24] sm:$0xff]
        %v2553 = vld [vmem:[%s12 + $0x2c] sm:$0xf]
        %v2554 = vld [vmem:[%s12 + $0x30] sm:$0xff]
        %v2555 = vld [vmem:[%s12 + $0x38] sm:$0xf]
        %v2556 = vld [vmem:[%s12 + $0x3c] sm:$0xff]
        %v2557 = vld [vmem:[%s12 + $0x44] sm:$0xf]
        %v2558 = vld [vmem:[%s12 + $0x48] sm:$0xff]
        %v2559 = vld [vmem:[%s12 + $0x50] sm:$0xf]
        %v2560 = vld [vmem:[%s12 + $0x54] sm:$0xff]
        %v2561 = vld [vmem:[%s12 + $0x5c] sm:$0xf]
        %v2562 = vld [vmem:[%s12 + $0x60] sm:$0xff]
        %v2563 = vld [vmem:[%s12 + $0x68] sm:$0xf]
        %v2564 = vld [vmem:[%s12 + $0x6c] sm:$0xff]
        %v2565 = vld [vmem:[%s12 + $0x74] sm:$0xf]
        %v2566 = vld [vmem:[%s12 + $0x78] sm:$0xff]
        %v2567 = vld [vmem:[%s12 + $0x80] sm:$0xf]
        %v2568 = vld [vmem:[%s12 + $0x84] sm:$0xff]
        %v2569 = vld [vmem:[%s12 + $0x8c] sm:$0xf]
        %v2570 = vld [vmem:[%s12 + $0x90] sm:$0xff]
        %v2571 = vld [vmem:[%s12 + $0x98] sm:$0xf]
        %v2572 = vld [vmem:[%s12 + $0x9c] sm:$0xff]
        %v2573 = vld [vmem:[%s12 + $0xa4] sm:$0xf]
        %v2574 = vld [vmem:[%s12 + $0xa8] sm:$0xff]
        %v2575 = vld [vmem:[%s12 + $0xb0] sm:$0xf]
        %v2576 = vld [vmem:[%s12 + $0xb4] sm:$0xff]
        %v2577 = vld [vmem:[%s12 + $0xbc] sm:$0xf]
        %v2610 = vunpack.c.l.b16 %v2546
        %v2611 = vunpack.c.h.b16 %v2546
        %v2612 = vunpack.c.l.b16 %v2547
        %v2613 = vunpack.c.l.b16 %v2548
        %v2614 = vunpack.c.h.b16 %v2548
        %v2615 = vunpack.c.l.b16 %v2549
        %v2616 = vunpack.c.l.b16 %v2550
        %v2617 = vunpack.c.h.b16 %v2550
        %v2618 = vunpack.c.l.b16 %v2551
        %v2619 = vunpack.c.l.b16 %v2552
        %v2620 = vunpack.c.h.b16 %v2552
        %v2621 = vunpack.c.l.b16 %v2553
        %v2622 = vunpack.c.l.b16 %v2554
        %v2623 = vunpack.c.h.b16 %v2554
        %v2624 = vunpack.c.l.b16 %v2555
        %v2625 = vunpack.c.l.b16 %v2556
        %v2626 = vunpack.c.h.b16 %v2556
        %v2627 = vunpack.c.l.b16 %v2557
        %v2628 = vunpack.c.l.b16 %v2558
        %v2629 = vunpack.c.h.b16 %v2558
        %v2630 = vunpack.c.l.b16 %v2559
        %v2631 = vunpack.c.l.b16 %v2560
        %v2632 = vunpack.c.h.b16 %v2560
        %v2633 = vunpack.c.l.b16 %v2561
        %v2634 = vunpack.c.l.b16 %v2562
        %v2635 = vunpack.c.h.b16 %v2562
        %v2636 = vunpack.c.l.b16 %v2563
        %v2637 = vunpack.c.l.b16 %v2564
        %v2638 = vunpack.c.h.b16 %v2564
        %v2639 = vunpack.c.l.b16 %v2565
        %v2640 = vunpack.c.l.b16 %v2566
        %v2641 = vunpack.c.h.b16 %v2566
        %v2642 = vunpack.c.l.b16 %v2567
        %v2643 = vunpack.c.l.b16 %v2568
        %v2644 = vunpack.c.h.b16 %v2568
        %v2645 = vunpack.c.l.b16 %v2569
        %v2646 = vunpack.c.l.b16 %v2570
        %v2647 = vunpack.c.h.b16 %v2570
        %v2648 = vunpack.c.l.b16 %v2571
        %v2649 = vunpack.c.l.b16 %v2572
        %v2650 = vunpack.c.h.b16 %v2572
        %v2651 = vunpack.c.l.b16 %v2573
        %v2652 = vunpack.c.l.b16 %v2574
        %v2653 = vunpack.c.h.b16 %v2574
        %v2654 = vunpack.c.l.b16 %v2575
        %v2655 = vunpack.c.l.b16 %v2576
        %v2656 = vunpack.c.h.b16 %v2576
        %v2657 = vunpack.c.l.b16 %v2577
        %v2658 = vpack.c.b16 %v2613, %v2610
        %v2659 = vpack.c.b16 %v2614, %v2611
        %v2660 = vpack.c.b16 %v2615, %v2612
        %v2661 = vpack.c.b16 %v2619, %v2616
        %v2662 = vpack.c.b16 %v2620, %v2617
        %v2663 = vpack.c.b16 %v2621, %v2618
        %v2664 = vpack.c.b16 %v2625, %v2622
        %v2665 = vpack.c.b16 %v2626, %v2623
        %v2666 = vpack.c.b16 %v2627, %v2624
        %v2667 = vpack.c.b16 %v2631, %v2628
        %v2668 = vpack.c.b16 %v2632, %v2629
        %v2669 = vpack.c.b16 %v2633, %v2630
        %v2670 = vpack.c.b16 %v2637, %v2634
        %v2671 = vpack.c.b16 %v2638, %v2635
        %v2672 = vpack.c.b16 %v2639, %v2636
        %v2673 = vpack.c.b16 %v2643, %v2640
        %v2674 = vpack.c.b16 %v2644, %v2641
        %v2675 = vpack.c.b16 %v2645, %v2642
        %v2676 = vpack.c.b16 %v2649, %v2646
        %v2677 = vpack.c.b16 %v2650, %v2647
        %v2678 = vpack.c.b16 %v2651, %v2648
        %v2679 = vpack.c.b16 %v2655, %v2652
        %v2680 = vpack.c.b16 %v2656, %v2653
        %v2681 = vpack.c.b16 %v2657, %v2654
        %2706 = vmatprep.subr.bf16.mxu0 %v2659
        %2707 = vmatpush1.bf16.msra.mxu0 %v2658
        %2708 = vmatprep.subr.bf16.mxu0 %v2662
        %2709 = vmatpush1.bf16.msra.mxu0 %v2661
        %2710 = vmatprep.subr.bf16.mxu0 %v2665
        %2711 = vmatpush1.bf16.msra.mxu0 %v2664
        %2712 = vmatprep.subr.bf16.mxu0 %v2668
        %2713 = vmatpush1.bf16.msra.mxu0 %v2667
        %2714 = vmatprep.subr.bf16.mxu0 %v2671
        %2715 = vmatpush1.bf16.msra.mxu0 %v2670
        %2716 = vmatprep.subr.bf16.mxu0 %v2674
        %2717 = vmatpush1.bf16.msra.mxu0 %v2673
        %2718 = vmatprep.subr.bf16.mxu0 %v2677
        %2719 = vmatpush1.bf16.msra.mxu0 %v2676
        %2720 = vmatprep.subr.bf16.mxu0 %v2680
        %2721 = vmatpush1.bf16.msra.mxu0 %v2679
        %2722 = vmatprep.subr.bf16.mxu0 0
        %2723 = vmatpush1.bf16.msra.mxu0 0
        %2724 = vmatprep.subr.bf16.mxu0 0
        %2725 = vmatpush1.bf16.msra.mxu0 0
        %2726 = vmatprep.subr.bf16.mxu0 0
        %2727 = vmatpush1.bf16.msra.mxu0 0
        %2728 = vmatprep.subr.bf16.mxu0 0
        %2729 = vmatpush1.bf16.msra.mxu0 0
        %2730 = vmatprep.subr.bf16.mxu0 0
        %2731 = vmatpush1.bf16.msra.mxu0 0
        %2732 = vmatprep.subr.bf16.mxu0 0
        %2733 = vmatpush1.bf16.msra.mxu0 0
        %2734 = vmatprep.subr.bf16.mxu0 0
        %2735 = vmatpush1.bf16.msra.mxu0 0
        %2736 = vmatprep.subr.bf16.mxu0 0
        %2737 = vmatpush1.bf16.msra.mxu0 0
        %2738 = vmatprep.mubr.bf16.mxu0 0
        %2739 = vmatmul.mubr.bf16.gmra.mrb[0].mxu0 %v2514
        %v2740 = vpop.f32.mrb[0].mxu0
        %v2741 = vadd.f32 0.0, %v2740
        %v2742 = vpop.f32.mrb[0].mxu0
        %v2743 = vadd.f32 0.0, %v2742
        %v2744 = vpop.f32.mrb[0].mxu0
        %v2745 = vadd.f32 0.0, %v2744
        %v2746 = vpop.f32.mrb[0].mxu0
        %v2747 = vadd.f32 0.0, %v2746
        %2748 = vmatprep.mubr.bf16.mxu0 0
        %2749 = vmatmul.mubr.bf16.gmra.mrb[0].mxu0 %v2515
        %v2750 = vpop.f32.mrb[0].mxu0
        %v2751 = vadd.f32 0.0, %v2750
        %v2752 = vpop.f32.mrb[0].mxu0
        %v2753 = vadd.f32 0.0, %v2752
        %v2754 = vpop.f32.mrb[0].mxu0
        %v2755 = vadd.f32 0.0, %v2754
        %v2756 = vpop.f32.mrb[0].mxu0
        %v2757 = vadd.f32 0.0, %v2756
        %2758 = vmatprep.mubr.bf16.mxu0 0
        %2759 = vmatmul.mubr.bf16.gmra.mrb[0].mxu0 %v2516
        %v2760 = vpop.f32.mrb[0].mxu0
        %v2761 = vadd.f32 0.0, %v2760
        %v2762 = vpop.f32.mrb[0].mxu0
        %v2763 = vadd.f32 0.0, %v2762
        %v2764 = vpop.f32.mrb[0].mxu0
        %v2765 = vadd.f32 0.0, %v2764
        %v2766 = vpop.f32.mrb[0].mxu0
        %v2767 = vadd.f32 0.0, %v2766
        %2768 = vmatprep.mubr.bf16.mxu0 0
        %2769 = vmatmul.mubr.bf16.gmra.mrb[0].mxu0 %v2517
        %v2770 = vpop.f32.mrb[0].mxu0
        %v2771 = vadd.f32 0.0, %v2770
        %v2772 = vpop.f32.mrb[0].mxu0
        %v2773 = vadd.f32 0.0, %v2772
        %v2774 = vpop.f32.mrb[0].mxu0
        %v2775 = vadd.f32 0.0, %v2774
        %v2776 = vpop.f32.mrb[0].mxu0
        %v2777 = vadd.f32 0.0, %v2776
        %2778 = vmatprep.mubr.bf16.mxu0 0
        %2779 = vmatmul.mubr.bf16.gmra.mrb[0].mxu0 %v2518
        %v2780 = vpop.f32.mrb[0].mxu0
        %v2781 = vadd.f32 0.0, %v2780
        %v2782 = vpop.f32.mrb[0].mxu0
        %v2783 = vadd.f32 0.0, %v2782
        %v2784 = vpop.f32.mrb[0].mxu0
        %v2785 = vadd.f32 0.0, %v2784
        %v2786 = vpop.f32.mrb[0].mxu0
        %v2787 = vadd.f32 0.0, %v2786
        %2788 = vmatprep.mubr.bf16.mxu0 0
        %2789 = vmatmul.mubr.bf16.gmra.mrb[0].mxu0 %v2519
        %v2790 = vpop.f32.mrb[0].mxu0
        %v2791 = vadd.f32 0.0, %v2790
        %v2792 = vpop.f32.mrb[0].mxu0
        %v2793 = vadd.f32 0.0, %v2792
        %v2794 = vpop.f32.mrb[0].mxu0
        %v2795 = vadd.f32 0.0, %v2794
        %v2796 = vpop.f32.mrb[0].mxu0
        %v2797 = vadd.f32 0.0, %v2796
        %2798 = vmatprep.mubr.bf16.mxu0 0
        %2799 = vmatmul.mubr.bf16.gmra.mrb[0].mxu0 %v2520
        %v2800 = vpop.f32.mrb[0].mxu0
        %v2801 = vadd.f32 0.0, %v2800
        %v2802 = vpop.f32.mrb[0].mxu0
        %v2803 = vadd.f32 0.0, %v2802
        %v2804 = vpop.f32.mrb[0].mxu0
        %v2805 = vadd.f32 0.0, %v2804
        %v2806 = vpop.f32.mrb[0].mxu0
        %v2807 = vadd.f32 0.0, %v2806
        %2808 = vmatprep.mubr.bf16.mxu0 0
        %2809 = vmatmul.mubr.bf16.gmra.mrb[0].mxu0 %v2521
        %v2810 = vpop.f32.mrb[0].mxu0
        %v2811 = vadd.f32 0.0, %v2810
        %v2812 = vpop.f32.mrb[0].mxu0
        %v2813 = vadd.f32 0.0, %v2812
        %v2814 = vpop.f32.mrb[0].mxu0
        %v2815 = vadd.f32 0.0, %v2814
        %v2816 = vpop.f32.mrb[0].mxu0
        %v2817 = vadd.f32 0.0, %v2816
        %2818 = vmatprep.mubr.bf16.mxu0 0
        %2819 = vmatmul.mubr.bf16.gmra.mrb[0].mxu0 %v2522
        %v2820 = vpop.f32.mrb[0].mxu0
        %v2821 = vadd.f32 0.0, %v2820
        %v2822 = vpop.f32.mrb[0].mxu0
        %v2823 = vadd.f32 0.0, %v2822
        %v2824 = vpop.f32.mrb[0].mxu0
        %v2825 = vadd.f32 0.0, %v2824
        %v2826 = vpop.f32.mrb[0].mxu0
        %v2827 = vadd.f32 0.0, %v2826
        %2828 = vmatprep.mubr.bf16.mxu0 0
        %2829 = vmatmul.mubr.bf16.gmra.mrb[0].mxu0 %v2523
        %v2830 = vpop.f32.mrb[0].mxu0
        %v2831 = vadd.f32 0.0, %v2830
        %v2832 = vpop.f32.mrb[0].mxu0
        %v2833 = vadd.f32 0.0, %v2832
        %v2834 = vpop.f32.mrb[0].mxu0
        %v2835 = vadd.f32 0.0, %v2834
        %v2836 = vpop.f32.mrb[0].mxu0
        %v2837 = vadd.f32 0.0, %v2836
        %2838 = vmatprep.mubr.bf16.mxu0 0
        %2839 = vmatmul.mubr.bf16.gmra.mrb[0].mxu0 %v2524
        %v2840 = vpop.f32.mrb[0].mxu0
        %v2841 = vadd.f32 0.0, %v2840
        %v2842 = vpop.f32.mrb[0].mxu0
        %v2843 = vadd.f32 0.0, %v2842
        %v2844 = vpop.f32.mrb[0].mxu0
        %v2845 = vadd.f32 0.0, %v2844
        %v2846 = vpop.f32.mrb[0].mxu0
        %v2847 = vadd.f32 0.0, %v2846
        %2848 = vmatprep.mubr.bf16.mxu0 0
        %2849 = vmatmul.mubr.bf16.gmra.mrb[0].mxu0 %v2525
        %v2850 = vpop.f32.mrb[0].mxu0
        %v2851 = vadd.f32 0.0, %v2850
        %v2852 = vpop.f32.mrb[0].mxu0
        %v2853 = vadd.f32 0.0, %v2852
        %v2854 = vpop.f32.mrb[0].mxu0
        %v2855 = vadd.f32 0.0, %v2854
        %v2856 = vpop.f32.mrb[0].mxu0
        %v2857 = vadd.f32 0.0, %v2856
        %2858 = vmatprep.mubr.bf16.mxu0 0
        %2859 = vmatmul.mubr.bf16.gmra.mrb[0].mxu0 %v2526
        %v2860 = vpop.f32.mrb[0].mxu0
        %v2861 = vadd.f32 0.0, %v2860
        %v2862 = vpop.f32.mrb[0].mxu0
        %v2863 = vadd.f32 0.0, %v2862
        %v2864 = vpop.f32.mrb[0].mxu0
        %v2865 = vadd.f32 0.0, %v2864
        %v2866 = vpop.f32.mrb[0].mxu0
        %v2867 = vadd.f32 0.0, %v2866
        %2868 = vmatprep.mubr.bf16.mxu0 0
        %2869 = vmatmul.mubr.bf16.gmra.mrb[0].mxu0 %v2527
        %v2870 = vpop.f32.mrb[0].mxu0
        %v2871 = vadd.f32 0.0, %v2870
        %v2872 = vpop.f32.mrb[0].mxu0
        %v2873 = vadd.f32 0.0, %v2872
        %v2874 = vpop.f32.mrb[0].mxu0
        %v2875 = vadd.f32 0.0, %v2874
        %v2876 = vpop.f32.mrb[0].mxu0
        %v2877 = vadd.f32 0.0, %v2876
        %2878 = vmatprep.mubr.bf16.mxu0 0
        %2879 = vmatmul.mubr.bf16.gmra.mrb[0].mxu0 %v2528
        %v2880 = vpop.f32.mrb[0].mxu0
        %v2881 = vadd.f32 0.0, %v2880
        %v2882 = vpop.f32.mrb[0].mxu0
        %v2883 = vadd.f32 0.0, %v2882
        %v2884 = vpop.f32.mrb[0].mxu0
        %v2885 = vadd.f32 0.0, %v2884
        %v2886 = vpop.f32.mrb[0].mxu0
        %v2887 = vadd.f32 0.0, %v2886
        %2888 = vmatprep.mubr.bf16.mxu0 0
        %2889 = vmatmul.mubr.bf16.gmra.mrb[0].mxu0 %v2529
        %v2890 = vpop.f32.mrb[0].mxu0
        %v2891 = vadd.f32 0.0, %v2890
        %v2892 = vpop.f32.mrb[0].mxu0
        %v2893 = vadd.f32 0.0, %v2892
        %v2894 = vpop.f32.mrb[0].mxu0
        %v2895 = vadd.f32 0.0, %v2894
        %v2896 = vpop.f32.mrb[0].mxu0
        %v2897 = vadd.f32 0.0, %v2896
        %2898 = vdwg.mxu0
        %2899 = vmatprep.subr.bf16.mxu0 0
        %2900 = vmatpush1.bf16.msra.mxu0 %v2660
        %2901 = vmatprep.subr.bf16.mxu0 0
        %2902 = vmatpush1.bf16.msra.mxu0 %v2663
        %2903 = vmatprep.subr.bf16.mxu0 0
        %2904 = vmatpush1.bf16.msra.mxu0 %v2666
        %2905 = vmatprep.subr.bf16.mxu0 0
        %2906 = vmatpush1.bf16.msra.mxu0 %v2669
        %2907 = vmatprep.subr.bf16.mxu0 0
        %2908 = vmatpush1.bf16.msra.mxu0 %v2672
        %2909 = vmatprep.subr.bf16.mxu0 0
        %2910 = vmatpush1.bf16.msra.mxu0 %v2675
        %2911 = vmatprep.subr.bf16.mxu0 0
        %2912 = vmatpush1.bf16.msra.mxu0 %v2678
        %2913 = vmatprep.subr.bf16.mxu0 0
        %2914 = vmatpush1.bf16.msra.mxu0 %v2681
        %2915 = vmatprep.subr.bf16.mxu0 0
        %2916 = vmatpush1.bf16.msra.mxu0 0
        %2917 = vmatprep.subr.bf16.mxu0 0
        %2918 = vmatpush1.bf16.msra.mxu0 0
        %2919 = vmatprep.subr.bf16.mxu0 0
        %2920 = vmatpush1.bf16.msra.mxu0 0
        %2921 = vmatprep.subr.bf16.mxu0 0
        %2922 = vmatpush1.bf16.msra.mxu0 0
        %2923 = vmatprep.subr.bf16.mxu0 0
        %2924 = vmatpush1.bf16.msra.mxu0 0
        %2925 = vmatprep.subr.bf16.mxu0 0
        %2926 = vmatpush1.bf16.msra.mxu0 0
        %2927 = vmatprep.subr.bf16.mxu0 0
        %2928 = vmatpush1.bf16.msra.mxu0 0
        %2929 = vmatprep.subr.bf16.mxu0 0
        %2930 = vmatpush1.bf16.msra.mxu0 0
        %2931 = vmatprep.mubr.bf16.mxu0 0
        %2932 = vmatmul.mubr.bf16.gmra.mrb[0].mxu0 %v2514
        %v2933 = vpop.f32.mrb[0].mxu0
        %v2934 = vadd.f32 0.0, %v2933
        %v2935 = vpop.f32.mrb[0].mxu0
        %v2936 = vpop.f32.mrb[0].mxu0
        %v2937 = vadd.f32 0.0, %v2936
        %v2938 = vpop.f32.mrb[0].mxu0
        %2939 = vmatprep.mubr.bf16.mxu0 0
        %2940 = vmatmul.mubr.bf16.gmra.mrb[0].mxu0 %v2515
        %v2941 = vpop.f32.mrb[0].mxu0
        %v2942 = vadd.f32 0.0, %v2941
        %v2943 = vpop.f32.mrb[0].mxu0
        %v2944 = vpop.f32.mrb[0].mxu0
        %v2945 = vadd.f32 0.0, %v2944
        %v2946 = vpop.f32.mrb[0].mxu0
        %2947 = vmatprep.mubr.bf16.mxu0 0
        %2948 = vmatmul.mubr.bf16.gmra.mrb[0].mxu0 %v2516
        %v2949 = vpop.f32.mrb[0].mxu0
        %v2950 = vadd.f32 0.0, %v2949
        %v2951 = vpop.f32.mrb[0].mxu0
        %v2952 = vpop.f32.mrb[0].mxu0
        %v2953 = vadd.f32 0.0, %v2952
        %v2954 = vpop.f32.mrb[0].mxu0
        %2955 = vmatprep.mubr.bf16.mxu0 0
        %2956 = vmatmul.mubr.bf16.gmra.mrb[0].mxu0 %v2517
        %v2957 = vpop.f32.mrb[0].mxu0
        %v2958 = vadd.f32 0.0, %v2957
        %v2959 = vpop.f32.mrb[0].mxu0
        %v2960 = vpop.f32.mrb[0].mxu0
        %v2961 = vadd.f32 0.0, %v2960
        %v2962 = vpop.f32.mrb[0].mxu0
        %2963 = vmatprep.mubr.bf16.mxu0 0
        %2964 = vmatmul.mubr.bf16.gmra.mrb[0].mxu0 %v2518
        %v2965 = vpop.f32.mrb[0].mxu0
        %v2966 = vadd.f32 0.0, %v2965
        %v2967 = vpop.f32.mrb[0].mxu0
        %v2968 = vpop.f32.mrb[0].mxu0
        %v2969 = vadd.f32 0.0, %v2968
        %v2970 = vpop.f32.mrb[0].mxu0
        %2971 = vmatprep.mubr.bf16.mxu0 0
        %2972 = vmatmul.mubr.bf16.gmra.mrb[0].mxu0 %v2519
        %v2973 = vpop.f32.mrb[0].mxu0
        %v2974 = vadd.f32 0.0, %v2973
        %v2975 = vpop.f32.mrb[0].mxu0
        %v2976 = vpop.f32.mrb[0].mxu0
        %v2977 = vadd.f32 0.0, %v2976
        %v2978 = vpop.f32.mrb[0].mxu0
        %2979 = vmatprep.mubr.bf16.mxu0 0
        %2980 = vmatmul.mubr.bf16.gmra.mrb[0].mxu0 %v2520
        %v2981 = vpop.f32.mrb[0].mxu0
        %v2982 = vadd.f32 0.0, %v2981
        %v2983 = vpop.f32.mrb[0].mxu0
        %v2984 = vpop.f32.mrb[0].mxu0
        %v2985 = vadd.f32 0.0, %v2984
        %v2986 = vpop.f32.mrb[0].mxu0
        %2987 = vmatprep.mubr.bf16.mxu0 0
        %2988 = vmatmul.mubr.bf16.gmra.mrb[0].mxu0 %v2521
        %v2989 = vpop.f32.mrb[0].mxu0
        %v2990 = vadd.f32 0.0, %v2989
        %v2991 = vpop.f32.mrb[0].mxu0
        %v2992 = vpop.f32.mrb[0].mxu0
        %v2993 = vadd.f32 0.0, %v2992
        %v2994 = vpop.f32.mrb[0].mxu0
        %2995 = vmatprep.mubr.bf16.mxu0 0
        %2996 = vmatmul.mubr.bf16.gmra.mrb[0].mxu0 %v2522
        %v2997 = vpop.f32.mrb[0].mxu0
        %v2998 = vadd.f32 0.0, %v2997
        %v2999 = vpop.f32.mrb[0].mxu0
        %v3000 = vpop.f32.mrb[0].mxu0
        %v3001 = vadd.f32 0.0, %v3000
        %v3002 = vpop.f32.mrb[0].mxu0
        %3003 = vmatprep.mubr.bf16.mxu0 0
        %3004 = vmatmul.mubr.bf16.gmra.mrb[0].mxu0 %v2523
        %v3005 = vpop.f32.mrb[0].mxu0
        %v3006 = vadd.f32 0.0, %v3005
        %v3007 = vpop.f32.mrb[0].mxu0
        %v3008 = vpop.f32.mrb[0].mxu0
        %v3009 = vadd.f32 0.0, %v3008
        %v3010 = vpop.f32.mrb[0].mxu0
        %3011 = vmatprep.mubr.bf16.mxu0 0
        %3012 = vmatmul.mubr.bf16.gmra.mrb[0].mxu0 %v2524
        %v3013 = vpop.f32.mrb[0].mxu0
        %v3014 = vadd.f32 0.0, %v3013
        %v3015 = vpop.f32.mrb[0].mxu0
        %v3016 = vpop.f32.mrb[0].mxu0
        %v3017 = vadd.f32 0.0, %v3016
        %v3018 = vpop.f32.mrb[0].mxu0
        %3019 = vmatprep.mubr.bf16.mxu0 0
        %3020 = vmatmul.mubr.bf16.gmra.mrb[0].mxu0 %v2525
        %v3021 = vpop.f32.mrb[0].mxu0
        %v3022 = vadd.f32 0.0, %v3021
        %v3023 = vpop.f32.mrb[0].mxu0
        %v3024 = vpop.f32.mrb[0].mxu0
        %v3025 = vadd.f32 0.0, %v3024
        %v3026 = vpop.f32.mrb[0].mxu0
        %3027 = vmatprep.mubr.bf16.mxu0 0
        %3028 = vmatmul.mubr.bf16.gmra.mrb[0].mxu0 %v2526
        %v3029 = vpop.f32.mrb[0].mxu0
        %v3030 = vadd.f32 0.0, %v3029
        %v3031 = vpop.f32.mrb[0].mxu0
        %v3032 = vpop.f32.mrb[0].mxu0
        %v3033 = vadd.f32 0.0, %v3032
        %v3034 = vpop.f32.mrb[0].mxu0
        %3035 = vmatprep.mubr.bf16.mxu0 0
        %3036 = vmatmul.mubr.bf16.gmra.mrb[0].mxu0 %v2527
        %v3037 = vpop.f32.mrb[0].mxu0
        %v3038 = vadd.f32 0.0, %v3037
        %v3039 = vpop.f32.mrb[0].mxu0
        %v3040 = vpop.f32.mrb[0].mxu0
        %v3041 = vadd.f32 0.0, %v3040
        %v3042 = vpop.f32.mrb[0].mxu0
        %3043 = vmatprep.mubr.bf16.mxu0 0
        %3044 = vmatmul.mubr.bf16.gmra.mrb[0].mxu0 %v2528
        %v3045 = vpop.f32.mrb[0].mxu0
        %v3046 = vadd.f32 0.0, %v3045
        %v3047 = vpop.f32.mrb[0].mxu0
        %v3048 = vpop.f32.mrb[0].mxu0
        %v3049 = vadd.f32 0.0, %v3048
        %v3050 = vpop.f32.mrb[0].mxu0
        %3051 = vmatprep.mubr.bf16.mxu0 0
        %3052 = vmatmul.mubr.bf16.gmra.mrb[0].mxu0 %v2529
        %v3053 = vpop.f32.mrb[0].mxu0
        %v3054 = vadd.f32 0.0, %v3053
        %v3055 = vpop.f32.mrb[0].mxu0
        %v3056 = vpop.f32.mrb[0].mxu0
        %v3057 = vadd.f32 0.0, %v3056
        %v3058 = vpop.f32.mrb[0].mxu0
        %3059 = vdwg.mxu0
        %v3060 = vld [vmem:[%s13] sm:$0xf]
        %v3061 = vld [vmem:[%s13 + $0x4] sm:$0xf]
        %v3062 = vld [vmem:[%s13 + $0x8] sm:$0xf]
        %v3063 = vld [vmem:[%s13 + $0xc] sm:$0xf]
        %v3064 = vld [vmem:[%s13 + $0x10] sm:$0xf]
        %v3065 = vld [vmem:[%s13 + $0x14] sm:$0xf]
        %v3066 = vld [vmem:[%s13 + $0x18] sm:$0xf]
        %v3067 = vld [vmem:[%s13 + $0x1c] sm:$0xf]
        %v3068 = vld [vmem:[%s13 + $0x20] sm:$0xf]
        %v3069 = vld [vmem:[%s13 + $0x24] sm:$0xf]
        %v3070 = vld [vmem:[%s13 + $0x28] sm:$0xf]
        %v3071 = vld [vmem:[%s13 + $0x2c] sm:$0xf]
        %v3072 = vld [vmem:[%s13 + $0x30] sm:$0xf]
        %v3073 = vld [vmem:[%s13 + $0x34] sm:$0xf]
        %v3074 = vld [vmem:[%s13 + $0x38] sm:$0xf]
        %v3075 = vld [vmem:[%s13 + $0x3c] sm:$0xf]
        %v3092 = vunpack.c.l.b16 %v3060
        %v3093 = vunpack.c.l.b16 %v3061
        %v3094 = vunpack.c.l.b16 %v3062
        %v3095 = vunpack.c.l.b16 %v3063
        %v3096 = vunpack.c.l.b16 %v3064
        %v3097 = vunpack.c.l.b16 %v3065
        %v3098 = vunpack.c.l.b16 %v3066
        %v3099 = vunpack.c.l.b16 %v3067
        %v3100 = vunpack.c.l.b16 %v3068
        %v3101 = vunpack.c.l.b16 %v3069
        %v3102 = vunpack.c.l.b16 %v3070
        %v3103 = vunpack.c.l.b16 %v3071
        %v3104 = vunpack.c.l.b16 %v3072
        %v3105 = vunpack.c.l.b16 %v3073
        %v3106 = vunpack.c.l.b16 %v3074
        %v3107 = vunpack.c.l.b16 %v3075
        %v3108 = vpack.c.b16 %v3093, %v3092
        %v3109 = vpack.c.b16 %v3095, %v3094
        %v3110 = vpack.c.b16 %v3097, %v3096
        %v3111 = vpack.c.b16 %v3099, %v3098
        %v3112 = vpack.c.b16 %v3101, %v3100
        %v3113 = vpack.c.b16 %v3103, %v3102
        %v3114 = vpack.c.b16 %v3105, %v3104
        %v3115 = vpack.c.b16 %v3107, %v3106
        %3124 = vmatprep.subr.bf16.mxu0 0
        %3125 = vmatpush1.bf16.msra.mxu0 %v3108
        %3126 = vmatprep.subr.bf16.mxu0 0
        %3127 = vmatpush1.bf16.msra.mxu0 %v3109
        %3128 = vmatprep.subr.bf16.mxu0 0
        %3129 = vmatpush1.bf16.msra.mxu0 %v3110
        %3130 = vmatprep.subr.bf16.mxu0 0
        %3131 = vmatpush1.bf16.msra.mxu0 %v3111
        %3132 = vmatprep.subr.bf16.mxu0 0
        %3133 = vmatpush1.bf16.msra.mxu0 %v3112
        %3134 = vmatprep.subr.bf16.mxu0 0
        %3135 = vmatpush1.bf16.msra.mxu0 %v3113
        %3136 = vmatprep.subr.bf16.mxu0 0
        %3137 = vmatpush1.bf16.msra.mxu0 %v3114
        %3138 = vmatprep.subr.bf16.mxu0 0
        %3139 = vmatpush1.bf16.msra.mxu0 %v3115
        %3140 = vmatprep.subr.bf16.mxu0 0
        %3141 = vmatpush1.bf16.msra.mxu0 0
        %3142 = vmatprep.subr.bf16.mxu0 0
        %3143 = vmatpush1.bf16.msra.mxu0 0
        %3144 = vmatprep.subr.bf16.mxu0 0
        %3145 = vmatpush1.bf16.msra.mxu0 0
        %3146 = vmatprep.subr.bf16.mxu0 0
        %3147 = vmatpush1.bf16.msra.mxu0 0
        %3148 = vmatprep.subr.bf16.mxu0 0
        %3149 = vmatpush1.bf16.msra.mxu0 0
        %3150 = vmatprep.subr.bf16.mxu0 0
        %3151 = vmatpush1.bf16.msra.mxu0 0
        %3152 = vmatprep.subr.bf16.mxu0 0
        %3153 = vmatpush1.bf16.msra.mxu0 0
        %3154 = vmatprep.subr.bf16.mxu0 0
        %3155 = vmatpush1.bf16.msra.mxu0 0
        %3156 = vmatprep.mubr.bf16.mxu0 0
        %3157 = vmatmul.mubr.bf16.gmra.mrb[0].mxu0 %v2530
        %v3158 = vpop.f32.mrb[0].mxu0
        %v3159 = vadd.f32 0.0, %v3158
        %v3160 = vpop.f32.mrb[0].mxu0
        %v3161 = vpop.f32.mrb[0].mxu0
        %v3162 = vadd.f32 0.0, %v3161
        %v3163 = vpop.f32.mrb[0].mxu0
        %3164 = vmatprep.mubr.bf16.mxu0 0
        %3165 = vmatmul.mubr.bf16.gmra.mrb[0].mxu0 %v2531
        %v3166 = vpop.f32.mrb[0].mxu0
        %v3167 = vadd.f32 0.0, %v3166
        %v3168 = vpop.f32.mrb[0].mxu0
        %v3169 = vpop.f32.mrb[0].mxu0
        %v3170 = vadd.f32 0.0, %v3169
        %v3171 = vpop.f32.mrb[0].mxu0
        %3172 = vmatprep.mubr.bf16.mxu0 0
        %3173 = vmatmul.mubr.bf16.gmra.mrb[0].mxu0 %v2532
        %v3174 = vpop.f32.mrb[0].mxu0
        %v3175 = vadd.f32 0.0, %v3174
        %v3176 = vpop.f32.mrb[0].mxu0
        %v3177 = vpop.f32.mrb[0].mxu0
        %v3178 = vadd.f32 0.0, %v3177
        %v3179 = vpop.f32.mrb[0].mxu0
        %3180 = vmatprep.mubr.bf16.mxu0 0
        %3181 = vmatmul.mubr.bf16.gmra.mrb[0].mxu0 %v2533
        %v3182 = vpop.f32.mrb[0].mxu0
        %v3183 = vadd.f32 0.0, %v3182
        %v3184 = vpop.f32.mrb[0].mxu0
        %v3185 = vpop.f32.mrb[0].mxu0
        %v3186 = vadd.f32 0.0, %v3185
        %v3187 = vpop.f32.mrb[0].mxu0
        %3188 = vmatprep.mubr.bf16.mxu0 0
        %3189 = vmatmul.mubr.bf16.gmra.mrb[0].mxu0 %v2534
        %v3190 = vpop.f32.mrb[0].mxu0
        %v3191 = vadd.f32 0.0, %v3190
        %v3192 = vpop.f32.mrb[0].mxu0
        %v3193 = vpop.f32.mrb[0].mxu0
        %v3194 = vadd.f32 0.0, %v3193
        %v3195 = vpop.f32.mrb[0].mxu0
        %3196 = vmatprep.mubr.bf16.mxu0 0
        %3197 = vmatmul.mubr.bf16.gmra.mrb[0].mxu0 %v2535
        %v3198 = vpop.f32.mrb[0].mxu0
        %v3199 = vadd.f32 0.0, %v3198
        %v3200 = vpop.f32.mrb[0].mxu0
        %v3201 = vpop.f32.mrb[0].mxu0
        %v3202 = vadd.f32 0.0, %v3201
        %v3203 = vpop.f32.mrb[0].mxu0
        %3204 = vmatprep.mubr.bf16.mxu0 0
        %3205 = vmatmul.mubr.bf16.gmra.mrb[0].mxu0 %v2536
        %v3206 = vpop.f32.mrb[0].mxu0
        %v3207 = vadd.f32 0.0, %v3206
        %v3208 = vpop.f32.mrb[0].mxu0
        %v3209 = vpop.f32.mrb[0].mxu0
        %v3210 = vadd.f32 0.0, %v3209
        %v3211 = vpop.f32.mrb[0].mxu0
        %3212 = vmatprep.mubr.bf16.mxu0 0
        %3213 = vmatmul.mubr.bf16.gmra.mrb[0].mxu0 %v2537
        %v3214 = vpop.f32.mrb[0].mxu0
        %v3215 = vadd.f32 0.0, %v3214
        %v3216 = vpop.f32.mrb[0].mxu0
        %v3217 = vpop.f32.mrb[0].mxu0
        %v3218 = vadd.f32 0.0, %v3217
        %v3219 = vpop.f32.mrb[0].mxu0
        %3220 = vmatprep.mubr.bf16.mxu0 0
        %3221 = vmatmul.mubr.bf16.gmra.mrb[0].mxu0 %v2538
        %v3222 = vpop.f32.mrb[0].mxu0
        %v3223 = vadd.f32 0.0, %v3222
        %v3224 = vpop.f32.mrb[0].mxu0
        %v3225 = vpop.f32.mrb[0].mxu0
        %v3226 = vadd.f32 0.0, %v3225
        %v3227 = vpop.f32.mrb[0].mxu0
        %3228 = vmatprep.mubr.bf16.mxu0 0
        %3229 = vmatmul.mubr.bf16.gmra.mrb[0].mxu0 %v2539
        %v3230 = vpop.f32.mrb[0].mxu0
        %v3231 = vadd.f32 0.0, %v3230
        %v3232 = vpop.f32.mrb[0].mxu0
        %v3233 = vpop.f32.mrb[0].mxu0
        %v3234 = vadd.f32 0.0, %v3233
        %v3235 = vpop.f32.mrb[0].mxu0
        %3236 = vmatprep.mubr.bf16.mxu0 0
        %3237 = vmatmul.mubr.bf16.gmra.mrb[0].mxu0 %v2540
        %v3238 = vpop.f32.mrb[0].mxu0
        %v3239 = vadd.f32 0.0, %v3238
        %v3240 = vpop.f32.mrb[0].mxu0
        %v3241 = vpop.f32.mrb[0].mxu0
        %v3242 = vadd.f32 0.0, %v3241
        %v3243 = vpop.f32.mrb[0].mxu0
        %3244 = vmatprep.mubr.bf16.mxu0 0
        %3245 = vmatmul.mubr.bf16.gmra.mrb[0].mxu0 %v2541
        %v3246 = vpop.f32.mrb[0].mxu0
        %v3247 = vadd.f32 0.0, %v3246
        %v3248 = vpop.f32.mrb[0].mxu0
        %v3249 = vpop.f32.mrb[0].mxu0
        %v3250 = vadd.f32 0.0, %v3249
        %v3251 = vpop.f32.mrb[0].mxu0
        %3252 = vmatprep.mubr.bf16.mxu0 0
        %3253 = vmatmul.mubr.bf16.gmra.mrb[0].mxu0 %v2542
        %v3254 = vpop.f32.mrb[0].mxu0
        %v3255 = vadd.f32 0.0, %v3254
        %v3256 = vpop.f32.mrb[0].mxu0
        %v3257 = vpop.f32.mrb[0].mxu0
        %v3258 = vadd.f32 0.0, %v3257
        %v3259 = vpop.f32.mrb[0].mxu0
        %3260 = vmatprep.mubr.bf16.mxu0 0
        %3261 = vmatmul.mubr.bf16.gmra.mrb[0].mxu0 %v2543
        %v3262 = vpop.f32.mrb[0].mxu0
        %v3263 = vadd.f32 0.0, %v3262
        %v3264 = vpop.f32.mrb[0].mxu0
        %v3265 = vpop.f32.mrb[0].mxu0
        %v3266 = vadd.f32 0.0, %v3265
        %v3267 = vpop.f32.mrb[0].mxu0
        %3268 = vmatprep.mubr.bf16.mxu0 0
        %3269 = vmatmul.mubr.bf16.gmra.mrb[0].mxu0 %v2544
        %v3270 = vpop.f32.mrb[0].mxu0
        %v3271 = vadd.f32 0.0, %v3270
        %v3272 = vpop.f32.mrb[0].mxu0
        %v3273 = vpop.f32.mrb[0].mxu0
        %v3274 = vadd.f32 0.0, %v3273
        %v3275 = vpop.f32.mrb[0].mxu0
        %3276 = vmatprep.mubr.bf16.mxu0 0
        %3277 = vmatmul.mubr.bf16.gmra.mrb[0].mxu0 %v2545
        %v3278 = vpop.f32.mrb[0].mxu0
        %v3279 = vadd.f32 0.0, %v3278
        %v3280 = vpop.f32.mrb[0].mxu0
        %v3281 = vpop.f32.mrb[0].mxu0
        %v3282 = vadd.f32 0.0, %v3281
        %v3283 = vpop.f32.mrb[0].mxu0
        %3284 = vdwg.mxu0
        %v3285 = vadd.f32 %v2934, %v3159
        %v3286 = vadd.f32 %v2937, %v3162
        %v3287 = vadd.f32 %v2942, %v3167
        %v3288 = vadd.f32 %v2945, %v3170
        %v3289 = vadd.f32 %v2950, %v3175
        %v3290 = vadd.f32 %v2953, %v3178
        %v3291 = vadd.f32 %v2958, %v3183
        %v3292 = vadd.f32 %v2961, %v3186
        %v3293 = vadd.f32 %v2966, %v3191
        %v3294 = vadd.f32 %v2969, %v3194
        %v3295 = vadd.f32 %v2974, %v3199
        %v3296 = vadd.f32 %v2977, %v3202
        %v3297 = vadd.f32 %v2982, %v3207
        %v3298 = vadd.f32 %v2985, %v3210
        %v3299 = vadd.f32 %v2990, %v3215
        %v3300 = vadd.f32 %v2993, %v3218
        %v3301 = vadd.f32 %v2998, %v3223
        %v3302 = vadd.f32 %v3001, %v3226
        %v3303 = vadd.f32 %v3006, %v3231
        %v3304 = vadd.f32 %v3009, %v3234
        %v3305 = vadd.f32 %v3014, %v3239
        %v3306 = vadd.f32 %v3017, %v3242
        %v3307 = vadd.f32 %v3022, %v3247
        %v3308 = vadd.f32 %v3025, %v3250
        %v3309 = vadd.f32 %v3030, %v3255
        %v3310 = vadd.f32 %v3033, %v3258
        %v3311 = vadd.f32 %v3038, %v3263
        %v3312 = vadd.f32 %v3041, %v3266
        %v3313 = vadd.f32 %v3046, %v3271
        %v3314 = vadd.f32 %v3049, %v3274
        %v3315 = vadd.f32 %v3054, %v3279
        %v3316 = vadd.f32 %v3057, %v3282
        %v3317 = vld [vmem:[%s14] sm:$0x1]
        %v3319 = vlaneseq
        %v3320 = vshrl.u32 %v3319, 7
        %v3321 = vsub.s32 0, %v3320
        %v3322 = vrot.slane %v3317, %v3321
        %v3324 = vadd.f32 %v3285, %v3322
        %v3325 = vadd.f32 %v3286, %v3322
        %v3326 = vadd.f32 %v3287, %v3322
        %v3327 = vadd.f32 %v3288, %v3322
        %v3328 = vadd.f32 %v3289, %v3322
        %v3329 = vadd.f32 %v3290, %v3322
        %v3330 = vadd.f32 %v3291, %v3322
        %v3331 = vadd.f32 %v3292, %v3322
        %v3332 = vadd.f32 %v3293, %v3322
        %v3333 = vadd.f32 %v3294, %v3322
        %v3334 = vadd.f32 %v3295, %v3322
        %v3335 = vadd.f32 %v3296, %v3322
        %v3336 = vadd.f32 %v3297, %v3322
        %v3337 = vadd.f32 %v3298, %v3322
        %v3338 = vadd.f32 %v3299, %v3322
        %v3339 = vadd.f32 %v3300, %v3322
        %v3340 = vadd.f32 %v3301, %v3322
        %v3341 = vadd.f32 %v3302, %v3322
        %v3342 = vadd.f32 %v3303, %v3322
        %v3343 = vadd.f32 %v3304, %v3322
        %v3344 = vadd.f32 %v3305, %v3322
        %v3345 = vadd.f32 %v3306, %v3322
        %v3346 = vadd.f32 %v3307, %v3322
        %v3347 = vadd.f32 %v3308, %v3322
        %v3348 = vadd.f32 %v3309, %v3322
        %v3349 = vadd.f32 %v3310, %v3322
        %v3350 = vadd.f32 %v3311, %v3322
        %v3351 = vadd.f32 %v3312, %v3322
        %v3352 = vadd.f32 %v3313, %v3322
        %v3353 = vadd.f32 %v3314, %v3322
        %v3354 = vadd.f32 %v3315, %v3322
        %v3355 = vadd.f32 %v3316, %v3322
        %v3356 = vmul.f32 %v2741, %v2482
        %v3357 = vmul.f32 %v2745, %v2483
        %v3358 = vmul.f32 %v2751, %v2484
        %v3359 = vmul.f32 %v2755, %v2485
        %v3360 = vmul.f32 %v2761, %v2486
        %v3361 = vmul.f32 %v2765, %v2487
        %v3362 = vmul.f32 %v2771, %v2488
        %v3363 = vmul.f32 %v2775, %v2489
        %v3364 = vmul.f32 %v2781, %v2490
        %v3365 = vmul.f32 %v2785, %v2491
        %v3366 = vmul.f32 %v2791, %v2492
        %v3367 = vmul.f32 %v2795, %v2493
        %v3368 = vmul.f32 %v2801, %v2494
        %v3369 = vmul.f32 %v2805, %v2495
        %v3370 = vmul.f32 %v2811, %v2496
        %v3371 = vmul.f32 %v2815, %v2497
        %v3372 = vmul.f32 %v2821, %v2498
        %v3373 = vmul.f32 %v2825, %v2499
        %v3374 = vmul.f32 %v2831, %v2500
        %v3375 = vmul.f32 %v2835, %v2501
        %v3376 = vmul.f32 %v2841, %v2502
        %v3377 = vmul.f32 %v2845, %v2503
        %v3378 = vmul.f32 %v2851, %v2504
        %v3379 = vmul.f32 %v2855, %v2505
        %v3380 = vmul.f32 %v2861, %v2506
        %v3381 = vmul.f32 %v2865, %v2507
        %v3382 = vmul.f32 %v2871, %v2508
        %v3383 = vmul.f32 %v2875, %v2509
        %v3384 = vmul.f32 %v2881, %v2510
        %v3385 = vmul.f32 %v2885, %v2511
        %v3386 = vmul.f32 %v2891, %v2512
        %v3387 = vmul.f32 %v2895, %v2513
        %3388 = vadd.xlane.f32.xlu0 %v3356
        %v3389 = vpop.xlane.xlu0 %3388
        %3390 = vadd.xlane.f32.xlu0 %v3357
        %v3391 = vpop.xlane.xlu0 %3390
        %3392 = vadd.xlane.f32.xlu0 %v3358
        %v3393 = vpop.xlane.xlu0 %3392
        %3394 = vadd.xlane.f32.xlu0 %v3359
        %v3395 = vpop.xlane.xlu0 %3394
        %3396 = vadd.xlane.f32.xlu0 %v3360
        %v3397 = vpop.xlane.xlu0 %3396
        %3398 = vadd.xlane.f32.xlu0 %v3361
        %v3399 = vpop.xlane.xlu0 %3398
        %3400 = vadd.xlane.f32.xlu0 %v3362
        %v3401 = vpop.xlane.xlu0 %3400
        %3402 = vadd.xlane.f32.xlu0 %v3363
        %v3403 = vpop.xlane.xlu0 %3402
        %3404 = vadd.xlane.f32.xlu0 %v3364
        %v3405 = vpop.xlane.xlu0 %3404
        %3406 = vadd.xlane.f32.xlu0 %v3365
        %v3407 = vpop.xlane.xlu0 %3406
        %3408 = vadd.xlane.f32.xlu0 %v3366
        %v3409 = vpop.xlane.xlu0 %3408
        %3410 = vadd.xlane.f32.xlu0 %v3367
        %v3411 = vpop.xlane.xlu0 %3410
        %3412 = vadd.xlane.f32.xlu0 %v3368
        %v3413 = vpop.xlane.xlu0 %3412
        %3414 = vadd.xlane.f32.xlu0 %v3369
        %v3415 = vpop.xlane.xlu0 %3414
        %3416 = vadd.xlane.f32.xlu0 %v3370
        %v3417 = vpop.xlane.xlu0 %3416
        %3418 = vadd.xlane.f32.xlu0 %v3371
        %v3419 = vpop.xlane.xlu0 %3418
        %3420 = vadd.xlane.f32.xlu0 %v3372
        %v3421 = vpop.xlane.xlu0 %3420
        %3422 = vadd.xlane.f32.xlu0 %v3373
        %v3423 = vpop.xlane.xlu0 %3422
        %3424 = vadd.xlane.f32.xlu0 %v3374
        %v3425 = vpop.xlane.xlu0 %3424
        %3426 = vadd.xlane.f32.xlu0 %v3375
        %v3427 = vpop.xlane.xlu0 %3426
        %3428 = vadd.xlane.f32.xlu0 %v3376
        %v3429 = vpop.xlane.xlu0 %3428
        %3430 = vadd.xlane.f32.xlu0 %v3377
        %v3431 = vpop.xlane.xlu0 %3430
        %3432 = vadd.xlane.f32.xlu0 %v3378
        %v3433 = vpop.xlane.xlu0 %3432
        %3434 = vadd.xlane.f32.xlu0 %v3379
        %v3435 = vpop.xlane.xlu0 %3434
        %3436 = vadd.xlane.f32.xlu0 %v3380
        %v3437 = vpop.xlane.xlu0 %3436
        %3438 = vadd.xlane.f32.xlu0 %v3381
        %v3439 = vpop.xlane.xlu0 %3438
        %3440 = vadd.xlane.f32.xlu0 %v3382
        %v3441 = vpop.xlane.xlu0 %3440
        %3442 = vadd.xlane.f32.xlu0 %v3383
        %v3443 = vpop.xlane.xlu0 %3442
        %3444 = vadd.xlane.f32.xlu0 %v3384
        %v3445 = vpop.xlane.xlu0 %3444
        %3446 = vadd.xlane.f32.xlu0 %v3385
        %v3447 = vpop.xlane.xlu0 %3446
        %3448 = vadd.xlane.f32.xlu0 %v3386
        %v3449 = vpop.xlane.xlu0 %3448
        %3450 = vadd.xlane.f32.xlu0 %v3387
        %v3451 = vpop.xlane.xlu0 %3450
        %v3452 = vmul.f32 %v2743, %v2482
        %v3453 = vmul.f32 %v2747, %v2483
        %v3454 = vmul.f32 %v2753, %v2484
        %v3455 = vmul.f32 %v2757, %v2485
        %v3456 = vmul.f32 %v2763, %v2486
        %v3457 = vmul.f32 %v2767, %v2487
        %v3458 = vmul.f32 %v2773, %v2488
        %v3459 = vmul.f32 %v2777, %v2489
        %v3460 = vmul.f32 %v2783, %v2490
        %v3461 = vmul.f32 %v2787, %v2491
        %v3462 = vmul.f32 %v2793, %v2492
        %v3463 = vmul.f32 %v2797, %v2493
        %v3464 = vmul.f32 %v2803, %v2494
        %v3465 = vmul.f32 %v2807, %v2495
        %v3466 = vmul.f32 %v2813, %v2496
        %v3467 = vmul.f32 %v2817, %v2497
        %v3468 = vmul.f32 %v2823, %v2498
        %v3469 = vmul.f32 %v2827, %v2499
        %v3470 = vmul.f32 %v2833, %v2500
        %v3471 = vmul.f32 %v2837, %v2501
        %v3472 = vmul.f32 %v2843, %v2502
        %v3473 = vmul.f32 %v2847, %v2503
        %v3474 = vmul.f32 %v2853, %v2504
        %v3475 = vmul.f32 %v2857, %v2505
        %v3476 = vmul.f32 %v2863, %v2506
        %v3477 = vmul.f32 %v2867, %v2507
        %v3478 = vmul.f32 %v2873, %v2508
        %v3479 = vmul.f32 %v2877, %v2509
        %v3480 = vmul.f32 %v2883, %v2510
        %v3481 = vmul.f32 %v2887, %v2511
        %v3482 = vmul.f32 %v2893, %v2512
        %v3483 = vmul.f32 %v2897, %v2513
        %3484 = vadd.xlane.f32.xlu0 %v3452
        %v3485 = vpop.xlane.xlu0 %3484
        %3486 = vadd.xlane.f32.xlu0 %v3453
        %v3487 = vpop.xlane.xlu0 %3486
        %3488 = vadd.xlane.f32.xlu0 %v3454
        %v3489 = vpop.xlane.xlu0 %3488
        %3490 = vadd.xlane.f32.xlu0 %v3455
        %v3491 = vpop.xlane.xlu0 %3490
        %3492 = vadd.xlane.f32.xlu0 %v3456
        %v3493 = vpop.xlane.xlu0 %3492
        %3494 = vadd.xlane.f32.xlu0 %v3457
        %v3495 = vpop.xlane.xlu0 %3494
        %3496 = vadd.xlane.f32.xlu0 %v3458
        %v3497 = vpop.xlane.xlu0 %3496
        %3498 = vadd.xlane.f32.xlu0 %v3459
        %v3499 = vpop.xlane.xlu0 %3498
        %3500 = vadd.xlane.f32.xlu0 %v3460
        %v3501 = vpop.xlane.xlu0 %3500
        %3502 = vadd.xlane.f32.xlu0 %v3461
        %v3503 = vpop.xlane.xlu0 %3502
        %3504 = vadd.xlane.f32.xlu0 %v3462
        %v3505 = vpop.xlane.xlu0 %3504
        %3506 = vadd.xlane.f32.xlu0 %v3463
        %v3507 = vpop.xlane.xlu0 %3506
        %3508 = vadd.xlane.f32.xlu0 %v3464
        %v3509 = vpop.xlane.xlu0 %3508
        %3510 = vadd.xlane.f32.xlu0 %v3465
        %v3511 = vpop.xlane.xlu0 %3510
        %3512 = vadd.xlane.f32.xlu0 %v3466
        %v3513 = vpop.xlane.xlu0 %3512
        %3514 = vadd.xlane.f32.xlu0 %v3467
        %v3515 = vpop.xlane.xlu0 %3514
        %3516 = vadd.xlane.f32.xlu0 %v3468
        %v3517 = vpop.xlane.xlu0 %3516
        %3518 = vadd.xlane.f32.xlu0 %v3469
        %v3519 = vpop.xlane.xlu0 %3518
        %3520 = vadd.xlane.f32.xlu0 %v3470
        %v3521 = vpop.xlane.xlu0 %3520
        %3522 = vadd.xlane.f32.xlu0 %v3471
        %v3523 = vpop.xlane.xlu0 %3522
        %3524 = vadd.xlane.f32.xlu0 %v3472
        %v3525 = vpop.xlane.xlu0 %3524
        %3526 = vadd.xlane.f32.xlu0 %v3473
        %v3527 = vpop.xlane.xlu0 %3526
        %3528 = vadd.xlane.f32.xlu0 %v3474
        %v3529 = vpop.xlane.xlu0 %3528
        %3530 = vadd.xlane.f32.xlu0 %v3475
        %v3531 = vpop.xlane.xlu0 %3530
        %3532 = vadd.xlane.f32.xlu0 %v3476
        %v3533 = vpop.xlane.xlu0 %3532
        %3534 = vadd.xlane.f32.xlu0 %v3477
        %v3535 = vpop.xlane.xlu0 %3534
        %3536 = vadd.xlane.f32.xlu0 %v3478
        %v3537 = vpop.xlane.xlu0 %3536
        %3538 = vadd.xlane.f32.xlu0 %v3479
        %v3539 = vpop.xlane.xlu0 %3538
        %3540 = vadd.xlane.f32.xlu0 %v3480
        %v3541 = vpop.xlane.xlu0 %3540
        %3542 = vadd.xlane.f32.xlu0 %v3481
        %v3543 = vpop.xlane.xlu0 %3542
        %3544 = vadd.xlane.f32.xlu0 %v3482
        %v3545 = vpop.xlane.xlu0 %3544
        %3546 = vadd.xlane.f32.xlu0 %v3483
        %v3547 = vpop.xlane.xlu0 %3546
        %v3548 = vlaneseq
        %v3549 = vand.u32 %v3548, 127
        %vm3550 = vcmp.eq.s32.totalorder %v3549, 0
        %v3551 = vsel %vm3550, 1, 0
        %v3552 = vcvt.s32.f32 %v3551
        %v3553 = vmul.f32 %v3389, %v3552
        %v3554 = vmul.f32 %v3391, %v3552
        %v3555 = vmul.f32 %v3393, %v3552
        %v3556 = vmul.f32 %v3395, %v3552
        %v3557 = vmul.f32 %v3397, %v3552
        %v3558 = vmul.f32 %v3399, %v3552
        %v3559 = vmul.f32 %v3401, %v3552
        %v3560 = vmul.f32 %v3403, %v3552
        %v3561 = vmul.f32 %v3405, %v3552
        %v3562 = vmul.f32 %v3407, %v3552
        %v3563 = vmul.f32 %v3409, %v3552
        %v3564 = vmul.f32 %v3411, %v3552
        %v3565 = vmul.f32 %v3413, %v3552
        %v3566 = vmul.f32 %v3415, %v3552
        %v3567 = vmul.f32 %v3417, %v3552
        %v3568 = vmul.f32 %v3419, %v3552
        %v3569 = vmul.f32 %v3421, %v3552
        %v3570 = vmul.f32 %v3423, %v3552
        %v3571 = vmul.f32 %v3425, %v3552
        %v3572 = vmul.f32 %v3427, %v3552
        %v3573 = vmul.f32 %v3429, %v3552
        %v3574 = vmul.f32 %v3431, %v3552
        %v3575 = vmul.f32 %v3433, %v3552
        %v3576 = vmul.f32 %v3435, %v3552
        %v3577 = vmul.f32 %v3437, %v3552
        %v3578 = vmul.f32 %v3439, %v3552
        %v3579 = vmul.f32 %v3441, %v3552
        %v3580 = vmul.f32 %v3443, %v3552
        %v3581 = vmul.f32 %v3445, %v3552
        %v3582 = vmul.f32 %v3447, %v3552
        %v3583 = vmul.f32 %v3449, %v3552
        %v3584 = vmul.f32 %v3451, %v3552
        %vm3585 = vcmp.eq.s32.totalorder %v3549, 1
        %v3586 = vsel %vm3585, 1, 0
        %v3587 = vcvt.s32.f32 %v3586
        %v3588 = vmul.f32 %v3485, %v3587
        %v3589 = vmul.f32 %v3487, %v3587
        %v3590 = vmul.f32 %v3489, %v3587
        %v3591 = vmul.f32 %v3491, %v3587
        %v3592 = vmul.f32 %v3493, %v3587
        %v3593 = vmul.f32 %v3495, %v3587
        %v3594 = vmul.f32 %v3497, %v3587
        %v3595 = vmul.f32 %v3499, %v3587
        %v3596 = vmul.f32 %v3501, %v3587
        %v3597 = vmul.f32 %v3503, %v3587
        %v3598 = vmul.f32 %v3505, %v3587
        %v3599 = vmul.f32 %v3507, %v3587
        %v3600 = vmul.f32 %v3509, %v3587
        %v3601 = vmul.f32 %v3511, %v3587
        %v3602 = vmul.f32 %v3513, %v3587
        %v3603 = vmul.f32 %v3515, %v3587
        %v3604 = vmul.f32 %v3517, %v3587
        %v3605 = vmul.f32 %v3519, %v3587
        %v3606 = vmul.f32 %v3521, %v3587
        %v3607 = vmul.f32 %v3523, %v3587
        %v3608 = vmul.f32 %v3525, %v3587
        %v3609 = vmul.f32 %v3527, %v3587
        %v3610 = vmul.f32 %v3529, %v3587
        %v3611 = vmul.f32 %v3531, %v3587
        %v3612 = vmul.f32 %v3533, %v3587
        %v3613 = vmul.f32 %v3535, %v3587
        %v3614 = vmul.f32 %v3537, %v3587
        %v3615 = vmul.f32 %v3539, %v3587
        %v3616 = vmul.f32 %v3541, %v3587
        %v3617 = vmul.f32 %v3543, %v3587
        %v3618 = vmul.f32 %v3545, %v3587
        %v3619 = vmul.f32 %v3547, %v3587
        %v3620 = vadd.f32 %v3553, %v3588
        %v3621 = vadd.f32 %v3554, %v3589
        %v3622 = vadd.f32 %v3555, %v3590
        %v3623 = vadd.f32 %v3556, %v3591
        %v3624 = vadd.f32 %v3557, %v3592
        %v3625 = vadd.f32 %v3558, %v3593
        %v3626 = vadd.f32 %v3559, %v3594
        %v3627 = vadd.f32 %v3560, %v3595
        %v3628 = vadd.f32 %v3561, %v3596
        %v3629 = vadd.f32 %v3562, %v3597
        %v3630 = vadd.f32 %v3563, %v3598
        %v3631 = vadd.f32 %v3564, %v3599
        %v3632 = vadd.f32 %v3565, %v3600
        %v3633 = vadd.f32 %v3566, %v3601
        %v3634 = vadd.f32 %v3567, %v3602
        %v3635 = vadd.f32 %v3568, %v3603
        %v3636 = vadd.f32 %v3569, %v3604
        %v3637 = vadd.f32 %v3570, %v3605
        %v3638 = vadd.f32 %v3571, %v3606
        %v3639 = vadd.f32 %v3572, %v3607
        %v3640 = vadd.f32 %v3573, %v3608
        %v3641 = vadd.f32 %v3574, %v3609
        %v3642 = vadd.f32 %v3575, %v3610
        %v3643 = vadd.f32 %v3576, %v3611
        %v3644 = vadd.f32 %v3577, %v3612
        %v3645 = vadd.f32 %v3578, %v3613
        %v3646 = vadd.f32 %v3579, %v3614
        %v3647 = vadd.f32 %v3580, %v3615
        %v3648 = vadd.f32 %v3581, %v3616
        %v3649 = vadd.f32 %v3582, %v3617
        %v3650 = vadd.f32 %v3583, %v3618
        %v3651 = vadd.f32 %v3584, %v3619
        %v3652 = vadd.f32 %v3324, %v3620
        %v3653 = vadd.f32 %v3325, %v3621
        %v3654 = vadd.f32 %v3326, %v3622
        %v3655 = vadd.f32 %v3327, %v3623
        %v3656 = vadd.f32 %v3328, %v3624
        %v3657 = vadd.f32 %v3329, %v3625
        %v3658 = vadd.f32 %v3330, %v3626
        %v3659 = vadd.f32 %v3331, %v3627
        %v3660 = vadd.f32 %v3332, %v3628
        %v3661 = vadd.f32 %v3333, %v3629
        %v3662 = vadd.f32 %v3334, %v3630
        %v3663 = vadd.f32 %v3335, %v3631
        %v3664 = vadd.f32 %v3336, %v3632
        %v3665 = vadd.f32 %v3337, %v3633
        %v3666 = vadd.f32 %v3338, %v3634
        %v3667 = vadd.f32 %v3339, %v3635
        %v3668 = vadd.f32 %v3340, %v3636
        %v3669 = vadd.f32 %v3341, %v3637
        %v3670 = vadd.f32 %v3342, %v3638
        %v3671 = vadd.f32 %v3343, %v3639
        %v3672 = vadd.f32 %v3344, %v3640
        %v3673 = vadd.f32 %v3345, %v3641
        %v3674 = vadd.f32 %v3346, %v3642
        %v3675 = vadd.f32 %v3347, %v3643
        %v3676 = vadd.f32 %v3348, %v3644
        %v3677 = vadd.f32 %v3349, %v3645
        %v3678 = vadd.f32 %v3350, %v3646
        %v3679 = vadd.f32 %v3351, %v3647
        %v3680 = vadd.f32 %v3352, %v3648
        %v3681 = vadd.f32 %v3353, %v3649
        %v3682 = vadd.f32 %v3354, %v3650
        %v3683 = vadd.f32 %v3355, %v3651
        %v3684 = vpack.c.bf16 %v3653, %v3652
        %v3685 = vpack.c.bf16 %v3655, %v3654
        %v3686 = vpack.c.bf16 %v3657, %v3656
        %v3687 = vpack.c.bf16 %v3659, %v3658
        %v3688 = vpack.c.bf16 %v3661, %v3660
        %v3689 = vpack.c.bf16 %v3663, %v3662
        %v3690 = vpack.c.bf16 %v3665, %v3664
        %v3691 = vpack.c.bf16 %v3667, %v3666
        %v3692 = vpack.c.bf16 %v3669, %v3668
        %v3693 = vpack.c.bf16 %v3671, %v3670
        %v3694 = vpack.c.bf16 %v3673, %v3672
        %v3695 = vpack.c.bf16 %v3675, %v3674
        %v3696 = vpack.c.bf16 %v3677, %v3676
        %v3697 = vpack.c.bf16 %v3679, %v3678
        %v3698 = vpack.c.bf16 %v3681, %v3680
        %v3699 = vpack.c.bf16 %v3683, %v3682
        %v3716 = vunpack.c.l.b16 %v3684
        %v3717 = vunpack.c.h.b16 %v3684
        %v3718 = vunpack.c.l.b16 %v3685
        %v3719 = vunpack.c.h.b16 %v3685
        %v3720 = vunpack.c.l.b16 %v3686
        %v3721 = vunpack.c.h.b16 %v3686
        %v3722 = vunpack.c.l.b16 %v3687
        %v3723 = vunpack.c.h.b16 %v3687
        %v3724 = vunpack.c.l.b16 %v3688
        %v3725 = vunpack.c.h.b16 %v3688
        %v3726 = vunpack.c.l.b16 %v3689
        %v3727 = vunpack.c.h.b16 %v3689
        %v3728 = vunpack.c.l.b16 %v3690
        %v3729 = vunpack.c.h.b16 %v3690
        %v3730 = vunpack.c.l.b16 %v3691
        %v3731 = vunpack.c.h.b16 %v3691
        %v3732 = vunpack.c.l.b16 %v3692
        %v3733 = vunpack.c.h.b16 %v3692
        %v3734 = vunpack.c.l.b16 %v3693
        %v3735 = vunpack.c.h.b16 %v3693
        %v3736 = vunpack.c.l.b16 %v3694
        %v3737 = vunpack.c.h.b16 %v3694
        %v3738 = vunpack.c.l.b16 %v3695
        %v3739 = vunpack.c.h.b16 %v3695
        %v3740 = vunpack.c.l.b16 %v3696
        %v3741 = vunpack.c.h.b16 %v3696
        %v3742 = vunpack.c.l.b16 %v3697
        %v3743 = vunpack.c.h.b16 %v3697
        %v3744 = vunpack.c.l.b16 %v3698
        %v3745 = vunpack.c.h.b16 %v3698
        %v3746 = vunpack.c.l.b16 %v3699
        %v3747 = vunpack.c.h.b16 %v3699
        %v3748 = vpack.c.b16 %v3716, %v3716
        %v3749 = vpack.c.b16 %v3717, %v3717
        %v3750 = vpack.c.b16 %v3718, %v3718
        %v3751 = vpack.c.b16 %v3719, %v3719
        %v3752 = vpack.c.b16 %v3720, %v3720
        %v3753 = vpack.c.b16 %v3721, %v3721
        %v3754 = vpack.c.b16 %v3722, %v3722
        %v3755 = vpack.c.b16 %v3723, %v3723
        %v3756 = vpack.c.b16 %v3724, %v3724
        %v3757 = vpack.c.b16 %v3725, %v3725
        %v3758 = vpack.c.b16 %v3726, %v3726
        %v3759 = vpack.c.b16 %v3727, %v3727
        %v3760 = vpack.c.b16 %v3728, %v3728
        %v3761 = vpack.c.b16 %v3729, %v3729
        %v3762 = vpack.c.b16 %v3730, %v3730
        %v3763 = vpack.c.b16 %v3731, %v3731
        %v3764 = vpack.c.b16 %v3732, %v3732
        %v3765 = vpack.c.b16 %v3733, %v3733
        %v3766 = vpack.c.b16 %v3734, %v3734
        %v3767 = vpack.c.b16 %v3735, %v3735
        %v3768 = vpack.c.b16 %v3736, %v3736
        %v3769 = vpack.c.b16 %v3737, %v3737
        %v3770 = vpack.c.b16 %v3738, %v3738
        %v3771 = vpack.c.b16 %v3739, %v3739
        %v3772 = vpack.c.b16 %v3740, %v3740
        %v3773 = vpack.c.b16 %v3741, %v3741
        %v3774 = vpack.c.b16 %v3742, %v3742
        %v3775 = vpack.c.b16 %v3743, %v3743
        %v3776 = vpack.c.b16 %v3744, %v3744
        %v3777 = vpack.c.b16 %v3745, %v3745
        %v3778 = vpack.c.b16 %v3746, %v3746
        %v3779 = vpack.c.b16 %v3747, %v3747
        %3812 = vst [vmem:[%s536] sm:$0xf] %v3748
        %3813 = vst [vmem:[%s536 + $0x4] sm:$0xf] %v3749
        %3814 = vst [vmem:[%s536 + $0x8] sm:$0xf] %v3750
        %3815 = vst [vmem:[%s536 + $0xc] sm:$0xf] %v3751
        %3816 = vst [vmem:[%s536 + $0x10] sm:$0xf] %v3752
        %3817 = vst [vmem:[%s536 + $0x14] sm:$0xf] %v3753
        %3818 = vst [vmem:[%s536 + $0x18] sm:$0xf] %v3754
        %3819 = vst [vmem:[%s536 + $0x1c] sm:$0xf] %v3755
        %3820 = vst [vmem:[%s536 + $0x20] sm:$0xf] %v3756
        %3821 = vst [vmem:[%s536 + $0x24] sm:$0xf] %v3757
        %3822 = vst [vmem:[%s536 + $0x28] sm:$0xf] %v3758
        %3823 = vst [vmem:[%s536 + $0x2c] sm:$0xf] %v3759
        %3824 = vst [vmem:[%s536 + $0x30] sm:$0xf] %v3760
        %3825 = vst [vmem:[%s536 + $0x34] sm:$0xf] %v3761
        %3826 = vst [vmem:[%s536 + $0x38] sm:$0xf] %v3762
        %3827 = vst [vmem:[%s536 + $0x3c] sm:$0xf] %v3763
        %3828 = vst [vmem:[%s536 + $0x40] sm:$0xf] %v3764
        %3829 = vst [vmem:[%s536 + $0x44] sm:$0xf] %v3765
        %3830 = vst [vmem:[%s536 + $0x48] sm:$0xf] %v3766
        %3831 = vst [vmem:[%s536 + $0x4c] sm:$0xf] %v3767
        %3832 = vst [vmem:[%s536 + $0x50] sm:$0xf] %v3768
        %3833 = vst [vmem:[%s536 + $0x54] sm:$0xf] %v3769
        %3834 = vst [vmem:[%s536 + $0x58] sm:$0xf] %v3770
        %3835 = vst [vmem:[%s536 + $0x5c] sm:$0xf] %v3771
        %3836 = vst [vmem:[%s536 + $0x60] sm:$0xf] %v3772
        %3837 = vst [vmem:[%s536 + $0x64] sm:$0xf] %v3773
        %3838 = vst [vmem:[%s536 + $0x68] sm:$0xf] %v3774
        %3839 = vst [vmem:[%s536 + $0x6c] sm:$0xf] %v3775
        %3840 = vst [vmem:[%s536 + $0x70] sm:$0xf] %v3776
        %3841 = vst [vmem:[%s536 + $0x74] sm:$0xf] %v3777
        %3842 = vst [vmem:[%s536 + $0x78] sm:$0xf] %v3778
        %3843 = vst [vmem:[%s536 + $0x7c] sm:$0xf] %v3779
        %s3844 = sand.u32 %s372, 1
        %s3845 = scalar_lea.sflag [#allocation3], %s3844
        %s3846 = sand.u32 %s372, 1
        %s3847 = smul.addr %s3846, 128
        %s3848 = scalar_lea.vmem [#allocation2], %s3847
        // Predicated region
        $region81: #{tpu_custom_call.1} parent=79 // pred_check
          %p3849 = pneg %p382
        $region82: #{tpu_custom_call.1} parent=79 // pred_check_branch
          %3851 = sbr.rel (%p3849) target = $region84
        $region83: #{tpu_custom_call.1} parent=79 // pred_region
          %s3852 = smul.u32 32, %s29
          %s3854 = ssub.s32 2048, 2048
          %3855 = vsyncadd %s3845, %s3854
          %s3856 = smul.addr %s3852, 64
          %s3857 = scalar_lea.hbm %s15, %s3856
          %s3858 = sshll.u32 %s3848, 4
          %s3859 = int_to_ptr.vmem [resolvable:$true] %s3858
          %3864 = dma.vmem_to_hbm [thread:$0]  %s3859, 2048, %s3857, %s3845, 64, 64, 4
        $region84: #{tpu_custom_call.1} parent=79 // pred_fallthru
          _
      $region80: #{tpu_custom_call.1} parent=5 // pred_fallthru
        _
      %p3865 = scmp.le.s32.totalorder 2, %s24
      // Predicated region
      $region85: #{tpu_custom_call.1} parent=5 // pred_check
        %p3866 = pneg %p3865
      $region86: #{tpu_custom_call.1} parent=5 // pred_check_branch
        %3868 = sbr.rel (%p3866) target = $region88
      $region87: #{tpu_custom_call.1} parent=5 // pred_region
        %s3869 = ssub.s32 %s24, 2
        // Predicated region
        $region89: #{tpu_custom_call.1} parent=87 // pred_check
          %p3870 = pneg %p388
        $region90: #{tpu_custom_call.1} parent=87 // pred_check_branch
          %3872 = sbr.rel (%p3870) target = $region92
        $region91: #{tpu_custom_call.1} parent=87 // pred_region
          %s3873 = sand.u32 %s373, 1
          %s3874 = scalar_lea.sflag [#allocation3], %s3873
          %s3875 = sand.u32 %s373, 1
          %s3876 = smul.addr %s3875, 128
          %s3877 = scalar_lea.vmem [#allocation2], %s3876
          %3878 = dma.done %s3874, 2048
        $region92: #{tpu_custom_call.1} parent=87 // pred_fallthru
          _
      $region88: #{tpu_custom_call.1} parent=5 // pred_fallthru
        _
    $region6: #{tpu_custom_call.1} parent=1 // loop_footer
      %s28 = sadd.s32 1, %s24
    $region7: #{tpu_custom_call.1} parent=1 // loop_footer_branch
      %23 = sbr.rel target = $region3
    $region8: #{tpu_custom_call.1} parent=1 // loop_exit
      _
    %3879 = vsyncpa [#allocation3], 1
    %s3880 = scalar_lea.sflag [#allocation3], 1
    %3881 = vsyncpa %s3880, 1

</llo_original>
